<compile_context>
chip_gen: v7x
topology: tpu7x:2x2x1
jax: 0.10.0
libtpu: 0.0.40
codegen_flags: <defaults>
</compile_context>

<pallas_src>
import jax
import jax.numpy as jnp
from jax import lax
from jax.experimental import pallas as pl
from jax.experimental.pallas import tpu as pltpu

LANE = 128
# bf16 MXU operands (native rate on v5e/v6e/v7x, half the DMA bytes).
# Flip to jnp.float32 for exact parity with the PyTorch/XLA reference.
MXU_DTYPE = jnp.bfloat16


# ----------------------------------------------------------------------------
# Pallas kernels
# ----------------------------------------------------------------------------
def _conv_relu_pool_kernel(p_ref, w_ref, b_ref, o_ref):
    """Fused conv-as-GEMM + bias + ReLU + 2x2 maxpool.

    p_ref: (tm, Kp)      stride-2 6x6 im2col rows; one row per pooled output
                         position (n, hp, wp); Kp = Cin*36 padded to 128 lanes.
    w_ref: (Kp, 4*128)   the 5x5 weights embedded at the four pool offsets of a
                         6x6 window, each variant zero-padded to 128 lanes.
    b_ref: (1, 128)      bias, zero-padded (f32).
    o_ref: (tm, Cs)      pooled activations (Cs=128 lane-dense for conv1,
                         Cs=16 natural channels for conv2).
    """
    # One long MXU push (N=512) instead of four short ones.
    z = jnp.dot(p_ref[...], w_ref[...], preferred_element_type=jnp.float32)
    parts = [z[:, i * LANE:(i + 1) * LANE] for i in range(4)]   # lane-aligned
    m = jnp.maximum(jnp.maximum(parts[0], parts[1]),
                    jnp.maximum(parts[2], parts[3]))
    # bias + ReLU commute with the max (shared bias, monotonic ReLU).
    y = jnp.maximum(m + b_ref[...], 0.0)
    o_ref[...] = y[:, :o_ref.shape[-1]].astype(o_ref.dtype)


def _fc_stack_kernel(h_ref, w1_ref, b1_ref, w2_ref, b2_ref, w3_ref, b3_ref,
                     o_ref):
    """fc1+ReLU -> fc2+ReLU -> fc3 for one batch tile; f32 accum + epilogue."""
    h1 = jnp.dot(h_ref[...], w1_ref[...], preferred_element_type=jnp.float32)
    h1 = jnp.maximum(h1 + b1_ref[...], 0.0)
    h2 = jnp.dot(h1.astype(w2_ref.dtype), w2_ref[...],
                 preferred_element_type=jnp.float32)
    h2 = jnp.maximum(h2 + b2_ref[...], 0.0)
    y = jnp.dot(h2.astype(w3_ref.dtype), w3_ref[...],
                preferred_element_type=jnp.float32)
    o_ref[...] = (y + b3_ref[...]).astype(o_ref.dtype)


# ----------------------------------------------------------------------------
# Tiling helper: balanced row tiles, >=2 grid steps when possible (v7x megacore)
# ----------------------------------------------------------------------------
def _row_tile(rows, tile_max=512):
    if rows <= 8:
        return rows                      # full-dim block (always legal)
    n_tiles = max(2, -(-rows // tile_max))
    tile = -(-rows // n_tiles)           # ceil(rows / n_tiles)
    tile = -(-tile // 8) * 8             # round up to a multiple of 8 sublanes
    return min(tile, rows)


# ----------------------------------------------------------------------------
# Wrappers
# ----------------------------------------------------------------------------
def conv_relu_pool(x, w, b, *, input_format, cout_store, tile_max=512):
    """Fused valid 5x5 conv (stride 1) + bias + ReLU + MaxPool2d(2,2).

    x: activation in `input_format` ("NCHW" or "NHWC"); w: OIHW (PyTorch);
    b: (Cout,).  Returns NHWC pooled activation with `cout_store` channels
    (first Cout valid, rest zero).
    """
    Cout, Cin, kh, kw = w.shape
    assert Cout <= cout_store <= LANE
    pwin = (kh + 1, kw + 1)                                   # (6, 6)

    # Stride-2 6x6 im2col: one patch per pooled output position, containing all
    # four 5x5 conv windows of that 2x2 pool window.  (N, Hp, Wp, Cin*36).
    patches = lax.conv_general_dilated_patches(
        x, pwin, (2, 2), "VALID",
        dimension_numbers=(input_format, "OIHW", "NHWC"),
        precision=lax.Precision.HIGHEST)
    N, Hp, Wp, K = patches.shape
    Mp = N * Hp * Wp
    Kp = -(-K // LANE) * LANE                                 # pad K to 128 mult

    p = patches.reshape(Mp, K).astype(MXU_DTYPE)              # cast (+pad) fuse
    if Kp != K:
        p = jnp.pad(p, ((0, 0), (0, Kp - K)))

    # Four pool-offset weight variants: the 5x5 kernel embedded at offset
    # (dh, dw) of a 6x6 kernel.  Flatten each with the SAME feature ordering as
    # the activation patches by running the same patch extractor on the weights.
    w_cols = []
    for dh in (0, 1):
        for dw in (0, 1):
            w_emb = jnp.pad(w, ((0, 0), (0, 0), (dh, 1 - dh), (dw, 1 - dw)))
            w_flat = lax.conv_general_dilated_patches(
                w_emb, pwin, (1, 1), "VALID",
                dimension_numbers=("NCHW", "OIHW", "NHWC"),
                precision=lax.Precision.HIGHEST).reshape(Cout, K)
            w_cols.append(jnp.pad(w_flat.T, ((0, Kp - K), (0, LANE - Cout))))
    w_cat = jnp.concatenate(w_cols, axis=1).astype(MXU_DTYPE)  # (Kp, 512)
    b_pad = jnp.pad(b, (0, LANE - Cout)).reshape(1, LANE).astype(jnp.float32)

    tm = _row_tile(Mp, tile_max)
    grid = (pl.cdiv(Mp, tm),)

    out = pl.pallas_call(
        _conv_relu_pool_kernel,
        out_shape=jax.ShapeDtypeStruct((Mp, cout_store), MXU_DTYPE),
        grid_spec=pltpu.PrefetchScalarGridSpec(
            num_scalar_prefetch=0,
            grid=grid,
            in_specs=[
                pl.BlockSpec((tm, Kp), lambda i: (i, 0)),
                pl.BlockSpec((Kp, 4 * LANE), lambda i: (0, 0)),
                pl.BlockSpec((1, LANE), lambda i: (0, 0)),
            ],
            out_specs=pl.BlockSpec((tm, cout_store), lambda i: (i, 0)),
        ),
        compiler_params=pltpu.CompilerParams(
            dimension_semantics=("parallel",)),
    )(p, w_cat, b_pad)

    return out.reshape(N, Hp, Wp, cout_store)


def _fc_weights(params):
    """Permute fc1 so it consumes the NHWC flatten (rows ordered (hp, wp, c)),
    and zero-pad every fc output-feature axis to 128 lanes (unmasked stores)."""
    # PyTorch flatten order of (N,16,5,5) is (c,hp,wp); ours is (hp,wp,c).
    w1 = params["fc1_w"].reshape(120, 16, 5, 5).transpose(2, 3, 1, 0)
    w1 = w1.reshape(5 * 5 * 16, 120)                                  # (400,120)
    w1 = jnp.pad(w1, ((0, 0), (0, LANE - 120)))                       # (400,128)
    b1 = jnp.pad(params["fc1_b"], (0, LANE - 120)).reshape(1, LANE)
    w2 = jnp.pad(params["fc2_w"].T, ((0, LANE - 120), (0, LANE - 84)))  # (128,128)
    b2 = jnp.pad(params["fc2_b"], (0, LANE - 84)).reshape(1, LANE)
    w3 = jnp.pad(params["fc3_w"].T, ((0, LANE - 84), (0, LANE - 10)))   # (128,128)
    b3 = jnp.pad(params["fc3_b"], (0, LANE - 10)).reshape(1, LANE)
    return (w1.astype(MXU_DTYPE), b1.astype(jnp.float32),
            w2.astype(MXU_DTYPE), b2.astype(jnp.float32),
            w3.astype(MXU_DTYPE), b3.astype(jnp.float32))


def fc_stack(h, w1, b1, w2, b2, w3, b3, *, tile_max=512):
    """One pallas_call for the whole fc stack, tiled over the batch; weights and
    biases use constant index_maps so they stay resident across grid steps."""
    Nb, K1 = h.shape
    tb = _row_tile(Nb, tile_max)
    grid = (pl.cdiv(Nb, tb),)
    consts = (w1, b1, w2, b2, w3, b3)
    return pl.pallas_call(
        _fc_stack_kernel,
        out_shape=jax.ShapeDtypeStruct((Nb, LANE), jnp.float32),
        grid_spec=pltpu.PrefetchScalarGridSpec(
            num_scalar_prefetch=0,
            grid=grid,
            in_specs=[pl.BlockSpec((tb, K1), lambda i: (i, 0))]
                     + [pl.BlockSpec(c.shape, lambda i: (0, 0)) for c in consts],
            out_specs=pl.BlockSpec((tb, LANE), lambda i: (i, 0)),
        ),
        compiler_params=pltpu.CompilerParams(
            dimension_semantics=("parallel",)),
    )(h, *consts)


def net_forward(params, x):
    N = x.shape[0]
    # conv1: lane-dense 128-wide output (its consumer is an XLA patch extraction).
    a1 = conv_relu_pool(x, params["conv1_w"], params["conv1_b"],
                        input_format="NCHW", cout_store=LANE)   # (N,14,14,128)
    a1 = a1[..., :params["conv1_w"].shape[0]]                   # (N,14,14,6)
    # conv2: natural 16 channels so fc1 contracts over the real 400 features.
    a2 = conv_relu_pool(a1, params["conv2_w"], params["conv2_b"],
                        input_format="NHWC", cout_store=16)     # (N,5,5,16)
    h = a2.reshape(N, 5 * 5 * 16)                               # (N,400), (hp,wp,c)
    w1, b1, w2, b2, w3, b3 = _fc_weights(params)
    out = fc_stack(h, w1, b1, w2, b2, w3, b3)                   # (N,128) f32
    return out[:, :10]


# ----------------------------------------------------------------------------
# Pure-JAX reference (correctness check only)
# ----------------------------------------------------------------------------
def net_forward_ref(params, x):
    dn = ("NCHW", "OIHW", "NCHW")
    y = lax.conv_general_dilated(x, params["conv1_w"], (1, 1), "VALID",
                                 dimension_numbers=dn)
    y = jax.nn.relu(y + params["conv1_b"][None, :, None, None])
    y = lax.reduce_window(y, -jnp.inf, lax.max, (1, 1, 2, 2), (1, 1, 2, 2),
                          "VALID")
    y = lax.conv_general_dilated(y, params["conv2_w"], (1, 1), "VALID",
                                 dimension_numbers=dn)
    y = jax.nn.relu(y + params["conv2_b"][None, :, None, None])
    y = lax.reduce_window(y, -jnp.inf, lax.max, (1, 1, 2, 2), (1, 1, 2, 2),
                          "VALID")
    y = y.reshape(y.shape[0], -1)
    y = jax.nn.relu(y @ params["fc1_w"].T + params["fc1_b"])
    y = jax.nn.relu(y @ params["fc2_w"].T + params["fc2_b"])
    y = y @ params["fc3_w"].T + params["fc3_b"]
    return y


# ----------------------------------------------------------------------------
# Deterministic parameter init (PyTorch-default-style uniform(+-1/sqrt(fan_in)))
# ----------------------------------------------------------------------------
def init_params(key):
    def u(k, shape, fan_in):
        bound = 1.0 / (fan_in ** 0.5)
        return jax.random.uniform(k, shape, jnp.float32, -bound, bound)

    ks = jax.random.split(key, 10)
    return {
        "conv1_w": u(ks[0], (6, 3, 5, 5), 3 * 25),
        "conv1_b": u(ks[1], (6,), 3 * 25),
        "conv2_w": u(ks[2], (16, 6, 5, 5), 6 * 25),
        "conv2_b": u(ks[3], (16,), 6 * 25),
        "fc1_w": u(ks[4], (120, 16 * 5 * 5), 16 * 5 * 5),
        "fc1_b": u(ks[5], (120,), 16 * 5 * 5),
        "fc2_w": u(ks[6], (84, 120), 120),
        "fc2_b": u(ks[7], (84,), 120),
        "fc3_w": u(ks[8], (10, 84), 84),
        "fc3_b": u(ks[9], (10,), 84),
    }


if __name__ == "__main__":
    key = jax.random.PRNGKey(0)
    pkey, xkey = jax.random.split(key)
    params = init_params(pkey)

    # fc1 expects 16*5*5 features => spatial 32x32, channels 3 (CIFAR-10).
    x = jax.random.normal(xkey, (2, 3, 32, 32), jnp.float32)

    out = jax.jit(net_forward)(params, x)
    out = jax.block_until_ready(out)

    ref = net_forward_ref(params, x)
    assert out.shape == (2, 10), out.shape
    tol = 2e-2 if MXU_DTYPE == jnp.float32 else 5e-2   # bf16 MXU operands
    assert bool(jnp.allclose(out, ref, atol=tol, rtol=tol)), float(
        jnp.max(jnp.abs(out - ref)))

    print("KERNEL_OK")
</pallas_src>

<mosaic_0001>
module attributes {stable_mosaic.version = 11 : i64} {
  func.func @_conv_relu_pool_kernel(%arg0: i32, %arg1: memref<200x128xbf16, #tpu.memory_space<vmem>>, %arg2: memref<128x512xbf16, #tpu.memory_space<vmem>>, %arg3: memref<1x128xf32, #tpu.memory_space<vmem>>, %arg4: memref<200x128xbf16, #tpu.memory_space<vmem>>) attributes {dimension_semantics = [#tpu.dimension_semantics<parallel>], iteration_bounds = array<i64: 2>, scalar_prefetch = 0 : i64, scratch_operands = 0 : i64, tpu.core_type = #tpu.core_type<tc>, window_params = [{transform_indices = @transform_0, window_bounds = array<i64: 200, 128>}, {pipeline_mode = #tpu.pipeline_mode<synchronous>, transform_indices = @transform_1, window_bounds = array<i64: 128, 512>}, {pipeline_mode = #tpu.pipeline_mode<synchronous>, transform_indices = @transform_2, window_bounds = array<i64: 1, 128>}, {transform_indices = @transform_3, window_bounds = array<i64: 200, 128>}]} {
    %c0 = arith.constant 0 : index
    %c0_0 = arith.constant 0 : index
    %0 = vector.load %arg1[%c0, %c0_0] : memref<200x128xbf16, #tpu.memory_space<vmem>>, vector<200x128xbf16>
    %c0_1 = arith.constant 0 : index
    %c0_2 = arith.constant 0 : index
    %1 = vector.load %arg2[%c0_1, %c0_2] : memref<128x512xbf16, #tpu.memory_space<vmem>>, vector<128x512xbf16>
    %cst = arith.constant dense<0.000000e+00> : vector<200x512xf32>
    %2 = tpu.matmul %0, %1, %cst {dimension_numbers = #tpu.dot_dimension_numbers<[1], [0], [0], [1], [0, 0, 1, 1], [], []>} : vector<200x128xbf16>, vector<128x512xbf16>, vector<200x512xf32> -> vector<200x512xf32>
    %3 = vector.extract_strided_slice %2 {offsets = [0, 0], sizes = [200, 128], strides = [1, 1]} : vector<200x512xf32> to vector<200x128xf32>
    %4 = vector.extract_strided_slice %2 {offsets = [0, 128], sizes = [200, 128], strides = [1, 1]} : vector<200x512xf32> to vector<200x128xf32>
    %5 = vector.extract_strided_slice %2 {offsets = [0, 256], sizes = [200, 128], strides = [1, 1]} : vector<200x512xf32> to vector<200x128xf32>
    %6 = vector.extract_strided_slice %2 {offsets = [0, 384], sizes = [200, 128], strides = [1, 1]} : vector<200x512xf32> to vector<200x128xf32>
    %7 = arith.maximumf %3, %4 : vector<200x128xf32>
    %8 = arith.maximumf %5, %6 : vector<200x128xf32>
    %9 = arith.maximumf %7, %8 : vector<200x128xf32>
    %c0_3 = arith.constant 0 : index
    %c0_4 = arith.constant 0 : index
    %10 = vector.load %arg3[%c0_3, %c0_4] : memref<1x128xf32, #tpu.memory_space<vmem>>, vector<1x128xf32>
    %11 = vector.broadcast %10 : vector<1x128xf32> to vector<200x128xf32>
    %12 = arith.addf %9, %11 : vector<200x128xf32>
    %cst_5 = arith.constant 0.000000e+00 : f32
    %13 = vector.broadcast %cst_5 : f32 to vector<200x128xf32>
    %14 = arith.maximumf %12, %13 : vector<200x128xf32>
    %15 = arith.truncf %14 : vector<200x128xf32> to vector<200x128xbf16>
    %c0_6 = arith.constant 0 : index
    %c0_7 = arith.constant 0 : index
    %16 = vector.load %arg4[%c0_6, %c0_7] : memref<200x128xbf16, #tpu.memory_space<vmem>>, vector<200x128xbf16>
    tpu.vector_store %arg4[%c0_6, %c0_7], %15 {strides = array<i32>} : memref<200x128xbf16, #tpu.memory_space<vmem>>, vector<200x128xbf16>,
    return
  }
  func.func @transform_0(%arg0: i32) -> (i32, i32) {
    %c0_i32 = arith.constant 0 : i32
    %c0_i32_0 = arith.constant 0 : i32
    return %arg0, %c0_i32 : i32, i32
  }
  func.func @transform_1(%arg0: i32) -> (i32, i32) {
    %c0_i32 = arith.constant 0 : i32
    %c0_i32_0 = arith.constant 0 : i32
    %c0_i32_1 = arith.constant 0 : i32
    return %c0_i32, %c0_i32_0 : i32, i32
  }
  func.func @transform_2(%arg0: i32) -> (i32, i32) {
    %c0_i32 = arith.constant 0 : i32
    %c0_i32_0 = arith.constant 0 : i32
    %c0_i32_1 = arith.constant 0 : i32
    return %c0_i32, %c0_i32_0 : i32, i32
  }
  func.func @transform_3(%arg0: i32) -> (i32, i32) {
    %c0_i32 = arith.constant 0 : i32
    %c0_i32_0 = arith.constant 0 : i32
    return %arg0, %c0_i32 : i32, i32
  }
}

module attributes {stable_mosaic.version = 11 : i64} {
  func.func @_conv_relu_pool_kernel(%arg0: i32, %arg1: memref<32x256xbf16, #tpu.memory_space<vmem>>, %arg2: memref<256x512xbf16, #tpu.memory_space<vmem>>, %arg3: memref<1x128xf32, #tpu.memory_space<vmem>>, %arg4: memref<32x16xbf16, #tpu.memory_space<vmem>>) attributes {dimension_semantics = [#tpu.dimension_semantics<parallel>], iteration_bounds = array<i64: 2>, scalar_prefetch = 0 : i64, scratch_operands = 0 : i64, tpu.core_type = #tpu.core_type<tc>, window_params = [{transform_indices = @transform_0, window_bounds = array<i64: 32, 256>}, {pipeline_mode = #tpu.pipeline_mode<synchronous>, transform_indices = @transform_1, window_bounds = array<i64: 256, 512>}, {pipeline_mode = #tpu.pipeline_mode<synchronous>, transform_indices = @transform_2, window_bounds = array<i64: 1, 128>}, {transform_indices = @transform_3, window_bounds = array<i64: 32, 16>}]} {
    %c0 = arith.constant 0 : index
    %c0_0 = arith.constant 0 : index
    %0 = vector.load %arg1[%c0, %c0_0] : memref<32x256xbf16, #tpu.memory_space<vmem>>, vector<32x256xbf16>
    %c0_1 = arith.constant 0 : index
    %c0_2 = arith.constant 0 : index
    %1 = vector.load %arg2[%c0_1, %c0_2] : memref<256x512xbf16, #tpu.memory_space<vmem>>, vector<256x512xbf16>
    %cst = arith.constant dense<0.000000e+00> : vector<32x512xf32>
    %2 = tpu.matmul %0, %1, %cst {dimension_numbers = #tpu.dot_dimension_numbers<[1], [0], [0], [1], [0, 0, 1, 1], [], []>} : vector<32x256xbf16>, vector<256x512xbf16>, vector<32x512xf32> -> vector<32x512xf32>
    %3 = vector.extract_strided_slice %2 {offsets = [0, 0], sizes = [32, 128], strides = [1, 1]} : vector<32x512xf32> to vector<32x128xf32>
    %4 = vector.extract_strided_slice %2 {offsets = [0, 128], sizes = [32, 128], strides = [1, 1]} : vector<32x512xf32> to vector<32x128xf32>
    %5 = vector.extract_strided_slice %2 {offsets = [0, 256], sizes = [32, 128], strides = [1, 1]} : vector<32x512xf32> to vector<32x128xf32>
    %6 = vector.extract_strided_slice %2 {offsets = [0, 384], sizes = [32, 128], strides = [1, 1]} : vector<32x512xf32> to vector<32x128xf32>
    %7 = arith.maximumf %3, %4 : vector<32x128xf32>
    %8 = arith.maximumf %5, %6 : vector<32x128xf32>
    %9 = arith.maximumf %7, %8 : vector<32x128xf32>
    %c0_3 = arith.constant 0 : index
    %c0_4 = arith.constant 0 : index
    %10 = vector.load %arg3[%c0_3, %c0_4] : memref<1x128xf32, #tpu.memory_space<vmem>>, vector<1x128xf32>
    %11 = vector.broadcast %10 : vector<1x128xf32> to vector<32x128xf32>
    %12 = arith.addf %9, %11 : vector<32x128xf32>
    %cst_5 = arith.constant 0.000000e+00 : f32
    %13 = vector.broadcast %cst_5 : f32 to vector<32x128xf32>
    %14 = arith.maximumf %12, %13 : vector<32x128xf32>
    %15 = vector.extract_strided_slice %14 {offsets = [0, 0], sizes = [32, 16], strides = [1, 1]} : vector<32x128xf32> to vector<32x16xf32>
    %16 = arith.truncf %15 : vector<32x16xf32> to vector<32x16xbf16>
    %c0_6 = arith.constant 0 : index
    %c0_7 = arith.constant 0 : index
    %17 = vector.load %arg4[%c0_6, %c0_7] : memref<32x16xbf16, #tpu.memory_space<vmem>>, vector<32x16xbf16>
    tpu.vector_store %arg4[%c0_6, %c0_7], %16 {strides = array<i32>} : memref<32x16xbf16, #tpu.memory_space<vmem>>, vector<32x16xbf16>,
    return
  }
  func.func @transform_0(%arg0: i32) -> (i32, i32) {
    %c0_i32 = arith.constant 0 : i32
    %c0_i32_0 = arith.constant 0 : i32
    return %arg0, %c0_i32 : i32, i32
  }
  func.func @transform_1(%arg0: i32) -> (i32, i32) {
    %c0_i32 = arith.constant 0 : i32
    %c0_i32_0 = arith.constant 0 : i32
    %c0_i32_1 = arith.constant 0 : i32
    return %c0_i32, %c0_i32_0 : i32, i32
  }
  func.func @transform_2(%arg0: i32) -> (i32, i32) {
    %c0_i32 = arith.constant 0 : i32
    %c0_i32_0 = arith.constant 0 : i32
    %c0_i32_1 = arith.constant 0 : i32
    return %c0_i32, %c0_i32_0 : i32, i32
  }
  func.func @transform_3(%arg0: i32) -> (i32, i32) {
    %c0_i32 = arith.constant 0 : i32
    %c0_i32_0 = arith.constant 0 : i32
    return %arg0, %c0_i32 : i32, i32
  }
}

module attributes {stable_mosaic.version = 11 : i64} {
  func.func @_fc_stack_kernel(%arg0: i32, %arg1: memref<2x400xbf16, #tpu.memory_space<vmem>>, %arg2: memref<400x128xbf16, #tpu.memory_space<vmem>>, %arg3: memref<1x128xf32, #tpu.memory_space<vmem>>, %arg4: memref<128x128xbf16, #tpu.memory_space<vmem>>, %arg5: memref<1x128xf32, #tpu.memory_space<vmem>>, %arg6: memref<128x128xbf16, #tpu.memory_space<vmem>>, %arg7: memref<1x128xf32, #tpu.memory_space<vmem>>, %arg8: memref<2x128xf32, #tpu.memory_space<vmem>>) attributes {dimension_semantics = [#tpu.dimension_semantics<parallel>], iteration_bounds = array<i64: 1>, scalar_prefetch = 0 : i64, scratch_operands = 0 : i64, tpu.core_type = #tpu.core_type<tc>, window_params = [{transform_indices = @transform_0, window_bounds = array<i64: 2, 400>}, {pipeline_mode = #tpu.pipeline_mode<synchronous>, transform_indices = @transform_1, window_bounds = array<i64: 400, 128>}, {pipeline_mode = #tpu.pipeline_mode<synchronous>, transform_indices = @transform_2, window_bounds = array<i64: 1, 128>}, {pipeline_mode = #tpu.pipeline_mode<synchronous>, transform_indices = @transform_3, window_bounds = array<i64: 128, 128>}, {pipeline_mode = #tpu.pipeline_mode<synchronous>, transform_indices = @transform_4, window_bounds = array<i64: 1, 128>}, {pipeline_mode = #tpu.pipeline_mode<synchronous>, transform_indices = @transform_5, window_bounds = array<i64: 128, 128>}, {pipeline_mode = #tpu.pipeline_mode<synchronous>, transform_indices = @transform_6, window_bounds = array<i64: 1, 128>}, {transform_indices = @transform_7, window_bounds = array<i64: 2, 128>}]} {
    %c0 = arith.constant 0 : index
    %c0_0 = arith.constant 0 : index
    %0 = vector.load %arg1[%c0, %c0_0] : memref<2x400xbf16, #tpu.memory_space<vmem>>, vector<2x400xbf16>
    %c0_1 = arith.constant 0 : index
    %c0_2 = arith.constant 0 : index
    %1 = vector.load %arg2[%c0_1, %c0_2] : memref<400x128xbf16, #tpu.memory_space<vmem>>, vector<400x128xbf16>
    %cst = arith.constant dense<0.000000e+00> : vector<2x128xf32>
    %2 = tpu.matmul %0, %1, %cst {dimension_numbers = #tpu.dot_dimension_numbers<[1], [0], [0], [1], [0, 0, 1, 1], [], []>} : vector<2x400xbf16>, vector<400x128xbf16>, vector<2x128xf32> -> vector<2x128xf32>
    %c0_3 = arith.constant 0 : index
    %c0_4 = arith.constant 0 : index
    %3 = vector.load %arg3[%c0_3, %c0_4] : memref<1x128xf32, #tpu.memory_space<vmem>>, vector<1x128xf32>
    %4 = vector.broadcast %3 : vector<1x128xf32> to vector<2x128xf32>
    %5 = arith.addf %2, %4 : vector<2x128xf32>
    %cst_5 = arith.constant 0.000000e+00 : f32
    %6 = vector.broadcast %cst_5 : f32 to vector<2x128xf32>
    %7 = arith.maximumf %5, %6 : vector<2x128xf32>
    %8 = arith.truncf %7 : vector<2x128xf32> to vector<2x128xbf16>
    %c0_6 = arith.constant 0 : index
    %c0_7 = arith.constant 0 : index
    %9 = vector.load %arg4[%c0_6, %c0_7] : memref<128x128xbf16, #tpu.memory_space<vmem>>, vector<128x128xbf16>
    %cst_8 = arith.constant dense<0.000000e+00> : vector<2x128xf32>
    %10 = tpu.matmul %8, %9, %cst_8 {dimension_numbers = #tpu.dot_dimension_numbers<[1], [0], [0], [1], [0, 0, 1, 1], [], []>} : vector<2x128xbf16>, vector<128x128xbf16>, vector<2x128xf32> -> vector<2x128xf32>
    %c0_9 = arith.constant 0 : index
    %c0_10 = arith.constant 0 : index
    %11 = vector.load %arg5[%c0_9, %c0_10] : memref<1x128xf32, #tpu.memory_space<vmem>>, vector<1x128xf32>
    %12 = vector.broadcast %11 : vector<1x128xf32> to vector<2x128xf32>
    %13 = arith.addf %10, %12 : vector<2x128xf32>
    %cst_11 = arith.constant 0.000000e+00 : f32
    %14 = vector.broadcast %cst_11 : f32 to vector<2x128xf32>
    %15 = arith.maximumf %13, %14 : vector<2x128xf32>
    %16 = arith.truncf %15 : vector<2x128xf32> to vector<2x128xbf16>
    %c0_12 = arith.constant 0 : index
    %c0_13 = arith.constant 0 : index
    %17 = vector.load %arg6[%c0_12, %c0_13] : memref<128x128xbf16, #tpu.memory_space<vmem>>, vector<128x128xbf16>
    %cst_14 = arith.constant dense<0.000000e+00> : vector<2x128xf32>
    %18 = tpu.matmul %16, %17, %cst_14 {dimension_numbers = #tpu.dot_dimension_numbers<[1], [0], [0], [1], [0, 0, 1, 1], [], []>} : vector<2x128xbf16>, vector<128x128xbf16>, vector<2x128xf32> -> vector<2x128xf32>
    %c0_15 = arith.constant 0 : index
    %c0_16 = arith.constant 0 : index
    %19 = vector.load %arg7[%c0_15, %c0_16] : memref<1x128xf32, #tpu.memory_space<vmem>>, vector<1x128xf32>
    %20 = vector.broadcast %19 : vector<1x128xf32> to vector<2x128xf32>
    %21 = arith.addf %18, %20 : vector<2x128xf32>
    %c0_17 = arith.constant 0 : index
    %c0_18 = arith.constant 0 : index
    %22 = vector.load %arg8[%c0_17, %c0_18] : memref<2x128xf32, #tpu.memory_space<vmem>>, vector<2x128xf32>
    tpu.vector_store %arg8[%c0_17, %c0_18], %21 {strides = array<i32>} : memref<2x128xf32, #tpu.memory_space<vmem>>, vector<2x128xf32>,
    return
  }
  func.func @transform_0(%arg0: i32) -> (i32, i32) {
    %c0_i32 = arith.constant 0 : i32
    %c0_i32_0 = arith.constant 0 : i32
    return %arg0, %c0_i32 : i32, i32
  }
  func.func @transform_1(%arg0: i32) -> (i32, i32) {
    %c0_i32 = arith.constant 0 : i32
    %c0_i32_0 = arith.constant 0 : i32
    %c0_i32_1 = arith.constant 0 : i32
    return %c0_i32, %c0_i32_0 : i32, i32
  }
  func.func @transform_2(%arg0: i32) -> (i32, i32) {
    %c0_i32 = arith.constant 0 : i32
    %c0_i32_0 = arith.constant 0 : i32
    %c0_i32_1 = arith.constant 0 : i32
    return %c0_i32, %c0_i32_0 : i32, i32
  }
  func.func @transform_3(%arg0: i32) -> (i32, i32) {
    %c0_i32 = arith.constant 0 : i32
    %c0_i32_0 = arith.constant 0 : i32
    %c0_i32_1 = arith.constant 0 : i32
    return %c0_i32, %c0_i32_0 : i32, i32
  }
  func.func @transform_4(%arg0: i32) -> (i32, i32) {
    %c0_i32 = arith.constant 0 : i32
    %c0_i32_0 = arith.constant 0 : i32
    %c0_i32_1 = arith.constant 0 : i32
    return %c0_i32, %c0_i32_0 : i32, i32
  }
  func.func @transform_5(%arg0: i32) -> (i32, i32) {
    %c0_i32 = arith.constant 0 : i32
    %c0_i32_0 = arith.constant 0 : i32
    %c0_i32_1 = arith.constant 0 : i32
    return %c0_i32, %c0_i32_0 : i32, i32
  }
  func.func @transform_6(%arg0: i32) -> (i32, i32) {
    %c0_i32 = arith.constant 0 : i32
    %c0_i32_0 = arith.constant 0 : i32
    %c0_i32_1 = arith.constant 0 : i32
    return %c0_i32, %c0_i32_0 : i32, i32
  }
  func.func @transform_7(%arg0: i32) -> (i32, i32) {
    %c0_i32 = arith.constant 0 : i32
    %c0_i32_0 = arith.constant 0 : i32
    return %arg0, %c0_i32 : i32, i32
  }
}

</mosaic_0001>

<llo_original>
// kernel: reverse
$region0: #{reverse}
  #allocation0 [shape = 's32[1]{0}', space=sflag, size = 0x4, scoped, tag = 'scoped memory for reverse']
  %s0 = inlined_call_operand.vmem [shape: bf16[108,3,6,6], index: 0, kind: input, shape index: {}]
  %s1 = inlined_call_operand.vmem [shape: bf16[108,3,6,6], index: 1, kind: output, shape index: {}]
  %s2 = scalar_lea.vmem %s0, 70
  %s4 = sor.u32 15, 7
  %s5 = sand.u32 %s4, 5
  %s6 = sshrl.u32 %s5, 1
  %s7 = sor.u32 %s5, %s6
  %s8 = sand.u32 3, %s7
  %v9 = vld [vmem:[%s2] sm:%s8]
  %v10 = vunpack.c.l.bf16 %v9
  %v11 = vunpack.c.h.bf16 %v9
  %v12 = vpack.c.bf16 0.0, %v10
  %13 = vst [vmem:[%s1] sm:$0x3] %v12
  %s14 = scalar_lea.vmem %s0, 58
  %s16 = sor.u32 15, 7
  %s17 = sand.u32 %s16, 5
  %s18 = sshrl.u32 %s17, 1
  %s19 = sor.u32 %s17, %s18
  %s20 = sand.u32 3, %s19
  %v21 = vld [vmem:[%s14] sm:%s20]
  %v22 = vunpack.c.l.bf16 %v21
  %v23 = vunpack.c.h.bf16 %v21
  %s24 = scalar_lea.vmem %s1, 12
  %v25 = vpack.c.bf16 0.0, %v22
  %26 = vst [vmem:[%s24] sm:$0x3] %v25
  %s27 = scalar_lea.vmem %s0, 46
  %s29 = sor.u32 15, 7
  %s30 = sand.u32 %s29, 5
  %s31 = sshrl.u32 %s30, 1
  %s32 = sor.u32 %s30, %s31
  %s33 = sand.u32 3, %s32
  %v34 = vld [vmem:[%s27] sm:%s33]
  %v35 = vunpack.c.l.bf16 %v34
  %v36 = vunpack.c.h.bf16 %v34
  %s37 = scalar_lea.vmem %s1, 24
  %v38 = vpack.c.bf16 0.0, %v35
  %39 = vst [vmem:[%s37] sm:$0x3] %v38
  %s40 = scalar_lea.vmem %s0, 34
  %s42 = sor.u32 15, 7
  %s43 = sand.u32 %s42, 5
  %s44 = sshrl.u32 %s43, 1
  %s45 = sor.u32 %s43, %s44
  %s46 = sand.u32 3, %s45
  %v47 = vld [vmem:[%s40] sm:%s46]
  %v48 = vunpack.c.l.bf16 %v47
  %v49 = vunpack.c.h.bf16 %v47
  %s50 = scalar_lea.vmem %s1, 36
  %v51 = vpack.c.bf16 0.0, %v48
  %52 = vst [vmem:[%s50] sm:$0x3] %v51
  %s53 = scalar_lea.vmem %s0, 22
  %s55 = sor.u32 15, 7
  %s56 = sand.u32 %s55, 5
  %s57 = sshrl.u32 %s56, 1
  %s58 = sor.u32 %s56, %s57
  %s59 = sand.u32 3, %s58
  %v60 = vld [vmem:[%s53] sm:%s59]
  %v61 = vunpack.c.l.bf16 %v60
  %v62 = vunpack.c.h.bf16 %v60
  %s63 = scalar_lea.vmem %s1, 48
  %v64 = vpack.c.bf16 0.0, %v61
  %65 = vst [vmem:[%s63] sm:$0x3] %v64
  %s66 = scalar_lea.vmem %s0, 10
  %s68 = sor.u32 15, 7
  %s69 = sand.u32 %s68, 5
  %s70 = sshrl.u32 %s69, 1
  %s71 = sor.u32 %s69, %s70
  %s72 = sand.u32 3, %s71
  %v73 = vld [vmem:[%s66] sm:%s72]
  %v74 = vunpack.c.l.bf16 %v73
  %v75 = vunpack.c.h.bf16 %v73
  %s76 = scalar_lea.vmem %s1, 60
  %v77 = vpack.c.bf16 0.0, %v74
  %78 = vst [vmem:[%s76] sm:$0x3] %v77
  %s79 = scalar_lea.vmem %s0, 68
  %s81 = sor.u32 15, 7
  %s82 = sand.u32 %s81, 5
  %s83 = sshrl.u32 %s82, 1
  %s84 = sor.u32 %s82, %s83
  %s85 = sand.u32 3, %s84
  %v86 = vld [vmem:[%s79] sm:%s85]
  %v87 = vunpack.c.l.bf16 %v86
  %v88 = vunpack.c.h.bf16 %v86
  %s89 = scalar_lea.vmem %s1, 2
  %v90 = vpack.c.bf16 0.0, %v87
  %91 = vst [vmem:[%s89] sm:$0x3] %v90
  %s92 = scalar_lea.vmem %s0, 56
  %s94 = sor.u32 15, 7
  %s95 = sand.u32 %s94, 5
  %s96 = sshrl.u32 %s95, 1
  %s97 = sor.u32 %s95, %s96
  %s98 = sand.u32 3, %s97
  %v99 = vld [vmem:[%s92] sm:%s98]
  %v100 = vunpack.c.l.bf16 %v99
  %v101 = vunpack.c.h.bf16 %v99
  %s102 = scalar_lea.vmem %s1, 14
  %v103 = vpack.c.bf16 0.0, %v100
  %104 = vst [vmem:[%s102] sm:$0x3] %v103
  %s105 = scalar_lea.vmem %s0, 44
  %s107 = sor.u32 15, 7
  %s108 = sand.u32 %s107, 5
  %s109 = sshrl.u32 %s108, 1
  %s110 = sor.u32 %s108, %s109
  %s111 = sand.u32 3, %s110
  %v112 = vld [vmem:[%s105] sm:%s111]
  %v113 = vunpack.c.l.bf16 %v112
  %v114 = vunpack.c.h.bf16 %v112
  %s115 = scalar_lea.vmem %s1, 26
  %v116 = vpack.c.bf16 0.0, %v113
  %117 = vst [vmem:[%s115] sm:$0x3] %v116
  %s118 = scalar_lea.vmem %s0, 32
  %s120 = sor.u32 15, 7
  %s121 = sand.u32 %s120, 5
  %s122 = sshrl.u32 %s121, 1
  %s123 = sor.u32 %s121, %s122
  %s124 = sand.u32 3, %s123
  %v125 = vld [vmem:[%s118] sm:%s124]
  %v126 = vunpack.c.l.bf16 %v125
  %v127 = vunpack.c.h.bf16 %v125
  %s128 = scalar_lea.vmem %s1, 38
  %v129 = vpack.c.bf16 0.0, %v126
  %130 = vst [vmem:[%s128] sm:$0x3] %v129
  %s131 = scalar_lea.vmem %s0, 20
  %s133 = sor.u32 15, 7
  %s134 = sand.u32 %s133, 5
  %s135 = sshrl.u32 %s134, 1
  %s136 = sor.u32 %s134, %s135
  %s137 = sand.u32 3, %s136
  %v138 = vld [vmem:[%s131] sm:%s137]
  %v139 = vunpack.c.l.bf16 %v138
  %v140 = vunpack.c.h.bf16 %v138
  %s141 = scalar_lea.vmem %s1, 50
  %v142 = vpack.c.bf16 0.0, %v139
  %143 = vst [vmem:[%s141] sm:$0x3] %v142
  %s144 = scalar_lea.vmem %s0, 8
  %s146 = sor.u32 15, 7
  %s147 = sand.u32 %s146, 5
  %s148 = sshrl.u32 %s147, 1
  %s149 = sor.u32 %s147, %s148
  %s150 = sand.u32 3, %s149
  %v151 = vld [vmem:[%s144] sm:%s150]
  %v152 = vunpack.c.l.bf16 %v151
  %v153 = vunpack.c.h.bf16 %v151
  %s154 = scalar_lea.vmem %s1, 62
  %v155 = vpack.c.bf16 0.0, %v152
  %156 = vst [vmem:[%s154] sm:$0x3] %v155
  %s157 = scalar_lea.vmem %s0, 66
  %s159 = sor.u32 15, 7
  %s160 = sand.u32 %s159, 5
  %s161 = sshrl.u32 %s160, 1
  %s162 = sor.u32 %s160, %s161
  %s163 = sand.u32 3, %s162
  %v164 = vld [vmem:[%s157] sm:%s163]
  %v165 = vunpack.c.l.bf16 %v164
  %v166 = vunpack.c.h.bf16 %v164
  %s167 = scalar_lea.vmem %s1, 4
  %v168 = vpack.c.bf16 0.0, %v165
  %169 = vst [vmem:[%s167] sm:$0x3] %v168
  %s170 = scalar_lea.vmem %s0, 54
  %s172 = sor.u32 15, 7
  %s173 = sand.u32 %s172, 5
  %s174 = sshrl.u32 %s173, 1
  %s175 = sor.u32 %s173, %s174
  %s176 = sand.u32 3, %s175
  %v177 = vld [vmem:[%s170] sm:%s176]
  %v178 = vunpack.c.l.bf16 %v177
  %v179 = vunpack.c.h.bf16 %v177
  %s180 = scalar_lea.vmem %s1, 16
  %v181 = vpack.c.bf16 0.0, %v178
  %182 = vst [vmem:[%s180] sm:$0x3] %v181
  %s183 = scalar_lea.vmem %s0, 42
  %s185 = sor.u32 15, 7
  %s186 = sand.u32 %s185, 5
  %s187 = sshrl.u32 %s186, 1
  %s188 = sor.u32 %s186, %s187
  %s189 = sand.u32 3, %s188
  %v190 = vld [vmem:[%s183] sm:%s189]
  %v191 = vunpack.c.l.bf16 %v190
  %v192 = vunpack.c.h.bf16 %v190
  %s193 = scalar_lea.vmem %s1, 28
  %v194 = vpack.c.bf16 0.0, %v191
  %195 = vst [vmem:[%s193] sm:$0x3] %v194
  %s196 = scalar_lea.vmem %s0, 30
  %s198 = sor.u32 15, 7
  %s199 = sand.u32 %s198, 5
  %s200 = sshrl.u32 %s199, 1
  %s201 = sor.u32 %s199, %s200
  %s202 = sand.u32 3, %s201
  %v203 = vld [vmem:[%s196] sm:%s202]
  %v204 = vunpack.c.l.bf16 %v203
  %v205 = vunpack.c.h.bf16 %v203
  %s206 = scalar_lea.vmem %s1, 40
  %v207 = vpack.c.bf16 0.0, %v204
  %208 = vst [vmem:[%s206] sm:$0x3] %v207
  %s209 = scalar_lea.vmem %s0, 18
  %s211 = sor.u32 15, 7
  %s212 = sand.u32 %s211, 5
  %s213 = sshrl.u32 %s212, 1
  %s214 = sor.u32 %s212, %s213
  %s215 = sand.u32 3, %s214
  %v216 = vld [vmem:[%s209] sm:%s215]
  %v217 = vunpack.c.l.bf16 %v216
  %v218 = vunpack.c.h.bf16 %v216
  %s219 = scalar_lea.vmem %s1, 52
  %v220 = vpack.c.bf16 0.0, %v217
  %221 = vst [vmem:[%s219] sm:$0x3] %v220
  %s222 = scalar_lea.vmem %s0, 6
  %s224 = sor.u32 15, 7
  %s225 = sand.u32 %s224, 5
  %s226 = sshrl.u32 %s225, 1
  %s227 = sor.u32 %s225, %s226
  %s228 = sand.u32 3, %s227
  %v229 = vld [vmem:[%s222] sm:%s228]
  %v230 = vunpack.c.l.bf16 %v229
  %v231 = vunpack.c.h.bf16 %v229
  %s232 = scalar_lea.vmem %s1, 64
  %v233 = vpack.c.bf16 0.0, %v230
  %234 = vst [vmem:[%s232] sm:$0x3] %v233
  %s235 = scalar_lea.vmem %s0, 64
  %s237 = sor.u32 15, 7
  %s238 = sand.u32 %s237, 5
  %s239 = sshrl.u32 %s238, 1
  %s240 = sor.u32 %s238, %s239
  %s241 = sand.u32 3, %s240
  %v242 = vld [vmem:[%s235] sm:%s241]
  %v243 = vunpack.c.l.bf16 %v242
  %v244 = vunpack.c.h.bf16 %v242
  %s245 = scalar_lea.vmem %s1, 6
  %v246 = vpack.c.bf16 0.0, %v243
  %247 = vst [vmem:[%s245] sm:$0x3] %v246
  %s248 = scalar_lea.vmem %s0, 52
  %s250 = sor.u32 15, 7
  %s251 = sand.u32 %s250, 5
  %s252 = sshrl.u32 %s251, 1
  %s253 = sor.u32 %s251, %s252
  %s254 = sand.u32 3, %s253
  %v255 = vld [vmem:[%s248] sm:%s254]
  %v256 = vunpack.c.l.bf16 %v255
  %v257 = vunpack.c.h.bf16 %v255
  %s258 = scalar_lea.vmem %s1, 18
  %v259 = vpack.c.bf16 0.0, %v256
  %260 = vst [vmem:[%s258] sm:$0x3] %v259
  %s261 = scalar_lea.vmem %s0, 40
  %s263 = sor.u32 15, 7
  %s264 = sand.u32 %s263, 5
  %s265 = sshrl.u32 %s264, 1
  %s266 = sor.u32 %s264, %s265
  %s267 = sand.u32 3, %s266
  %v268 = vld [vmem:[%s261] sm:%s267]
  %v269 = vunpack.c.l.bf16 %v268
  %v270 = vunpack.c.h.bf16 %v268
  %s271 = scalar_lea.vmem %s1, 30
  %v272 = vpack.c.bf16 0.0, %v269
  %273 = vst [vmem:[%s271] sm:$0x3] %v272
  %s274 = scalar_lea.vmem %s0, 28
  %s276 = sor.u32 15, 7
  %s277 = sand.u32 %s276, 5
  %s278 = sshrl.u32 %s277, 1
  %s279 = sor.u32 %s277, %s278
  %s280 = sand.u32 3, %s279
  %v281 = vld [vmem:[%s274] sm:%s280]
  %v282 = vunpack.c.l.bf16 %v281
  %v283 = vunpack.c.h.bf16 %v281
  %s284 = scalar_lea.vmem %s1, 42
  %v285 = vpack.c.bf16 0.0, %v282
  %286 = vst [vmem:[%s284] sm:$0x3] %v285
  %s287 = scalar_lea.vmem %s0, 16
  %s289 = sor.u32 15, 7
  %s290 = sand.u32 %s289, 5
  %s291 = sshrl.u32 %s290, 1
  %s292 = sor.u32 %s290, %s291
  %s293 = sand.u32 3, %s292
  %v294 = vld [vmem:[%s287] sm:%s293]
  %v295 = vunpack.c.l.bf16 %v294
  %v296 = vunpack.c.h.bf16 %v294
  %s297 = scalar_lea.vmem %s1, 54
  %v298 = vpack.c.bf16 0.0, %v295
  %299 = vst [vmem:[%s297] sm:$0x3] %v298
  %s300 = scalar_lea.vmem %s0, 4
  %s302 = sor.u32 15, 7
  %s303 = sand.u32 %s302, 5
  %s304 = sshrl.u32 %s303, 1
  %s305 = sor.u32 %s303, %s304
  %s306 = sand.u32 3, %s305
  %v307 = vld [vmem:[%s300] sm:%s306]
  %v308 = vunpack.c.l.bf16 %v307
  %v309 = vunpack.c.h.bf16 %v307
  %s310 = scalar_lea.vmem %s1, 66
  %v311 = vpack.c.bf16 0.0, %v308
  %312 = vst [vmem:[%s310] sm:$0x3] %v311
  %s313 = scalar_lea.vmem %s0, 62
  %s315 = sor.u32 15, 7
  %s316 = sand.u32 %s315, 5
  %s317 = sshrl.u32 %s316, 1
  %s318 = sor.u32 %s316, %s317
  %s319 = sand.u32 3, %s318
  %v320 = vld [vmem:[%s313] sm:%s319]
  %v321 = vunpack.c.l.bf16 %v320
  %v322 = vunpack.c.h.bf16 %v320
  %s323 = scalar_lea.vmem %s1, 8
  %v324 = vpack.c.bf16 0.0, %v321
  %325 = vst [vmem:[%s323] sm:$0x3] %v324
  %s326 = scalar_lea.vmem %s0, 50
  %s328 = sor.u32 15, 7
  %s329 = sand.u32 %s328, 5
  %s330 = sshrl.u32 %s329, 1
  %s331 = sor.u32 %s329, %s330
  %s332 = sand.u32 3, %s331
  %v333 = vld [vmem:[%s326] sm:%s332]
  %v334 = vunpack.c.l.bf16 %v333
  %v335 = vunpack.c.h.bf16 %v333
  %s336 = scalar_lea.vmem %s1, 20
  %v337 = vpack.c.bf16 0.0, %v334
  %338 = vst [vmem:[%s336] sm:$0x3] %v337
  %s339 = scalar_lea.vmem %s0, 38
  %s341 = sor.u32 15, 7
  %s342 = sand.u32 %s341, 5
  %s343 = sshrl.u32 %s342, 1
  %s344 = sor.u32 %s342, %s343
  %s345 = sand.u32 3, %s344
  %v346 = vld [vmem:[%s339] sm:%s345]
  %v347 = vunpack.c.l.bf16 %v346
  %v348 = vunpack.c.h.bf16 %v346
  %s349 = scalar_lea.vmem %s1, 32
  %v350 = vpack.c.bf16 0.0, %v347
  %351 = vst [vmem:[%s349] sm:$0x3] %v350
  %s352 = scalar_lea.vmem %s0, 26
  %s354 = sor.u32 15, 7
  %s355 = sand.u32 %s354, 5
  %s356 = sshrl.u32 %s355, 1
  %s357 = sor.u32 %s355, %s356
  %s358 = sand.u32 3, %s357
  %v359 = vld [vmem:[%s352] sm:%s358]
  %v360 = vunpack.c.l.bf16 %v359
  %v361 = vunpack.c.h.bf16 %v359
  %s362 = scalar_lea.vmem %s1, 44
  %v363 = vpack.c.bf16 0.0, %v360
  %364 = vst [vmem:[%s362] sm:$0x3] %v363
  %s365 = scalar_lea.vmem %s0, 14
  %s367 = sor.u32 15, 7
  %s368 = sand.u32 %s367, 5
  %s369 = sshrl.u32 %s368, 1
  %s370 = sor.u32 %s368, %s369
  %s371 = sand.u32 3, %s370
  %v372 = vld [vmem:[%s365] sm:%s371]
  %v373 = vunpack.c.l.bf16 %v372
  %v374 = vunpack.c.h.bf16 %v372
  %s375 = scalar_lea.vmem %s1, 56
  %v376 = vpack.c.bf16 0.0, %v373
  %377 = vst [vmem:[%s375] sm:$0x3] %v376
  %s378 = scalar_lea.vmem %s0, 2
  %s380 = sor.u32 15, 7
  %s381 = sand.u32 %s380, 5
  %s382 = sshrl.u32 %s381, 1
  %s383 = sor.u32 %s381, %s382
  %s384 = sand.u32 3, %s383
  %v385 = vld [vmem:[%s378] sm:%s384]
  %v386 = vunpack.c.l.bf16 %v385
  %v387 = vunpack.c.h.bf16 %v385
  %s388 = scalar_lea.vmem %s1, 68
  %v389 = vpack.c.bf16 0.0, %v386
  %390 = vst [vmem:[%s388] sm:$0x3] %v389
  %s391 = scalar_lea.vmem %s0, 60
  %s393 = sor.u32 15, 7
  %s394 = sand.u32 %s393, 5
  %s395 = sshrl.u32 %s394, 1
  %s396 = sor.u32 %s394, %s395
  %s397 = sand.u32 3, %s396
  %v398 = vld [vmem:[%s391] sm:%s397]
  %v399 = vunpack.c.l.bf16 %v398
  %v400 = vunpack.c.h.bf16 %v398
  %s401 = scalar_lea.vmem %s1, 10
  %v402 = vpack.c.bf16 0.0, %v399
  %403 = vst [vmem:[%s401] sm:$0x3] %v402
  %s404 = scalar_lea.vmem %s0, 48
  %s406 = sor.u32 15, 7
  %s407 = sand.u32 %s406, 5
  %s408 = sshrl.u32 %s407, 1
  %s409 = sor.u32 %s407, %s408
  %s410 = sand.u32 3, %s409
  %v411 = vld [vmem:[%s404] sm:%s410]
  %v412 = vunpack.c.l.bf16 %v411
  %v413 = vunpack.c.h.bf16 %v411
  %s414 = scalar_lea.vmem %s1, 22
  %v415 = vpack.c.bf16 0.0, %v412
  %416 = vst [vmem:[%s414] sm:$0x3] %v415
  %s417 = scalar_lea.vmem %s0, 36
  %s419 = sor.u32 15, 7
  %s420 = sand.u32 %s419, 5
  %s421 = sshrl.u32 %s420, 1
  %s422 = sor.u32 %s420, %s421
  %s423 = sand.u32 3, %s422
  %v424 = vld [vmem:[%s417] sm:%s423]
  %v425 = vunpack.c.l.bf16 %v424
  %v426 = vunpack.c.h.bf16 %v424
  %s427 = scalar_lea.vmem %s1, 34
  %v428 = vpack.c.bf16 0.0, %v425
  %429 = vst [vmem:[%s427] sm:$0x3] %v428
  %s430 = scalar_lea.vmem %s0, 24
  %s432 = sor.u32 15, 7
  %s433 = sand.u32 %s432, 5
  %s434 = sshrl.u32 %s433, 1
  %s435 = sor.u32 %s433, %s434
  %s436 = sand.u32 3, %s435
  %v437 = vld [vmem:[%s430] sm:%s436]
  %v438 = vunpack.c.l.bf16 %v437
  %v439 = vunpack.c.h.bf16 %v437
  %s440 = scalar_lea.vmem %s1, 46
  %v441 = vpack.c.bf16 0.0, %v438
  %442 = vst [vmem:[%s440] sm:$0x3] %v441
  %s443 = scalar_lea.vmem %s0, 12
  %s445 = sor.u32 15, 7
  %s446 = sand.u32 %s445, 5
  %s447 = sshrl.u32 %s446, 1
  %s448 = sor.u32 %s446, %s447
  %s449 = sand.u32 3, %s448
  %v450 = vld [vmem:[%s443] sm:%s449]
  %v451 = vunpack.c.l.bf16 %v450
  %v452 = vunpack.c.h.bf16 %v450
  %s453 = scalar_lea.vmem %s1, 58
  %v454 = vpack.c.bf16 0.0, %v451
  %455 = vst [vmem:[%s453] sm:$0x3] %v454
  %s457 = sor.u32 15, 7
  %s458 = sand.u32 %s457, 5
  %s459 = sshrl.u32 %s458, 1
  %s460 = sor.u32 %s458, %s459
  %s461 = sand.u32 3, %s460
  %v462 = vld [vmem:[%s0] sm:%s461]
  %v463 = vunpack.c.l.bf16 %v462
  %v464 = vunpack.c.h.bf16 %v462
  %s465 = scalar_lea.vmem %s1, 70
  %v466 = vpack.c.bf16 0.0, %v463
  %467 = vst [vmem:[%s465] sm:$0x3] %v466

// kernel: net_forward.3
$region0: #{net_forward.3}
  #allocation0 [shape = 'u32[]', space=smem, size = 0x4, offset = 0x4, fixed_abs, tag = 'smem constant byte address 0x4 - core index']
  #allocation1 [shape = 'u32[144,128]{1,0:T(1,128)}', space=vmem, size = 0x12000, scoped, tag = 'internal scratch']
  %s0 = inlined_call_operand.vmem [shape: bf16[392,128], index: 0, kind: input, shape index: {}]
  %s1 = inlined_call_operand.vmem [shape: bf16[128,512], index: 1, kind: input, shape index: {}]
  %s2 = inlined_call_operand.vmem [shape: f32[1,128], index: 2, kind: input, shape index: {}]
  %s3 = inlined_call_operand.vmem [shape: bf16[392,128], index: 3, kind: output, shape index: {}]
  %s4 = sld [smem:[#allocation0]]
  $region89: #{net_forward.3} parent=0
    _
  %s6 = ssub.s32 1, %s4
  %s7 = scalar_select 0, %s6, %s4
  $region1: #{net_forward.3} parent=0
    #allocation2 [shape = 'u8[102400]{0}', space=vmem, size = 0x19000, scoped, tag = 'output window, operand 0']
    loop: start=0, step=1, limit=4
    $region2: #{net_forward.3} parent=1 // loop_pre_header
      _
    $region3: #{net_forward.3} parent=1 // loop_header
      %s9 = sphi 0, %s13
      %p10 = scmp.ge.s32.totalorder %s9, 4
      %s19 = sphi 0, %s21
      %s22 = sphi 0, %s19
      %s23 = sphi 0, %s22
      %s39 = sphi 0, %s23
      %s43 = sphi 0, %s43
      %s45 = sphi 0, %s43
      %s46 = sphi 0, %s45
      %s60 = sphi 0, %s46
      %s64 = sphi 0, %s64
      %s66 = sphi 0, %s64
      %s67 = sphi 0, %s66
      %s81 = sphi 0, %s67
      %s87 = sphi 0, %s89
      %s90 = sphi 0, %s87
      %s91 = sphi 0, %s90
      %s107 = sphi 0, %s91
    $region4: #{net_forward.3} parent=1 // loop_header_branch
      %12 = sbr.rel (%p10) target = $region8
    $region5: #{net_forward.3} parent=1 // loop_body
      %s14 = ssub.s32 %s9, 1
      %s15 = ssub.s32 %s9, 2
      %s16 = sadd.s32 %s9, 1
      %s17 = ssub.s32 %s9, %s16
      %p18 = scmp.eq.s32.totalorder %s17, 0
      %s20 = sadd.s32 %s19, 1
      %s21 = scalar_select %p18, %s19, %s20
      %p24 = pneg %p18
      %p25 = scmp.eq.s32.totalorder %s9, 1
      %p26 = por %p24, %p25
      %p27 = scmp.ne.s32.totalorder %s19, %s22
      %p28 = scmp.eq.s32.totalorder %s9, 0
      %p29 = por %p27, %p28
      %p30 = scmp.ne.s32.totalorder %s19, %s22
      %p31 = scmp.eq.s32.totalorder %s14, 1
      %p32 = por %p30, %p31
      %p33 = scmp.ne.s32.totalorder %s22, %s23
      %p34 = scmp.eq.s32.totalorder %s14, 0
      %p35 = por %p33, %p34
      %p36 = scmp.ne.s32.totalorder %s22, %s23
      %p37 = scmp.eq.s32.totalorder %s15, 1
      %p38 = por %p36, %p37
      %p40 = scmp.ne.s32.totalorder %s23, %s39
      %p41 = scmp.eq.s32.totalorder %s15, 0
      %p42 = por %p40, %p41
      %s44 = sadd.s32 %s43, 1
      %p47 = scmp.eq.s32.totalorder %s9, 1
      %p48 = scmp.ne.s32.totalorder %s43, %s45
      %p49 = scmp.eq.s32.totalorder %s9, 0
      %p50 = por %p48, %p49
      %p51 = scmp.ne.s32.totalorder %s43, %s45
      %p52 = scmp.eq.s32.totalorder %s14, 1
      %p53 = por %p51, %p52
      %p54 = scmp.ne.s32.totalorder %s45, %s46
      %p55 = scmp.eq.s32.totalorder %s14, 0
      %p56 = por %p54, %p55
      %p57 = scmp.ne.s32.totalorder %s45, %s46
      %p58 = scmp.eq.s32.totalorder %s15, 1
      %p59 = por %p57, %p58
      %p61 = scmp.ne.s32.totalorder %s46, %s60
      %p62 = scmp.eq.s32.totalorder %s15, 0
      %p63 = por %p61, %p62
      %s65 = sadd.s32 %s64, 1
      %p68 = scmp.eq.s32.totalorder %s9, 1
      %p69 = scmp.ne.s32.totalorder %s64, %s66
      %p70 = scmp.eq.s32.totalorder %s9, 0
      %p71 = por %p69, %p70
      %p72 = scmp.ne.s32.totalorder %s64, %s66
      %p73 = scmp.eq.s32.totalorder %s14, 1
      %p74 = por %p72, %p73
      %p75 = scmp.ne.s32.totalorder %s66, %s67
      %p76 = scmp.eq.s32.totalorder %s14, 0
      %p77 = por %p75, %p76
      %p78 = scmp.ne.s32.totalorder %s66, %s67
      %p79 = scmp.eq.s32.totalorder %s15, 1
      %p80 = por %p78, %p79
      %p82 = scmp.ne.s32.totalorder %s67, %s81
      %p83 = scmp.eq.s32.totalorder %s15, 0
      %p84 = por %p82, %p83
      %s85 = ssub.s32 %s9, %s16
      %p86 = scmp.eq.s32.totalorder %s85, 0
      %s88 = sadd.s32 %s87, 1
      %s89 = scalar_select %p86, %s87, %s88
      %p92 = pneg %p86
      %p93 = scmp.eq.s32.totalorder %s9, 1
      %p94 = por %p92, %p93
      %p95 = scmp.ne.s32.totalorder %s87, %s90
      %p96 = scmp.eq.s32.totalorder %s9, 0
      %p97 = por %p95, %p96
      %p98 = scmp.ne.s32.totalorder %s87, %s90
      %p99 = scmp.eq.s32.totalorder %s14, 1
      %p100 = por %p98, %p99
      %p101 = scmp.ne.s32.totalorder %s90, %s91
      %p102 = scmp.eq.s32.totalorder %s14, 0
      %p103 = por %p101, %p102
      %p104 = scmp.ne.s32.totalorder %s90, %s91
      %p105 = scmp.eq.s32.totalorder %s15, 1
      %p106 = por %p104, %p105
      %p108 = scmp.ne.s32.totalorder %s91, %s107
      %p109 = scmp.eq.s32.totalorder %s15, 0
      %p110 = por %p108, %p109
      %p111 = scmp.le.s32.totalorder 1, %s9
      %p112 = scmp.lt.s32.totalorder %s9, 3
      %p113 = pnand %p111, %p112
      %p114 = pneg %p113
      // Predicated region
      $region9: #{net_forward.3} parent=5 // pred_check
        _
      $region10: #{net_forward.3} parent=5 // pred_check_branch
        %116 = sbr.rel (%p113) target = $region12
      $region11: #{net_forward.3} parent=5 // pred_region
        %s117 = ssub.s32 %s9, 1
        // Predicated region
        $region13: #{net_forward.3} parent=11 // pred_check
          %p118 = pneg %p56
        $region14: #{net_forward.3} parent=11 // pred_check_branch
          %120 = sbr.rel (%p118) target = $region16
        $region15: #{net_forward.3} parent=11 // pred_region
          _
        $region16: #{net_forward.3} parent=11 // pred_fallthru
          _
        // Predicated region
        $region17: #{net_forward.3} parent=11 // pred_check
          %p121 = pneg %p77
        $region18: #{net_forward.3} parent=11 // pred_check_branch
          %123 = sbr.rel (%p121) target = $region20
        $region19: #{net_forward.3} parent=11 // pred_region
          _
        $region20: #{net_forward.3} parent=11 // pred_fallthru
          _
      $region12: #{net_forward.3} parent=5 // pred_fallthru
        _
      %p124 = scmp.lt.s32.totalorder %s9, 2
      // Predicated region
      $region21: #{net_forward.3} parent=5 // pred_check
        %p125 = pneg %p124
      $region22: #{net_forward.3} parent=5 // pred_check_branch
        %127 = sbr.rel (%p125) target = $region24
      $region23: #{net_forward.3} parent=5 // pred_region
        // Predicated region
        $region25: #{net_forward.3} parent=23 // pred_check
          %p128 = pneg %p29
        $region26: #{net_forward.3} parent=23 // pred_check_branch
          %130 = sbr.rel (%p128) target = $region28
        $region27: #{net_forward.3} parent=23 // pred_region
          %s131 = smul.u32 25, %s9
          %s132 = ssub.s32 49, %s131
          %p133 = scmp.lt.s32.totalorder %s132, 25
          %s134 = scalar_select %p133, %s132, 25
          %s135 = smul.u32 64, %s134
          %p136 = scmp.lt.s32.totalorder %s131, 48
          %s137 = scalar_select %p136, %s131, 48
          %s138 = smul.addr %s137, 4
          %s139 = scalar_lea.vmem %s0, %s138
          %s140 = smul.u32 25, %s9
          %s141 = ssub.s32 49, %s140
          %p142 = scmp.lt.s32.totalorder %s141, 25
          %s143 = scalar_select %p142, %s141, 25
          %s144 = smul.u32 64, %s143
        $region28: #{net_forward.3} parent=23 // pred_fallthru
          _
      $region24: #{net_forward.3} parent=5 // pred_fallthru
        _
      %p145 = scmp.le.s32.totalorder 1, %s9
      %p146 = scmp.lt.s32.totalorder %s9, 3
      %p147 = pnand %p145, %p146
      %p148 = pneg %p147
      // Predicated region
      $region29: #{net_forward.3} parent=5 // pred_check
        _
      $region30: #{net_forward.3} parent=5 // pred_check_branch
        %150 = sbr.rel (%p147) target = $region32
      $region31: #{net_forward.3} parent=5 // pred_region
        %s151 = ssub.s32 %s9, 1
        %s152 = smul.u32 25, %s14
        %s153 = ssub.s32 49, %s152
        %p154 = scmp.lt.s32.totalorder %s153, 25
        %s155 = scalar_select %p154, %s153, 25
        %s156 = smul.u32 64, %s155
        %p157 = scmp.lt.s32.totalorder %s152, 48
        %s158 = scalar_select %p157, %s152, 48
        %s159 = smul.addr %s158, 4
        %s160 = scalar_lea.vmem %s0, %s159
        %p161 = pneg %p35
        %p162 = pneg %p32
        %p163 = pneg %p56
        %p164 = pneg %p53
        %p165 = pneg %p77
        %p166 = pneg %p74
        %p167 = pneg %p103
        %p168 = pneg %p100
        %s169 = sand.u32 %s90, 1
        %s170 = sand.u32 %s90, 1
        %s171 = smul.addr %s170, 100
        %s172 = scalar_lea.vmem [#allocation2], %s171
        %s173 = smul.u32 25, %s14
        %s174 = ssub.s32 49, %s173
        %p175 = scmp.lt.s32.totalorder %s174, 25
        %s176 = scalar_select %p175, %s174, 25
        %s177 = smul.u32 64, %s176
        %p178 = scmp.lt.s32.totalorder %s173, 48
        %s179 = scalar_select %p178, %s173, 48
        %s180 = smul.addr %s179, 4
        %s181 = scalar_lea.vmem %s0, %s180
        %s182 = smul.u32 25, %s14
        %s183 = ssub.s32 49, %s182
        %p184 = scmp.lt.s32.totalorder %s183, 25
        %s185 = scalar_select %p184, %s183, 25
        %s186 = smul.u32 64, %s185
        %s187 = smul.u32 25, %s14
        %s188 = ssub.s32 49, %s187
        %p189 = scmp.lt.s32.totalorder %s188, 25
        %s190 = scalar_select %p189, %s188, 25
        %s191 = smul.u32 64, %s190
        %v193 = vld [vmem:[%s181] sm:$0xf]
        %v194 = vld [vmem:[%s181 + $0x4] sm:$0xf]
        %v195 = vld [vmem:[%s181 + $0x8] sm:$0xf]
        %v196 = vld [vmem:[%s181 + $0xc] sm:$0xf]
        %v197 = vld [vmem:[%s181 + $0x10] sm:$0xf]
        %v198 = vld [vmem:[%s181 + $0x14] sm:$0xf]
        %v199 = vld [vmem:[%s181 + $0x18] sm:$0xf]
        %v200 = vld [vmem:[%s181 + $0x1c] sm:$0xf]
        %v201 = vld [vmem:[%s181 + $0x20] sm:$0xf]
        %v202 = vld [vmem:[%s181 + $0x24] sm:$0xf]
        %v203 = vld [vmem:[%s181 + $0x28] sm:$0xf]
        %v204 = vld [vmem:[%s181 + $0x2c] sm:$0xf]
        %v205 = vld [vmem:[%s181 + $0x30] sm:$0xf]
        %v206 = vld [vmem:[%s181 + $0x34] sm:$0xf]
        %v207 = vld [vmem:[%s181 + $0x38] sm:$0xf]
        %v208 = vld [vmem:[%s181 + $0x3c] sm:$0xf]
        %v209 = vld [vmem:[%s181 + $0x40] sm:$0xf]
        %v210 = vld [vmem:[%s181 + $0x44] sm:$0xf]
        %v211 = vld [vmem:[%s181 + $0x48] sm:$0xf]
        %v212 = vld [vmem:[%s181 + $0x4c] sm:$0xf]
        %v213 = vld [vmem:[%s181 + $0x50] sm:$0xf]
        %v214 = vld [vmem:[%s181 + $0x54] sm:$0xf]
        %v215 = vld [vmem:[%s181 + $0x58] sm:$0xf]
        %v216 = vld [vmem:[%s181 + $0x5c] sm:$0xf]
        %v217 = vld [vmem:[%s181 + $0x60] sm:$0xf]
        %v218 = vld [vmem:[%s1] sm:$0xff]
        %v219 = vld [vmem:[%s1 + $0x8] sm:$0xff]
        %v220 = vld [vmem:[%s1 + $0x10] sm:$0xff]
        %v221 = vld [vmem:[%s1 + $0x18] sm:$0xff]
        %v222 = vld [vmem:[%s1 + $0x20] sm:$0xff]
        %v223 = vld [vmem:[%s1 + $0x28] sm:$0xff]
        %v224 = vld [vmem:[%s1 + $0x30] sm:$0xff]
        %v225 = vld [vmem:[%s1 + $0x38] sm:$0xff]
        %v226 = vld [vmem:[%s1 + $0x40] sm:$0xff]
        %v227 = vld [vmem:[%s1 + $0x48] sm:$0xff]
        %v228 = vld [vmem:[%s1 + $0x50] sm:$0xff]
        %v229 = vld [vmem:[%s1 + $0x58] sm:$0xff]
        %v230 = vld [vmem:[%s1 + $0x60] sm:$0xff]
        %v231 = vld [vmem:[%s1 + $0x68] sm:$0xff]
        %v232 = vld [vmem:[%s1 + $0x70] sm:$0xff]
        %v233 = vld [vmem:[%s1 + $0x78] sm:$0xff]
        %v234 = vld [vmem:[%s1 + $0x80] sm:$0xff]
        %v235 = vld [vmem:[%s1 + $0x88] sm:$0xff]
        %v236 = vld [vmem:[%s1 + $0x90] sm:$0xff]
        %v237 = vld [vmem:[%s1 + $0x98] sm:$0xff]
        %v238 = vld [vmem:[%s1 + $0xa0] sm:$0xff]
        %v239 = vld [vmem:[%s1 + $0xa8] sm:$0xff]
        %v240 = vld [vmem:[%s1 + $0xb0] sm:$0xff]
        %v241 = vld [vmem:[%s1 + $0xb8] sm:$0xff]
        %v242 = vld [vmem:[%s1 + $0xc0] sm:$0xff]
        %v243 = vld [vmem:[%s1 + $0xc8] sm:$0xff]
        %v244 = vld [vmem:[%s1 + $0xd0] sm:$0xff]
        %v245 = vld [vmem:[%s1 + $0xd8] sm:$0xff]
        %v246 = vld [vmem:[%s1 + $0xe0] sm:$0xff]
        %v247 = vld [vmem:[%s1 + $0xe8] sm:$0xff]
        %v248 = vld [vmem:[%s1 + $0xf0] sm:$0xff]
        %v249 = vld [vmem:[%s1 + $0xf8] sm:$0xff]
        %v275 = vunpack.c.l.b16 %v193
        %v276 = vunpack.c.l.b16 %v194
        %v277 = vunpack.c.l.b16 %v195
        %v278 = vunpack.c.l.b16 %v196
        %v279 = vunpack.c.l.b16 %v197
        %v280 = vunpack.c.l.b16 %v198
        %v281 = vunpack.c.l.b16 %v199
        %v282 = vunpack.c.l.b16 %v200
        %v283 = vunpack.c.l.b16 %v201
        %v284 = vunpack.c.l.b16 %v202
        %v285 = vunpack.c.l.b16 %v203
        %v286 = vunpack.c.l.b16 %v204
        %v287 = vunpack.c.l.b16 %v205
        %v288 = vunpack.c.l.b16 %v206
        %v289 = vunpack.c.l.b16 %v207
        %v290 = vunpack.c.l.b16 %v208
        %v291 = vunpack.c.l.b16 %v209
        %v292 = vunpack.c.l.b16 %v210
        %v293 = vunpack.c.l.b16 %v211
        %v294 = vunpack.c.l.b16 %v212
        %v295 = vunpack.c.l.b16 %v213
        %v296 = vunpack.c.l.b16 %v214
        %v297 = vunpack.c.l.b16 %v215
        %v298 = vunpack.c.l.b16 %v216
        %v299 = vunpack.c.l.b16 %v217
        %v300 = vpack.c.b16 %v276, %v275
        %v301 = vpack.c.b16 %v278, %v277
        %v302 = vpack.c.b16 %v280, %v279
        %v303 = vpack.c.b16 %v282, %v281
        %v304 = vpack.c.b16 %v284, %v283
        %v305 = vpack.c.b16 %v286, %v285
        %v306 = vpack.c.b16 %v288, %v287
        %v307 = vpack.c.b16 %v290, %v289
        %v308 = vpack.c.b16 %v292, %v291
        %v309 = vpack.c.b16 %v294, %v293
        %v310 = vpack.c.b16 %v296, %v295
        %v311 = vpack.c.b16 %v298, %v297
        %v312 = vpack.c.b16 %v299, %v299
        %v358 = vunpack.c.l.b16 %v218
        %v359 = vunpack.c.h.b16 %v218
        %v360 = vunpack.c.l.b16 %v219
        %v361 = vunpack.c.h.b16 %v219
        %v362 = vunpack.c.l.b16 %v220
        %v363 = vunpack.c.h.b16 %v220
        %v364 = vunpack.c.l.b16 %v221
        %v365 = vunpack.c.h.b16 %v221
        %v366 = vunpack.c.l.b16 %v222
        %v367 = vunpack.c.h.b16 %v222
        %v368 = vunpack.c.l.b16 %v223
        %v369 = vunpack.c.h.b16 %v223
        %v370 = vunpack.c.l.b16 %v224
        %v371 = vunpack.c.h.b16 %v224
        %v372 = vunpack.c.l.b16 %v225
        %v373 = vunpack.c.h.b16 %v225
        %v374 = vunpack.c.l.b16 %v226
        %v375 = vunpack.c.h.b16 %v226
        %v376 = vunpack.c.l.b16 %v227
        %v377 = vunpack.c.h.b16 %v227
        %v378 = vunpack.c.l.b16 %v228
        %v379 = vunpack.c.h.b16 %v228
        %v380 = vunpack.c.l.b16 %v229
        %v381 = vunpack.c.h.b16 %v229
        %v382 = vunpack.c.l.b16 %v230
        %v383 = vunpack.c.h.b16 %v230
        %v384 = vunpack.c.l.b16 %v231
        %v385 = vunpack.c.h.b16 %v231
        %v386 = vunpack.c.l.b16 %v232
        %v387 = vunpack.c.h.b16 %v232
        %v388 = vunpack.c.l.b16 %v233
        %v389 = vunpack.c.h.b16 %v233
        %v390 = vunpack.c.l.b16 %v234
        %v391 = vunpack.c.h.b16 %v234
        %v392 = vunpack.c.l.b16 %v235
        %v393 = vunpack.c.h.b16 %v235
        %v394 = vunpack.c.l.b16 %v236
        %v395 = vunpack.c.h.b16 %v236
        %v396 = vunpack.c.l.b16 %v237
        %v397 = vunpack.c.h.b16 %v237
        %v398 = vunpack.c.l.b16 %v238
        %v399 = vunpack.c.h.b16 %v238
        %v400 = vunpack.c.l.b16 %v239
        %v401 = vunpack.c.h.b16 %v239
        %v402 = vunpack.c.l.b16 %v240
        %v403 = vunpack.c.h.b16 %v240
        %v404 = vunpack.c.l.b16 %v241
        %v405 = vunpack.c.h.b16 %v241
        %v406 = vunpack.c.l.b16 %v242
        %v407 = vunpack.c.h.b16 %v242
        %v408 = vunpack.c.l.b16 %v243
        %v409 = vunpack.c.h.b16 %v243
        %v410 = vunpack.c.l.b16 %v244
        %v411 = vunpack.c.h.b16 %v244
        %v412 = vunpack.c.l.b16 %v245
        %v413 = vunpack.c.h.b16 %v245
        %v414 = vunpack.c.l.b16 %v246
        %v415 = vunpack.c.h.b16 %v246
        %v416 = vunpack.c.l.b16 %v247
        %v417 = vunpack.c.h.b16 %v247
        %v418 = vunpack.c.l.b16 %v248
        %v419 = vunpack.c.h.b16 %v248
        %v420 = vunpack.c.l.b16 %v249
        %v421 = vunpack.c.h.b16 %v249
        %v422 = vpack.c.b16 %v362, %v358
        %v423 = vpack.c.b16 %v363, %v359
        %v424 = vpack.c.b16 %v364, %v360
        %v425 = vpack.c.b16 %v365, %v361
        %v426 = vpack.c.b16 %v370, %v366
        %v427 = vpack.c.b16 %v371, %v367
        %v428 = vpack.c.b16 %v372, %v368
        %v429 = vpack.c.b16 %v373, %v369
        %v430 = vpack.c.b16 %v378, %v374
        %v431 = vpack.c.b16 %v379, %v375
        %v432 = vpack.c.b16 %v380, %v376
        %v433 = vpack.c.b16 %v381, %v377
        %v434 = vpack.c.b16 %v386, %v382
        %v435 = vpack.c.b16 %v387, %v383
        %v436 = vpack.c.b16 %v388, %v384
        %v437 = vpack.c.b16 %v389, %v385
        %v438 = vpack.c.b16 %v394, %v390
        %v439 = vpack.c.b16 %v395, %v391
        %v440 = vpack.c.b16 %v396, %v392
        %v441 = vpack.c.b16 %v397, %v393
        %v442 = vpack.c.b16 %v402, %v398
        %v443 = vpack.c.b16 %v403, %v399
        %v444 = vpack.c.b16 %v404, %v400
        %v445 = vpack.c.b16 %v405, %v401
        %v446 = vpack.c.b16 %v410, %v406
        %v447 = vpack.c.b16 %v411, %v407
        %v448 = vpack.c.b16 %v412, %v408
        %v449 = vpack.c.b16 %v413, %v409
        %v450 = vpack.c.b16 %v418, %v414
        %v451 = vpack.c.b16 %v419, %v415
        %v452 = vpack.c.b16 %v420, %v416
        %v453 = vpack.c.b16 %v421, %v417
        %486 = vmatprep.subr.bf16.mxu0 %v423
        %487 = vmatpush1.bf16.msra.mxu0 %v422
        %488 = vmatprep.subr.bf16.mxu0 %v427
        %489 = vmatpush1.bf16.msra.mxu0 %v426
        %490 = vmatprep.subr.bf16.mxu0 %v431
        %491 = vmatpush1.bf16.msra.mxu0 %v430
        %492 = vmatprep.subr.bf16.mxu0 %v435
        %493 = vmatpush1.bf16.msra.mxu0 %v434
        %494 = vmatprep.subr.bf16.mxu0 %v439
        %495 = vmatpush1.bf16.msra.mxu0 %v438
        %496 = vmatprep.subr.bf16.mxu0 %v443
        %497 = vmatpush1.bf16.msra.mxu0 %v442
        %498 = vmatprep.subr.bf16.mxu0 %v447
        %499 = vmatpush1.bf16.msra.mxu0 %v446
        %500 = vmatprep.subr.bf16.mxu0 %v451
        %501 = vmatpush1.bf16.msra.mxu0 %v450
        %502 = vmatprep.subr.bf16.mxu0 0
        %503 = vmatpush1.bf16.msra.mxu0 0
        %504 = vmatprep.subr.bf16.mxu0 0
        %505 = vmatpush1.bf16.msra.mxu0 0
        %506 = vmatprep.subr.bf16.mxu0 0
        %507 = vmatpush1.bf16.msra.mxu0 0
        %508 = vmatprep.subr.bf16.mxu0 0
        %509 = vmatpush1.bf16.msra.mxu0 0
        %510 = vmatprep.subr.bf16.mxu0 0
        %511 = vmatpush1.bf16.msra.mxu0 0
        %512 = vmatprep.subr.bf16.mxu0 0
        %513 = vmatpush1.bf16.msra.mxu0 0
        %514 = vmatprep.subr.bf16.mxu0 0
        %515 = vmatpush1.bf16.msra.mxu0 0
        %516 = vmatprep.subr.bf16.mxu0 0
        %517 = vmatpush1.bf16.msra.mxu0 0
        %518 = vmatprep.mubr.bf16.mxu0 0
        %519 = vmatmul.mubr.bf16.gmra.mrb[0].mxu0 %v300
        %v520 = vpop.f32.mrb[0].mxu0
        %v521 = vadd.f32 0.0, %v520
        %v522 = vpop.f32.mrb[0].mxu0
        %v523 = vadd.f32 0.0, %v522
        %v524 = vpop.f32.mrb[0].mxu0
        %v525 = vadd.f32 0.0, %v524
        %v526 = vpop.f32.mrb[0].mxu0
        %v527 = vadd.f32 0.0, %v526
        %528 = vmatprep.mubr.bf16.mxu0 0
        %529 = vmatmul.mubr.bf16.gmra.mrb[0].mxu0 %v301
        %v530 = vpop.f32.mrb[0].mxu0
        %v531 = vadd.f32 0.0, %v530
        %v532 = vpop.f32.mrb[0].mxu0
        %v533 = vadd.f32 0.0, %v532
        %v534 = vpop.f32.mrb[0].mxu0
        %v535 = vadd.f32 0.0, %v534
        %v536 = vpop.f32.mrb[0].mxu0
        %v537 = vadd.f32 0.0, %v536
        %538 = vmatprep.mubr.bf16.mxu0 0
        %539 = vmatmul.mubr.bf16.gmra.mrb[0].mxu0 %v302
        %v540 = vpop.f32.mrb[0].mxu0
        %v541 = vadd.f32 0.0, %v540
        %v542 = vpop.f32.mrb[0].mxu0
        %v543 = vadd.f32 0.0, %v542
        %v544 = vpop.f32.mrb[0].mxu0
        %v545 = vadd.f32 0.0, %v544
        %v546 = vpop.f32.mrb[0].mxu0
        %v547 = vadd.f32 0.0, %v546
        %548 = vmatprep.mubr.bf16.mxu0 0
        %549 = vmatmul.mubr.bf16.gmra.mrb[0].mxu0 %v303
        %v550 = vpop.f32.mrb[0].mxu0
        %v551 = vadd.f32 0.0, %v550
        %v552 = vpop.f32.mrb[0].mxu0
        %v553 = vadd.f32 0.0, %v552
        %v554 = vpop.f32.mrb[0].mxu0
        %v555 = vadd.f32 0.0, %v554
        %v556 = vpop.f32.mrb[0].mxu0
        %v557 = vadd.f32 0.0, %v556
        %558 = vmatprep.mubr.bf16.mxu0 0
        %559 = vmatmul.mubr.bf16.gmra.mrb[0].mxu0 %v304
        %v560 = vpop.f32.mrb[0].mxu0
        %v561 = vadd.f32 0.0, %v560
        %v562 = vpop.f32.mrb[0].mxu0
        %v563 = vadd.f32 0.0, %v562
        %v564 = vpop.f32.mrb[0].mxu0
        %v565 = vadd.f32 0.0, %v564
        %v566 = vpop.f32.mrb[0].mxu0
        %v567 = vadd.f32 0.0, %v566
        %568 = vmatprep.mubr.bf16.mxu0 0
        %569 = vmatmul.mubr.bf16.gmra.mrb[0].mxu0 %v305
        %v570 = vpop.f32.mrb[0].mxu0
        %v571 = vadd.f32 0.0, %v570
        %v572 = vpop.f32.mrb[0].mxu0
        %v573 = vadd.f32 0.0, %v572
        %v574 = vpop.f32.mrb[0].mxu0
        %v575 = vadd.f32 0.0, %v574
        %v576 = vpop.f32.mrb[0].mxu0
        %v577 = vadd.f32 0.0, %v576
        %578 = vmatprep.mubr.bf16.mxu0 0
        %579 = vmatmul.mubr.bf16.gmra.mrb[0].mxu0 %v306
        %v580 = vpop.f32.mrb[0].mxu0
        %v581 = vadd.f32 0.0, %v580
        %v582 = vpop.f32.mrb[0].mxu0
        %v583 = vadd.f32 0.0, %v582
        %v584 = vpop.f32.mrb[0].mxu0
        %v585 = vadd.f32 0.0, %v584
        %v586 = vpop.f32.mrb[0].mxu0
        %v587 = vadd.f32 0.0, %v586
        %588 = vmatprep.mubr.bf16.mxu0 0
        %589 = vmatmul.mubr.bf16.gmra.mrb[0].mxu0 %v307
        %v590 = vpop.f32.mrb[0].mxu0
        %v591 = vadd.f32 0.0, %v590
        %v592 = vpop.f32.mrb[0].mxu0
        %v593 = vadd.f32 0.0, %v592
        %v594 = vpop.f32.mrb[0].mxu0
        %v595 = vadd.f32 0.0, %v594
        %v596 = vpop.f32.mrb[0].mxu0
        %v597 = vadd.f32 0.0, %v596
        %598 = vmatprep.mubr.bf16.mxu0 0
        %599 = vmatmul.mubr.bf16.gmra.mrb[0].mxu0 %v308
        %v600 = vpop.f32.mrb[0].mxu0
        %v601 = vadd.f32 0.0, %v600
        %v602 = vpop.f32.mrb[0].mxu0
        %v603 = vadd.f32 0.0, %v602
        %v604 = vpop.f32.mrb[0].mxu0
        %v605 = vadd.f32 0.0, %v604
        %v606 = vpop.f32.mrb[0].mxu0
        %v607 = vadd.f32 0.0, %v606
        %608 = vmatprep.mubr.bf16.mxu0 0
        %609 = vmatmul.mubr.bf16.gmra.mrb[0].mxu0 %v309
        %v610 = vpop.f32.mrb[0].mxu0
        %v611 = vadd.f32 0.0, %v610
        %v612 = vpop.f32.mrb[0].mxu0
        %v613 = vadd.f32 0.0, %v612
        %v614 = vpop.f32.mrb[0].mxu0
        %v615 = vadd.f32 0.0, %v614
        %v616 = vpop.f32.mrb[0].mxu0
        %v617 = vadd.f32 0.0, %v616
        %618 = vmatprep.mubr.bf16.mxu0 0
        %619 = vmatmul.mubr.bf16.gmra.mrb[0].mxu0 %v310
        %v620 = vpop.f32.mrb[0].mxu0
        %v621 = vadd.f32 0.0, %v620
        %v622 = vpop.f32.mrb[0].mxu0
        %v623 = vadd.f32 0.0, %v622
        %v624 = vpop.f32.mrb[0].mxu0
        %v625 = vadd.f32 0.0, %v624
        %v626 = vpop.f32.mrb[0].mxu0
        %v627 = vadd.f32 0.0, %v626
        %628 = vmatprep.mubr.bf16.mxu0 0
        %629 = vmatmul.mubr.bf16.gmra.mrb[0].mxu0 %v311
        %v630 = vpop.f32.mrb[0].mxu0
        %v631 = vadd.f32 0.0, %v630
        %v632 = vpop.f32.mrb[0].mxu0
        %v633 = vadd.f32 0.0, %v632
        %v634 = vpop.f32.mrb[0].mxu0
        %v635 = vadd.f32 0.0, %v634
        %v636 = vpop.f32.mrb[0].mxu0
        %v637 = vadd.f32 0.0, %v636
        %638 = vmatprep.mubr.bf16.mxu0 0
        %639 = vmatmul.mubr.bf16.gmra.mrb[0].mxu0 %v312
        %v640 = vpop.f32.mrb[0].mxu0
        %v641 = vadd.f32 0.0, %v640
        %v642 = vpop.f32.mrb[0].mxu0
        %v643 = vadd.f32 0.0, %v642
        %v644 = vpop.f32.mrb[0].mxu0
        %v645 = vpop.f32.mrb[0].mxu0
        %646 = vdwg.mxu0
        %647 = vmatprep.subr.bf16.mxu0 %v425
        %648 = vmatpush1.bf16.msra.mxu0 %v424
        %649 = vmatprep.subr.bf16.mxu0 %v429
        %650 = vmatpush1.bf16.msra.mxu0 %v428
        %651 = vmatprep.subr.bf16.mxu0 %v433
        %652 = vmatpush1.bf16.msra.mxu0 %v432
        %653 = vmatprep.subr.bf16.mxu0 %v437
        %654 = vmatpush1.bf16.msra.mxu0 %v436
        %655 = vmatprep.subr.bf16.mxu0 %v441
        %656 = vmatpush1.bf16.msra.mxu0 %v440
        %657 = vmatprep.subr.bf16.mxu0 %v445
        %658 = vmatpush1.bf16.msra.mxu0 %v444
        %659 = vmatprep.subr.bf16.mxu0 %v449
        %660 = vmatpush1.bf16.msra.mxu0 %v448
        %661 = vmatprep.subr.bf16.mxu0 %v453
        %662 = vmatpush1.bf16.msra.mxu0 %v452
        %663 = vmatprep.subr.bf16.mxu0 0
        %664 = vmatpush1.bf16.msra.mxu0 0
        %665 = vmatprep.subr.bf16.mxu0 0
        %666 = vmatpush1.bf16.msra.mxu0 0
        %667 = vmatprep.subr.bf16.mxu0 0
        %668 = vmatpush1.bf16.msra.mxu0 0
        %669 = vmatprep.subr.bf16.mxu0 0
        %670 = vmatpush1.bf16.msra.mxu0 0
        %671 = vmatprep.subr.bf16.mxu0 0
        %672 = vmatpush1.bf16.msra.mxu0 0
        %673 = vmatprep.subr.bf16.mxu0 0
        %674 = vmatpush1.bf16.msra.mxu0 0
        %675 = vmatprep.subr.bf16.mxu0 0
        %676 = vmatpush1.bf16.msra.mxu0 0
        %677 = vmatprep.subr.bf16.mxu0 0
        %678 = vmatpush1.bf16.msra.mxu0 0
        %679 = vmatprep.mubr.bf16.mxu0 0
        %680 = vmatmul.mubr.bf16.gmra.mrb[0].mxu0 %v300
        %v681 = vpop.f32.mrb[0].mxu0
        %v682 = vadd.f32 0.0, %v681
        %v683 = vpop.f32.mrb[0].mxu0
        %v684 = vadd.f32 0.0, %v683
        %v685 = vpop.f32.mrb[0].mxu0
        %v686 = vadd.f32 0.0, %v685
        %v687 = vpop.f32.mrb[0].mxu0
        %v688 = vadd.f32 0.0, %v687
        %689 = vmatprep.mubr.bf16.mxu0 0
        %690 = vmatmul.mubr.bf16.gmra.mrb[0].mxu0 %v301
        %v691 = vpop.f32.mrb[0].mxu0
        %v692 = vadd.f32 0.0, %v691
        %v693 = vpop.f32.mrb[0].mxu0
        %v694 = vadd.f32 0.0, %v693
        %v695 = vpop.f32.mrb[0].mxu0
        %v696 = vadd.f32 0.0, %v695
        %v697 = vpop.f32.mrb[0].mxu0
        %v698 = vadd.f32 0.0, %v697
        %699 = vmatprep.mubr.bf16.mxu0 0
        %700 = vmatmul.mubr.bf16.gmra.mrb[0].mxu0 %v302
        %v701 = vpop.f32.mrb[0].mxu0
        %v702 = vadd.f32 0.0, %v701
        %v703 = vpop.f32.mrb[0].mxu0
        %v704 = vadd.f32 0.0, %v703
        %v705 = vpop.f32.mrb[0].mxu0
        %v706 = vadd.f32 0.0, %v705
        %v707 = vpop.f32.mrb[0].mxu0
        %v708 = vadd.f32 0.0, %v707
        %709 = vmatprep.mubr.bf16.mxu0 0
        %710 = vmatmul.mubr.bf16.gmra.mrb[0].mxu0 %v303
        %v711 = vpop.f32.mrb[0].mxu0
        %v712 = vadd.f32 0.0, %v711
        %v713 = vpop.f32.mrb[0].mxu0
        %v714 = vadd.f32 0.0, %v713
        %v715 = vpop.f32.mrb[0].mxu0
        %v716 = vadd.f32 0.0, %v715
        %v717 = vpop.f32.mrb[0].mxu0
        %v718 = vadd.f32 0.0, %v717
        %719 = vmatprep.mubr.bf16.mxu0 0
        %720 = vmatmul.mubr.bf16.gmra.mrb[0].mxu0 %v304
        %v721 = vpop.f32.mrb[0].mxu0
        %v722 = vadd.f32 0.0, %v721
        %v723 = vpop.f32.mrb[0].mxu0
        %v724 = vadd.f32 0.0, %v723
        %v725 = vpop.f32.mrb[0].mxu0
        %v726 = vadd.f32 0.0, %v725
        %v727 = vpop.f32.mrb[0].mxu0
        %v728 = vadd.f32 0.0, %v727
        %729 = vmatprep.mubr.bf16.mxu0 0
        %730 = vmatmul.mubr.bf16.gmra.mrb[0].mxu0 %v305
        %v731 = vpop.f32.mrb[0].mxu0
        %v732 = vadd.f32 0.0, %v731
        %v733 = vpop.f32.mrb[0].mxu0
        %v734 = vadd.f32 0.0, %v733
        %v735 = vpop.f32.mrb[0].mxu0
        %v736 = vadd.f32 0.0, %v735
        %v737 = vpop.f32.mrb[0].mxu0
        %v738 = vadd.f32 0.0, %v737
        %739 = vmatprep.mubr.bf16.mxu0 0
        %740 = vmatmul.mubr.bf16.gmra.mrb[0].mxu0 %v306
        %v741 = vpop.f32.mrb[0].mxu0
        %v742 = vadd.f32 0.0, %v741
        %v743 = vpop.f32.mrb[0].mxu0
        %v744 = vadd.f32 0.0, %v743
        %v745 = vpop.f32.mrb[0].mxu0
        %v746 = vadd.f32 0.0, %v745
        %v747 = vpop.f32.mrb[0].mxu0
        %v748 = vadd.f32 0.0, %v747
        %749 = vmatprep.mubr.bf16.mxu0 0
        %750 = vmatmul.mubr.bf16.gmra.mrb[0].mxu0 %v307
        %v751 = vpop.f32.mrb[0].mxu0
        %v752 = vadd.f32 0.0, %v751
        %v753 = vpop.f32.mrb[0].mxu0
        %v754 = vadd.f32 0.0, %v753
        %v755 = vpop.f32.mrb[0].mxu0
        %v756 = vadd.f32 0.0, %v755
        %v757 = vpop.f32.mrb[0].mxu0
        %v758 = vadd.f32 0.0, %v757
        %759 = vmatprep.mubr.bf16.mxu0 0
        %760 = vmatmul.mubr.bf16.gmra.mrb[0].mxu0 %v308
        %v761 = vpop.f32.mrb[0].mxu0
        %v762 = vadd.f32 0.0, %v761
        %v763 = vpop.f32.mrb[0].mxu0
        %v764 = vadd.f32 0.0, %v763
        %v765 = vpop.f32.mrb[0].mxu0
        %v766 = vadd.f32 0.0, %v765
        %v767 = vpop.f32.mrb[0].mxu0
        %v768 = vadd.f32 0.0, %v767
        %769 = vmatprep.mubr.bf16.mxu0 0
        %770 = vmatmul.mubr.bf16.gmra.mrb[0].mxu0 %v309
        %v771 = vpop.f32.mrb[0].mxu0
        %v772 = vadd.f32 0.0, %v771
        %v773 = vpop.f32.mrb[0].mxu0
        %v774 = vadd.f32 0.0, %v773
        %v775 = vpop.f32.mrb[0].mxu0
        %v776 = vadd.f32 0.0, %v775
        %v777 = vpop.f32.mrb[0].mxu0
        %v778 = vadd.f32 0.0, %v777
        %779 = vmatprep.mubr.bf16.mxu0 0
        %780 = vmatmul.mubr.bf16.gmra.mrb[0].mxu0 %v310
        %v781 = vpop.f32.mrb[0].mxu0
        %v782 = vadd.f32 0.0, %v781
        %v783 = vpop.f32.mrb[0].mxu0
        %v784 = vadd.f32 0.0, %v783
        %v785 = vpop.f32.mrb[0].mxu0
        %v786 = vadd.f32 0.0, %v785
        %v787 = vpop.f32.mrb[0].mxu0
        %v788 = vadd.f32 0.0, %v787
        %789 = vmatprep.mubr.bf16.mxu0 0
        %790 = vmatmul.mubr.bf16.gmra.mrb[0].mxu0 %v311
        %v791 = vpop.f32.mrb[0].mxu0
        %v792 = vadd.f32 0.0, %v791
        %v793 = vpop.f32.mrb[0].mxu0
        %v794 = vadd.f32 0.0, %v793
        %v795 = vpop.f32.mrb[0].mxu0
        %v796 = vadd.f32 0.0, %v795
        %v797 = vpop.f32.mrb[0].mxu0
        %v798 = vadd.f32 0.0, %v797
        %799 = vmatprep.mubr.bf16.mxu0 0
        %800 = vmatmul.mubr.bf16.gmra.mrb[0].mxu0 %v312
        %v801 = vpop.f32.mrb[0].mxu0
        %v802 = vadd.f32 0.0, %v801
        %v803 = vpop.f32.mrb[0].mxu0
        %v804 = vadd.f32 0.0, %v803
        %v805 = vpop.f32.mrb[0].mxu0
        %v806 = vpop.f32.mrb[0].mxu0
        %807 = vdwg.mxu0
        %v808 = vmax.f32 %v521, %v523
        %v809 = vmax.f32 %v525, %v527
        %v810 = vmax.f32 %v531, %v533
        %v811 = vmax.f32 %v535, %v537
        %v812 = vmax.f32 %v541, %v543
        %v813 = vmax.f32 %v545, %v547
        %v814 = vmax.f32 %v551, %v553
        %v815 = vmax.f32 %v555, %v557
        %v816 = vmax.f32 %v561, %v563
        %v817 = vmax.f32 %v565, %v567
        %v818 = vmax.f32 %v571, %v573
        %v819 = vmax.f32 %v575, %v577
        %v820 = vmax.f32 %v581, %v583
        %v821 = vmax.f32 %v585, %v587
        %v822 = vmax.f32 %v591, %v593
        %v823 = vmax.f32 %v595, %v597
        %v824 = vmax.f32 %v601, %v603
        %v825 = vmax.f32 %v605, %v607
        %v826 = vmax.f32 %v611, %v613
        %v827 = vmax.f32 %v615, %v617
        %v828 = vmax.f32 %v621, %v623
        %v829 = vmax.f32 %v625, %v627
        %v830 = vmax.f32 %v631, %v633
        %v831 = vmax.f32 %v635, %v637
        %v832 = vmax.f32 %v641, %v643
        %v833 = vmax.f32 %v682, %v684
        %v834 = vmax.f32 %v686, %v688
        %v835 = vmax.f32 %v692, %v694
        %v836 = vmax.f32 %v696, %v698
        %v837 = vmax.f32 %v702, %v704
        %v838 = vmax.f32 %v706, %v708
        %v839 = vmax.f32 %v712, %v714
        %v840 = vmax.f32 %v716, %v718
        %v841 = vmax.f32 %v722, %v724
        %v842 = vmax.f32 %v726, %v728
        %v843 = vmax.f32 %v732, %v734
        %v844 = vmax.f32 %v736, %v738
        %v845 = vmax.f32 %v742, %v744
        %v846 = vmax.f32 %v746, %v748
        %v847 = vmax.f32 %v752, %v754
        %v848 = vmax.f32 %v756, %v758
        %v849 = vmax.f32 %v762, %v764
        %v850 = vmax.f32 %v766, %v768
        %v851 = vmax.f32 %v772, %v774
        %v852 = vmax.f32 %v776, %v778
        %v853 = vmax.f32 %v782, %v784
        %v854 = vmax.f32 %v786, %v788
        %v855 = vmax.f32 %v792, %v794
        %v856 = vmax.f32 %v796, %v798
        %v857 = vmax.f32 %v802, %v804
        %v858 = vmax.f32 %v808, %v833
        %v859 = vmax.f32 %v809, %v834
        %v860 = vmax.f32 %v810, %v835
        %v861 = vmax.f32 %v811, %v836
        %v862 = vmax.f32 %v812, %v837
        %v863 = vmax.f32 %v813, %v838
        %v864 = vmax.f32 %v814, %v839
        %v865 = vmax.f32 %v815, %v840
        %v866 = vmax.f32 %v816, %v841
        %v867 = vmax.f32 %v817, %v842
        %v868 = vmax.f32 %v818, %v843
        %v869 = vmax.f32 %v819, %v844
        %v870 = vmax.f32 %v820, %v845
        %v871 = vmax.f32 %v821, %v846
        %v872 = vmax.f32 %v822, %v847
        %v873 = vmax.f32 %v823, %v848
        %v874 = vmax.f32 %v824, %v849
        %v875 = vmax.f32 %v825, %v850
        %v876 = vmax.f32 %v826, %v851
        %v877 = vmax.f32 %v827, %v852
        %v878 = vmax.f32 %v828, %v853
        %v879 = vmax.f32 %v829, %v854
        %v880 = vmax.f32 %v830, %v855
        %v881 = vmax.f32 %v831, %v856
        %v882 = vmax.f32 %v832, %v857
        %v883 = vld [vmem:[%s2] sm:$0x1]
        %v885 = vlaneseq
        %v886 = vshrl.u32 %v885, 7
        %v887 = vsub.s32 0, %v886
        %v888 = vrot.slane %v883, %v887
        %v890 = vadd.f32 %v858, %v888
        %v891 = vadd.f32 %v859, %v888
        %v892 = vadd.f32 %v860, %v888
        %v893 = vadd.f32 %v861, %v888
        %v894 = vadd.f32 %v862, %v888
        %v895 = vadd.f32 %v863, %v888
        %v896 = vadd.f32 %v864, %v888
        %v897 = vadd.f32 %v865, %v888
        %v898 = vadd.f32 %v866, %v888
        %v899 = vadd.f32 %v867, %v888
        %v900 = vadd.f32 %v868, %v888
        %v901 = vadd.f32 %v869, %v888
        %v902 = vadd.f32 %v870, %v888
        %v903 = vadd.f32 %v871, %v888
        %v904 = vadd.f32 %v872, %v888
        %v905 = vadd.f32 %v873, %v888
        %v906 = vadd.f32 %v874, %v888
        %v907 = vadd.f32 %v875, %v888
        %v908 = vadd.f32 %v876, %v888
        %v909 = vadd.f32 %v877, %v888
        %v910 = vadd.f32 %v878, %v888
        %v911 = vadd.f32 %v879, %v888
        %v912 = vadd.f32 %v880, %v888
        %v913 = vadd.f32 %v881, %v888
        %v914 = vadd.f32 %v882, %v888
        %v915 = vmax.f32 %v890, 0.0
        %v916 = vmax.f32 %v891, 0.0
        %v917 = vmax.f32 %v892, 0.0
        %v918 = vmax.f32 %v893, 0.0
        %v919 = vmax.f32 %v894, 0.0
        %v920 = vmax.f32 %v895, 0.0
        %v921 = vmax.f32 %v896, 0.0
        %v922 = vmax.f32 %v897, 0.0
        %v923 = vmax.f32 %v898, 0.0
        %v924 = vmax.f32 %v899, 0.0
        %v925 = vmax.f32 %v900, 0.0
        %v926 = vmax.f32 %v901, 0.0
        %v927 = vmax.f32 %v902, 0.0
        %v928 = vmax.f32 %v903, 0.0
        %v929 = vmax.f32 %v904, 0.0
        %v930 = vmax.f32 %v905, 0.0
        %v931 = vmax.f32 %v906, 0.0
        %v932 = vmax.f32 %v907, 0.0
        %v933 = vmax.f32 %v908, 0.0
        %v934 = vmax.f32 %v909, 0.0
        %v935 = vmax.f32 %v910, 0.0
        %v936 = vmax.f32 %v911, 0.0
        %v937 = vmax.f32 %v912, 0.0
        %v938 = vmax.f32 %v913, 0.0
        %v939 = vmax.f32 %v914, 0.0
        %v940 = vpack.c.bf16 %v916, %v915
        %v941 = vpack.c.bf16 %v918, %v917
        %v942 = vpack.c.bf16 %v920, %v919
        %v943 = vpack.c.bf16 %v922, %v921
        %v944 = vpack.c.bf16 %v924, %v923
        %v945 = vpack.c.bf16 %v926, %v925
        %v946 = vpack.c.bf16 %v928, %v927
        %v947 = vpack.c.bf16 %v930, %v929
        %v948 = vpack.c.bf16 %v932, %v931
        %v949 = vpack.c.bf16 %v934, %v933
        %v950 = vpack.c.bf16 %v936, %v935
        %v951 = vpack.c.bf16 %v938, %v937
        %v952 = vpack.c.bf16 %v939, %v939
        %v966 = vunpack.c.l.b16 %v940
        %v967 = vunpack.c.h.b16 %v940
        %v968 = vunpack.c.l.b16 %v941
        %v969 = vunpack.c.h.b16 %v941
        %v970 = vunpack.c.l.b16 %v942
        %v971 = vunpack.c.h.b16 %v942
        %v972 = vunpack.c.l.b16 %v943
        %v973 = vunpack.c.h.b16 %v943
        %v974 = vunpack.c.l.b16 %v944
        %v975 = vunpack.c.h.b16 %v944
        %v976 = vunpack.c.l.b16 %v945
        %v977 = vunpack.c.h.b16 %v945
        %v978 = vunpack.c.l.b16 %v946
        %v979 = vunpack.c.h.b16 %v946
        %v980 = vunpack.c.l.b16 %v947
        %v981 = vunpack.c.h.b16 %v947
        %v982 = vunpack.c.l.b16 %v948
        %v983 = vunpack.c.h.b16 %v948
        %v984 = vunpack.c.l.b16 %v949
        %v985 = vunpack.c.h.b16 %v949
        %v986 = vunpack.c.l.b16 %v950
        %v987 = vunpack.c.h.b16 %v950
        %v988 = vunpack.c.l.b16 %v951
        %v989 = vunpack.c.h.b16 %v951
        %v990 = vunpack.c.l.b16 %v952
        %v991 = vpack.c.b16 %v966, %v966
        %v992 = vpack.c.b16 %v967, %v967
        %v993 = vpack.c.b16 %v968, %v968
        %v994 = vpack.c.b16 %v969, %v969
        %v995 = vpack.c.b16 %v970, %v970
        %v996 = vpack.c.b16 %v971, %v971
        %v997 = vpack.c.b16 %v972, %v972
        %v998 = vpack.c.b16 %v973, %v973
        %v999 = vpack.c.b16 %v974, %v974
        %v1000 = vpack.c.b16 %v975, %v975
        %v1001 = vpack.c.b16 %v976, %v976
        %v1002 = vpack.c.b16 %v977, %v977
        %v1003 = vpack.c.b16 %v978, %v978
        %v1004 = vpack.c.b16 %v979, %v979
        %v1005 = vpack.c.b16 %v980, %v980
        %v1006 = vpack.c.b16 %v981, %v981
        %v1007 = vpack.c.b16 %v982, %v982
        %v1008 = vpack.c.b16 %v983, %v983
        %v1009 = vpack.c.b16 %v984, %v984
        %v1010 = vpack.c.b16 %v985, %v985
        %v1011 = vpack.c.b16 %v986, %v986
        %v1012 = vpack.c.b16 %v987, %v987
        %v1013 = vpack.c.b16 %v988, %v988
        %v1014 = vpack.c.b16 %v989, %v989
        %v1015 = vpack.c.b16 %v990, %v990
        %1041 = vst [vmem:[%s172] sm:$0xf] %v991
        %1042 = vst [vmem:[%s172 + $0x4] sm:$0xf] %v992
        %1043 = vst [vmem:[%s172 + $0x8] sm:$0xf] %v993
        %1044 = vst [vmem:[%s172 + $0xc] sm:$0xf] %v994
        %1045 = vst [vmem:[%s172 + $0x10] sm:$0xf] %v995
        %1046 = vst [vmem:[%s172 + $0x14] sm:$0xf] %v996
        %1047 = vst [vmem:[%s172 + $0x18] sm:$0xf] %v997
        %1048 = vst [vmem:[%s172 + $0x1c] sm:$0xf] %v998
        %1049 = vst [vmem:[%s172 + $0x20] sm:$0xf] %v999
        %1050 = vst [vmem:[%s172 + $0x24] sm:$0xf] %v1000
        %1051 = vst [vmem:[%s172 + $0x28] sm:$0xf] %v1001
        %1052 = vst [vmem:[%s172 + $0x2c] sm:$0xf] %v1002
        %1053 = vst [vmem:[%s172 + $0x30] sm:$0xf] %v1003
        %1054 = vst [vmem:[%s172 + $0x34] sm:$0xf] %v1004
        %1055 = vst [vmem:[%s172 + $0x38] sm:$0xf] %v1005
        %1056 = vst [vmem:[%s172 + $0x3c] sm:$0xf] %v1006
        %1057 = vst [vmem:[%s172 + $0x40] sm:$0xf] %v1007
        %1058 = vst [vmem:[%s172 + $0x44] sm:$0xf] %v1008
        %1059 = vst [vmem:[%s172 + $0x48] sm:$0xf] %v1009
        %1060 = vst [vmem:[%s172 + $0x4c] sm:$0xf] %v1010
        %1061 = vst [vmem:[%s172 + $0x50] sm:$0xf] %v1011
        %1062 = vst [vmem:[%s172 + $0x54] sm:$0xf] %v1012
        %1063 = vst [vmem:[%s172 + $0x58] sm:$0xf] %v1013
        %1064 = vst [vmem:[%s172 + $0x5c] sm:$0xf] %v1014
        %1065 = vst [vmem:[%s172 + $0x60] sm:$0xf] %v1015
        %s1066 = sand.u32 %s90, 1
        %s1067 = sand.u32 %s90, 1
        %s1068 = smul.addr %s1067, 100
        %s1069 = scalar_lea.vmem [#allocation2], %s1068
        // Predicated region
        $region33: #{net_forward.3} parent=31 // pred_check
          %p1070 = pneg %p100
        $region34: #{net_forward.3} parent=31 // pred_check_branch
          %1072 = sbr.rel (%p1070) target = $region36
        $region35: #{net_forward.3} parent=31 // pred_region
          %s1073 = smul.u32 25, %s14
          %s1074 = ssub.s32 49, %s1073
          %p1075 = scmp.lt.s32.totalorder %s1074, 25
          %s1076 = scalar_select %p1075, %s1074, 25
          %s1077 = smul.u32 64, %s1076
          %p1078 = scmp.ne.s32.totalorder 0, %s1077
          %s1079 = smul.addr %s1073, 4
          %s1080 = scalar_lea.vmem %s3, %s1079
          // Predicated region
          $region37: #{net_forward.3} parent=35 // pred_check
            %p1081 = pneg %p1078
          $region38: #{net_forward.3} parent=35 // pred_check_branch
            %1083 = sbr.rel (%p1081) target = $region40
          $region39: #{net_forward.3} parent=35 // pred_region
            // Predicated region
            $region41: #{net_forward.3} parent=39 // pred_check
              _
            $region42: #{net_forward.3} parent=39 // pred_check_branch
              %1085 = sbr.rel target = $region44
            $region43: #{net_forward.3} parent=39 // pred_region
              // Predicated region
              $region63: #{net_forward.3} parent=43 // pred_check
                _
              $region64: #{net_forward.3} parent=43 // pred_check_branch
                %1183 = sbr.rel (0) target = $region66
              $region65: #{net_forward.3} parent=43 // pred_region
                %s1185 = sdiv.u32.pop %s1076, 25
                %s1186 = srem.u32.pop %s1076, 25
                // While loop
                $region67: #{net_forward.3} parent=65 // loop_pre_header
                  _
                $region68: #{net_forward.3} parent=65 // loop_header
                  %s1188 = sphi 0, %s1190
                  %p1189 = scmp.ge.s32.totalorder %s1188, %s1185
                  %s1193 = sphi 0, %s1248
                  %s1194 = sphi %s1069, %s1251
                  %s1195 = sphi %s1080, %s1252
                $region69: #{net_forward.3} parent=65 // loop_header_branch
                  %1192 = sbr.rel (%p1189) target = $region73
                $region70: #{net_forward.3} parent=65 // loop_body
                  %v1196 = vld [vmem:[%s1194] sm:$0xf]
                  %1197 = vst [vmem:[%s1195] sm:$0xf] %v1196
                  %v1198 = vld [vmem:[%s1194 + $0x4] sm:$0xf]
                  %1199 = vst [vmem:[%s1195 + $0x4] sm:$0xf] %v1198
                  %v1200 = vld [vmem:[%s1194 + $0x8] sm:$0xf]
                  %1201 = vst [vmem:[%s1195 + $0x8] sm:$0xf] %v1200
                  %v1202 = vld [vmem:[%s1194 + $0xc] sm:$0xf]
                  %1203 = vst [vmem:[%s1195 + $0xc] sm:$0xf] %v1202
                  %v1204 = vld [vmem:[%s1194 + $0x10] sm:$0xf]
                  %1205 = vst [vmem:[%s1195 + $0x10] sm:$0xf] %v1204
                  %v1206 = vld [vmem:[%s1194 + $0x14] sm:$0xf]
                  %1207 = vst [vmem:[%s1195 + $0x14] sm:$0xf] %v1206
                  %v1208 = vld [vmem:[%s1194 + $0x18] sm:$0xf]
                  %1209 = vst [vmem:[%s1195 + $0x18] sm:$0xf] %v1208
                  %v1210 = vld [vmem:[%s1194 + $0x1c] sm:$0xf]
                  %1211 = vst [vmem:[%s1195 + $0x1c] sm:$0xf] %v1210
                  %v1212 = vld [vmem:[%s1194 + $0x20] sm:$0xf]
                  %1213 = vst [vmem:[%s1195 + $0x20] sm:$0xf] %v1212
                  %v1214 = vld [vmem:[%s1194 + $0x24] sm:$0xf]
                  %1215 = vst [vmem:[%s1195 + $0x24] sm:$0xf] %v1214
                  %v1216 = vld [vmem:[%s1194 + $0x28] sm:$0xf]
                  %1217 = vst [vmem:[%s1195 + $0x28] sm:$0xf] %v1216
                  %v1218 = vld [vmem:[%s1194 + $0x2c] sm:$0xf]
                  %1219 = vst [vmem:[%s1195 + $0x2c] sm:$0xf] %v1218
                  %v1220 = vld [vmem:[%s1194 + $0x30] sm:$0xf]
                  %1221 = vst [vmem:[%s1195 + $0x30] sm:$0xf] %v1220
                  %v1222 = vld [vmem:[%s1194 + $0x34] sm:$0xf]
                  %1223 = vst [vmem:[%s1195 + $0x34] sm:$0xf] %v1222
                  %v1224 = vld [vmem:[%s1194 + $0x38] sm:$0xf]
                  %1225 = vst [vmem:[%s1195 + $0x38] sm:$0xf] %v1224
                  %v1226 = vld [vmem:[%s1194 + $0x3c] sm:$0xf]
                  %1227 = vst [vmem:[%s1195 + $0x3c] sm:$0xf] %v1226
                  %v1228 = vld [vmem:[%s1194 + $0x40] sm:$0xf]
                  %1229 = vst [vmem:[%s1195 + $0x40] sm:$0xf] %v1228
                  %v1230 = vld [vmem:[%s1194 + $0x44] sm:$0xf]
                  %1231 = vst [vmem:[%s1195 + $0x44] sm:$0xf] %v1230
                  %v1232 = vld [vmem:[%s1194 + $0x48] sm:$0xf]
                  %1233 = vst [vmem:[%s1195 + $0x48] sm:$0xf] %v1232
                  %v1234 = vld [vmem:[%s1194 + $0x4c] sm:$0xf]
                  %1235 = vst [vmem:[%s1195 + $0x4c] sm:$0xf] %v1234
                  %v1236 = vld [vmem:[%s1194 + $0x50] sm:$0xf]
                  %1237 = vst [vmem:[%s1195 + $0x50] sm:$0xf] %v1236
                  %v1238 = vld [vmem:[%s1194 + $0x54] sm:$0xf]
                  %1239 = vst [vmem:[%s1195 + $0x54] sm:$0xf] %v1238
                  %v1240 = vld [vmem:[%s1194 + $0x58] sm:$0xf]
                  %1241 = vst [vmem:[%s1195 + $0x58] sm:$0xf] %v1240
                  %v1242 = vld [vmem:[%s1194 + $0x5c] sm:$0xf]
                  %1243 = vst [vmem:[%s1195 + $0x5c] sm:$0xf] %v1242
                  %v1244 = vld [vmem:[%s1194 + $0x60] sm:$0xf]
                  %1245 = vst [vmem:[%s1195 + $0x60] sm:$0xf] %v1244
                  %s1246 = sadd.s32 1, %s1193
                  %p1247 = scmp.ge.s32.totalorder %s1246, %s1185
                  %s1248 = scalar_select %p1247, 0, %s1246
                  %s1249 = smul.u32 %s1248, 100
                  %s1250 = smul.u32 %s1248, 100
                  %s1251 = scalar_lea.vmem %s1069, %s1249 [#allocation2]
                  %s1252 = scalar_lea.vmem %s1080, %s1250
                $region71: #{net_forward.3} parent=65 // loop_footer
                  %s1190 = sadd.s32 %s1188, 1
                $region72: #{net_forward.3} parent=65 // loop_footer_branch
                  %1187 = sbr.rel target = $region68
                $region73: #{net_forward.3} parent=65 // loop_exit
                  _
                %s1253 = sdiv.u32.pop %s1076, 25
                %s1254 = srem.u32.pop %s1076, 25
                %s1255 = smul.u32 %s1253, 25
                %s1256 = smul.u32 4, %s1255
                %s1257 = scalar_lea.vmem %s1069, %s1256 [#allocation2]
                %s1258 = smul.u32 4, %s1255
                %s1259 = scalar_lea.vmem %s1080, %s1258
                // While loop
                $region74: #{net_forward.3} parent=65 // loop_pre_header
                  _
                $region75: #{net_forward.3} parent=65 // loop_header
                  %s1261 = sphi 0, %s1263
                  %p1262 = scmp.ge.s32.totalorder %s1261, %s1254
                  %s1266 = sphi 0, %s1273
                  %s1267 = sphi %s1257, %s1276
                  %s1268 = sphi %s1259, %s1277
                $region76: #{net_forward.3} parent=65 // loop_header_branch
                  %1265 = sbr.rel (%p1262) target = $region80
                $region77: #{net_forward.3} parent=65 // loop_body
                  %v1269 = vld [vmem:[%s1267] sm:$0xf]
                  %1270 = vst [vmem:[%s1268] sm:$0xf] %v1269
                  %s1271 = sadd.s32 1, %s1266
                  %p1272 = scmp.ge.s32.totalorder %s1271, %s1254
                  %s1273 = scalar_select %p1272, 0, %s1271
                  %s1274 = smul.u32 %s1273, 4
                  %s1275 = smul.u32 %s1273, 4
                  %s1276 = scalar_lea.vmem %s1257, %s1274 [#allocation2]
                  %s1277 = scalar_lea.vmem %s1259, %s1275
                $region78: #{net_forward.3} parent=65 // loop_footer
                  %s1263 = sadd.s32 %s1261, 1
                $region79: #{net_forward.3} parent=65 // loop_footer_branch
                  %1260 = sbr.rel target = $region75
                $region80: #{net_forward.3} parent=65 // loop_exit
                  _
              $region66: #{net_forward.3} parent=43 // pred_fallthru
                _
            $region44: #{net_forward.3} parent=39 // pred_fallthru
              _
            // Predicated region
            $region45: #{net_forward.3} parent=39 // pred_check
              _
            $region46: #{net_forward.3} parent=39 // pred_check_branch
              %1087 = sbr.rel (0) target = $region48
            $region47: #{net_forward.3} parent=39 // pred_region
              %s1089 = sdiv.u32.pop %s1076, 25
              %s1090 = srem.u32.pop %s1076, 25
              // While loop
              $region49: #{net_forward.3} parent=47 // loop_pre_header
                _
              $region50: #{net_forward.3} parent=47 // loop_header
                %s1092 = sphi 0, %s1094
                %p1093 = scmp.ge.s32.totalorder %s1092, %s1089
                %s1097 = sphi 0, %s1152
                %s1098 = sphi %s1069, %s1155
                %s1099 = sphi %s1080, %s1156
              $region51: #{net_forward.3} parent=47 // loop_header_branch
                %1096 = sbr.rel (%p1093) target = $region55
              $region52: #{net_forward.3} parent=47 // loop_body
                %v1100 = vld [vmem:[%s1098] sm:$0xf]
                %1101 = vst [vmem:[%s1099] sm:$0xf] %v1100
                %v1102 = vld [vmem:[%s1098 + $0x4] sm:$0xf]
                %1103 = vst [vmem:[%s1099 + $0x4] sm:$0xf] %v1102
                %v1104 = vld [vmem:[%s1098 + $0x8] sm:$0xf]
                %1105 = vst [vmem:[%s1099 + $0x8] sm:$0xf] %v1104
                %v1106 = vld [vmem:[%s1098 + $0xc] sm:$0xf]
                %1107 = vst [vmem:[%s1099 + $0xc] sm:$0xf] %v1106
                %v1108 = vld [vmem:[%s1098 + $0x10] sm:$0xf]
                %1109 = vst [vmem:[%s1099 + $0x10] sm:$0xf] %v1108
                %v1110 = vld [vmem:[%s1098 + $0x14] sm:$0xf]
                %1111 = vst [vmem:[%s1099 + $0x14] sm:$0xf] %v1110
                %v1112 = vld [vmem:[%s1098 + $0x18] sm:$0xf]
                %1113 = vst [vmem:[%s1099 + $0x18] sm:$0xf] %v1112
                %v1114 = vld [vmem:[%s1098 + $0x1c] sm:$0xf]
                %1115 = vst [vmem:[%s1099 + $0x1c] sm:$0xf] %v1114
                %v1116 = vld [vmem:[%s1098 + $0x20] sm:$0xf]
                %1117 = vst [vmem:[%s1099 + $0x20] sm:$0xf] %v1116
                %v1118 = vld [vmem:[%s1098 + $0x24] sm:$0xf]
                %1119 = vst [vmem:[%s1099 + $0x24] sm:$0xf] %v1118
                %v1120 = vld [vmem:[%s1098 + $0x28] sm:$0xf]
                %1121 = vst [vmem:[%s1099 + $0x28] sm:$0xf] %v1120
                %v1122 = vld [vmem:[%s1098 + $0x2c] sm:$0xf]
                %1123 = vst [vmem:[%s1099 + $0x2c] sm:$0xf] %v1122
                %v1124 = vld [vmem:[%s1098 + $0x30] sm:$0xf]
                %1125 = vst [vmem:[%s1099 + $0x30] sm:$0xf] %v1124
                %v1126 = vld [vmem:[%s1098 + $0x34] sm:$0xf]
                %1127 = vst [vmem:[%s1099 + $0x34] sm:$0xf] %v1126
                %v1128 = vld [vmem:[%s1098 + $0x38] sm:$0xf]
                %1129 = vst [vmem:[%s1099 + $0x38] sm:$0xf] %v1128
                %v1130 = vld [vmem:[%s1098 + $0x3c] sm:$0xf]
                %1131 = vst [vmem:[%s1099 + $0x3c] sm:$0xf] %v1130
                %v1132 = vld [vmem:[%s1098 + $0x40] sm:$0xf]
                %1133 = vst [vmem:[%s1099 + $0x40] sm:$0xf] %v1132
                %v1134 = vld [vmem:[%s1098 + $0x44] sm:$0xf]
                %1135 = vst [vmem:[%s1099 + $0x44] sm:$0xf] %v1134
                %v1136 = vld [vmem:[%s1098 + $0x48] sm:$0xf]
                %1137 = vst [vmem:[%s1099 + $0x48] sm:$0xf] %v1136
                %v1138 = vld [vmem:[%s1098 + $0x4c] sm:$0xf]
                %1139 = vst [vmem:[%s1099 + $0x4c] sm:$0xf] %v1138
                %v1140 = vld [vmem:[%s1098 + $0x50] sm:$0xf]
                %1141 = vst [vmem:[%s1099 + $0x50] sm:$0xf] %v1140
                %v1142 = vld [vmem:[%s1098 + $0x54] sm:$0xf]
                %1143 = vst [vmem:[%s1099 + $0x54] sm:$0xf] %v1142
                %v1144 = vld [vmem:[%s1098 + $0x58] sm:$0xf]
                %1145 = vst [vmem:[%s1099 + $0x58] sm:$0xf] %v1144
                %v1146 = vld [vmem:[%s1098 + $0x5c] sm:$0xf]
                %1147 = vst [vmem:[%s1099 + $0x5c] sm:$0xf] %v1146
                %v1148 = vld [vmem:[%s1098 + $0x60] sm:$0xf]
                %1149 = vst [vmem:[%s1099 + $0x60] sm:$0xf] %v1148
                %s1150 = sadd.s32 1, %s1097
                %p1151 = scmp.ge.s32.totalorder %s1150, %s1089
                %s1152 = scalar_select %p1151, 0, %s1150
                %s1153 = smul.u32 %s1152, 100
                %s1154 = smul.u32 %s1152, 100
                %s1155 = scalar_lea.vmem %s1069, %s1153 [#allocation2]
                %s1156 = scalar_lea.vmem %s1080, %s1154
              $region53: #{net_forward.3} parent=47 // loop_footer
                %s1094 = sadd.s32 %s1092, 1
              $region54: #{net_forward.3} parent=47 // loop_footer_branch
                %1091 = sbr.rel target = $region50
              $region55: #{net_forward.3} parent=47 // loop_exit
                _
              %s1157 = sdiv.u32.pop %s1076, 25
              %s1158 = srem.u32.pop %s1076, 25
              %s1159 = smul.u32 %s1157, 25
              %s1160 = smul.u32 4, %s1159
              %s1161 = scalar_lea.vmem %s1069, %s1160 [#allocation2]
              %s1162 = smul.u32 4, %s1159
              %s1163 = scalar_lea.vmem %s1080, %s1162
              // While loop
              $region56: #{net_forward.3} parent=47 // loop_pre_header
                _
              $region57: #{net_forward.3} parent=47 // loop_header
                %s1165 = sphi 0, %s1167
                %p1166 = scmp.ge.s32.totalorder %s1165, %s1158
                %s1170 = sphi 0, %s1177
                %s1171 = sphi %s1161, %s1180
                %s1172 = sphi %s1163, %s1181
              $region58: #{net_forward.3} parent=47 // loop_header_branch
                %1169 = sbr.rel (%p1166) target = $region62
              $region59: #{net_forward.3} parent=47 // loop_body
                %v1173 = vld [vmem:[%s1171] sm:$0xf]
                %1174 = vst [vmem:[%s1172] sm:$0xf] %v1173
                %s1175 = sadd.s32 1, %s1170
                %p1176 = scmp.ge.s32.totalorder %s1175, %s1158
                %s1177 = scalar_select %p1176, 0, %s1175
                %s1178 = smul.u32 %s1177, 4
                %s1179 = smul.u32 %s1177, 4
                %s1180 = scalar_lea.vmem %s1161, %s1178 [#allocation2]
                %s1181 = scalar_lea.vmem %s1163, %s1179
              $region60: #{net_forward.3} parent=47 // loop_footer
                %s1167 = sadd.s32 %s1165, 1
              $region61: #{net_forward.3} parent=47 // loop_footer_branch
                %1164 = sbr.rel target = $region57
              $region62: #{net_forward.3} parent=47 // loop_exit
                _
            $region48: #{net_forward.3} parent=39 // pred_fallthru
              _
          $region40: #{net_forward.3} parent=35 // pred_fallthru
            _
          %1278 = vnop
        $region36: #{net_forward.3} parent=31 // pred_fallthru
          _
      $region32: #{net_forward.3} parent=5 // pred_fallthru
        _
      %p1279 = scmp.le.s32.totalorder 2, %s9
      // Predicated region
      $region81: #{net_forward.3} parent=5 // pred_check
        %p1280 = pneg %p1279
      $region82: #{net_forward.3} parent=5 // pred_check_branch
        %1282 = sbr.rel (%p1280) target = $region84
      $region83: #{net_forward.3} parent=5 // pred_region
        %s1283 = ssub.s32 %s9, 2
        // Predicated region
        $region85: #{net_forward.3} parent=83 // pred_check
          %p1284 = pneg %p106
        $region86: #{net_forward.3} parent=83 // pred_check_branch
          %1286 = sbr.rel (%p1284) target = $region88
        $region87: #{net_forward.3} parent=83 // pred_region
          %s1287 = sand.u32 %s91, 1
          %s1288 = sand.u32 %s91, 1
          %s1289 = smul.addr %s1288, 100
          %s1290 = scalar_lea.vmem [#allocation2], %s1289
        $region88: #{net_forward.3} parent=83 // pred_fallthru
          _
      $region84: #{net_forward.3} parent=5 // pred_fallthru
        _
    $region6: #{net_forward.3} parent=1 // loop_footer
      %s13 = sadd.s32 1, %s9
    $region7: #{net_forward.3} parent=1 // loop_footer_branch
      %8 = sbr.rel target = $region3
    $region8: #{net_forward.3} parent=1 // loop_exit
      _

// kernel: reverse.4
$region0: #{reverse.4}
  #allocation0 [shape = 's32[1]{0}', space=sflag, size = 0x4, scoped, tag = 'scoped memory for reverse.4']
  %s0 = inlined_call_operand.vmem [shape: bf16[216,6,6,6], index: 0, kind: input, shape index: {}]
  %s1 = inlined_call_operand.vmem [shape: bf16[216,6,6,6], index: 1, kind: output, shape index: {}]
  %s2 = scalar_lea.vmem %s0, 280
  %v3 = vld [vmem:[%s2] sm:$0x7]
  %v4 = vunpack.c.l.bf16 %v3
  %v5 = vunpack.c.h.bf16 %v3
  %s6 = scalar_lea.vmem %s0, 232
  %v7 = vld [vmem:[%s6] sm:$0x7]
  %v8 = vunpack.c.l.bf16 %v7
  %v9 = vunpack.c.h.bf16 %v7
  %s10 = scalar_lea.vmem %s1, 48
  %s11 = scalar_lea.vmem %s0, 184
  %v12 = vld [vmem:[%s11] sm:$0x7]
  %v13 = vunpack.c.l.bf16 %v12
  %v14 = vunpack.c.h.bf16 %v12
  %s15 = scalar_lea.vmem %s1, 96
  %s16 = scalar_lea.vmem %s0, 136
  %v17 = vld [vmem:[%s16] sm:$0x7]
  %v18 = vunpack.c.l.bf16 %v17
  %v19 = vunpack.c.h.bf16 %v17
  %s20 = scalar_lea.vmem %s1, 144
  %s21 = scalar_lea.vmem %s0, 88
  %v22 = vld [vmem:[%s21] sm:$0x7]
  %v23 = vunpack.c.l.bf16 %v22
  %v24 = vunpack.c.h.bf16 %v22
  %s25 = scalar_lea.vmem %s1, 192
  %s26 = scalar_lea.vmem %s0, 40
  %v27 = vld [vmem:[%s26] sm:$0x7]
  %v28 = vunpack.c.l.bf16 %v27
  %v29 = vunpack.c.h.bf16 %v27
  %s30 = scalar_lea.vmem %s1, 240
  %s31 = scalar_lea.vmem %s0, 272
  %v32 = vld [vmem:[%s31] sm:$0x7]
  %v33 = vunpack.c.l.bf16 %v32
  %v34 = vunpack.c.h.bf16 %v32
  %s35 = scalar_lea.vmem %s1, 8
  %s36 = scalar_lea.vmem %s0, 224
  %v37 = vld [vmem:[%s36] sm:$0x7]
  %v38 = vunpack.c.l.bf16 %v37
  %v39 = vunpack.c.h.bf16 %v37
  %s40 = scalar_lea.vmem %s1, 56
  %s41 = scalar_lea.vmem %s0, 176
  %v42 = vld [vmem:[%s41] sm:$0x7]
  %v43 = vunpack.c.l.bf16 %v42
  %v44 = vunpack.c.h.bf16 %v42
  %s45 = scalar_lea.vmem %s1, 104
  %s46 = scalar_lea.vmem %s0, 128
  %v47 = vld [vmem:[%s46] sm:$0x7]
  %v48 = vunpack.c.l.bf16 %v47
  %v49 = vunpack.c.h.bf16 %v47
  %s50 = scalar_lea.vmem %s1, 152
  %s51 = scalar_lea.vmem %s0, 80
  %v52 = vld [vmem:[%s51] sm:$0x7]
  %v53 = vunpack.c.l.bf16 %v52
  %v54 = vunpack.c.h.bf16 %v52
  %s55 = scalar_lea.vmem %s1, 200
  %s56 = scalar_lea.vmem %s0, 32
  %v57 = vld [vmem:[%s56] sm:$0x7]
  %v58 = vunpack.c.l.bf16 %v57
  %v59 = vunpack.c.h.bf16 %v57
  %s60 = scalar_lea.vmem %s1, 248
  %s61 = scalar_lea.vmem %s0, 264
  %v62 = vld [vmem:[%s61] sm:$0x7]
  %v63 = vunpack.c.l.bf16 %v62
  %v64 = vunpack.c.h.bf16 %v62
  %s65 = scalar_lea.vmem %s1, 16
  %s66 = scalar_lea.vmem %s0, 216
  %v67 = vld [vmem:[%s66] sm:$0x7]
  %v68 = vunpack.c.l.bf16 %v67
  %v69 = vunpack.c.h.bf16 %v67
  %s70 = scalar_lea.vmem %s1, 64
  %s71 = scalar_lea.vmem %s0, 168
  %v72 = vld [vmem:[%s71] sm:$0x7]
  %v73 = vunpack.c.l.bf16 %v72
  %v74 = vunpack.c.h.bf16 %v72
  %s75 = scalar_lea.vmem %s1, 112
  %s76 = scalar_lea.vmem %s0, 120
  %v77 = vld [vmem:[%s76] sm:$0x7]
  %v78 = vunpack.c.l.bf16 %v77
  %v79 = vunpack.c.h.bf16 %v77
  %s80 = scalar_lea.vmem %s1, 160
  %s81 = scalar_lea.vmem %s0, 72
  %v82 = vld [vmem:[%s81] sm:$0x7]
  %v83 = vunpack.c.l.bf16 %v82
  %v84 = vunpack.c.h.bf16 %v82
  %s85 = scalar_lea.vmem %s1, 208
  %s86 = scalar_lea.vmem %s0, 24
  %v87 = vld [vmem:[%s86] sm:$0x7]
  %v88 = vunpack.c.l.bf16 %v87
  %v89 = vunpack.c.h.bf16 %v87
  %s90 = scalar_lea.vmem %s1, 256
  %s91 = scalar_lea.vmem %s0, 256
  %v92 = vld [vmem:[%s91] sm:$0x7]
  %v93 = vunpack.c.l.bf16 %v92
  %v94 = vunpack.c.h.bf16 %v92
  %s95 = scalar_lea.vmem %s1, 24
  %s96 = scalar_lea.vmem %s0, 208
  %v97 = vld [vmem:[%s96] sm:$0x7]
  %v98 = vunpack.c.l.bf16 %v97
  %v99 = vunpack.c.h.bf16 %v97
  %s100 = scalar_lea.vmem %s1, 72
  %s101 = scalar_lea.vmem %s0, 160
  %v102 = vld [vmem:[%s101] sm:$0x7]
  %v103 = vunpack.c.l.bf16 %v102
  %v104 = vunpack.c.h.bf16 %v102
  %s105 = scalar_lea.vmem %s1, 120
  %s106 = scalar_lea.vmem %s0, 112
  %v107 = vld [vmem:[%s106] sm:$0x7]
  %v108 = vunpack.c.l.bf16 %v107
  %v109 = vunpack.c.h.bf16 %v107
  %s110 = scalar_lea.vmem %s1, 168
  %s111 = scalar_lea.vmem %s0, 64
  %v112 = vld [vmem:[%s111] sm:$0x7]
  %v113 = vunpack.c.l.bf16 %v112
  %v114 = vunpack.c.h.bf16 %v112
  %s115 = scalar_lea.vmem %s1, 216
  %s116 = scalar_lea.vmem %s0, 16
  %v117 = vld [vmem:[%s116] sm:$0x7]
  %v118 = vunpack.c.l.bf16 %v117
  %v119 = vunpack.c.h.bf16 %v117
  %s120 = scalar_lea.vmem %s1, 264
  %s121 = scalar_lea.vmem %s0, 248
  %v122 = vld [vmem:[%s121] sm:$0x7]
  %v123 = vunpack.c.l.bf16 %v122
  %v124 = vunpack.c.h.bf16 %v122
  %s125 = scalar_lea.vmem %s1, 32
  %s126 = scalar_lea.vmem %s0, 200
  %v127 = vld [vmem:[%s126] sm:$0x7]
  %v128 = vunpack.c.l.bf16 %v127
  %v129 = vunpack.c.h.bf16 %v127
  %s130 = scalar_lea.vmem %s1, 80
  %s131 = scalar_lea.vmem %s0, 152
  %v132 = vld [vmem:[%s131] sm:$0x7]
  %v133 = vunpack.c.l.bf16 %v132
  %v134 = vunpack.c.h.bf16 %v132
  %s135 = scalar_lea.vmem %s1, 128
  %s136 = scalar_lea.vmem %s0, 104
  %v137 = vld [vmem:[%s136] sm:$0x7]
  %v138 = vunpack.c.l.bf16 %v137
  %v139 = vunpack.c.h.bf16 %v137
  %s140 = scalar_lea.vmem %s1, 176
  %s141 = scalar_lea.vmem %s0, 56
  %v142 = vld [vmem:[%s141] sm:$0x7]
  %v143 = vunpack.c.l.bf16 %v142
  %v144 = vunpack.c.h.bf16 %v142
  %s145 = scalar_lea.vmem %s1, 224
  %s146 = scalar_lea.vmem %s0, 8
  %v147 = vld [vmem:[%s146] sm:$0x7]
  %v148 = vunpack.c.l.bf16 %v147
  %v149 = vunpack.c.h.bf16 %v147
  %s150 = scalar_lea.vmem %s1, 272
  %s151 = scalar_lea.vmem %s0, 240
  %v152 = vld [vmem:[%s151] sm:$0x7]
  %v153 = vunpack.c.l.bf16 %v152
  %v154 = vunpack.c.h.bf16 %v152
  %s155 = scalar_lea.vmem %s1, 40
  %s156 = scalar_lea.vmem %s0, 192
  %v157 = vld [vmem:[%s156] sm:$0x7]
  %v158 = vunpack.c.l.bf16 %v157
  %v159 = vunpack.c.h.bf16 %v157
  %s160 = scalar_lea.vmem %s1, 88
  %s161 = scalar_lea.vmem %s0, 144
  %v162 = vld [vmem:[%s161] sm:$0x7]
  %v163 = vunpack.c.l.bf16 %v162
  %v164 = vunpack.c.h.bf16 %v162
  %s165 = scalar_lea.vmem %s1, 136
  %s166 = scalar_lea.vmem %s0, 96
  %v167 = vld [vmem:[%s166] sm:$0x7]
  %v168 = vunpack.c.l.bf16 %v167
  %v169 = vunpack.c.h.bf16 %v167
  %s170 = scalar_lea.vmem %s1, 184
  %s171 = scalar_lea.vmem %s0, 48
  %v172 = vld [vmem:[%s171] sm:$0x7]
  %v173 = vunpack.c.l.bf16 %v172
  %v174 = vunpack.c.h.bf16 %v172
  %s175 = scalar_lea.vmem %s1, 232
  %v176 = vld [vmem:[%s0] sm:$0x7]
  %v177 = vunpack.c.l.bf16 %v176
  %v178 = vunpack.c.h.bf16 %v176
  %s179 = scalar_lea.vmem %s1, 280
  %s180 = scalar_lea.vmem %s0, 284
  %v181 = vld [vmem:[%s180] sm:$0x7]
  %v182 = vunpack.c.l.bf16 %v181
  %v183 = vunpack.c.h.bf16 %v181
  %s184 = scalar_lea.vmem %s1, 4
  %s186 = ssub.s32 0, 4
  %s187 = scalar_lea.vmem %s184, %s186
  %v188 = vpack.c.bf16 %v182, %v4
  %189 = vst [vmem:[%s187] sm:$0xff] %v188
  %s190 = scalar_lea.vmem %s0, 236
  %v191 = vld [vmem:[%s190] sm:$0x7]
  %v192 = vunpack.c.l.bf16 %v191
  %v193 = vunpack.c.h.bf16 %v191
  %s194 = scalar_lea.vmem %s1, 52
  %s196 = ssub.s32 0, 4
  %s197 = scalar_lea.vmem %s194, %s196
  %v198 = vpack.c.bf16 %v192, %v8
  %199 = vst [vmem:[%s197] sm:$0xff] %v198
  %s200 = scalar_lea.vmem %s0, 188
  %v201 = vld [vmem:[%s200] sm:$0x7]
  %v202 = vunpack.c.l.bf16 %v201
  %v203 = vunpack.c.h.bf16 %v201
  %s204 = scalar_lea.vmem %s1, 100
  %s206 = ssub.s32 0, 4
  %s207 = scalar_lea.vmem %s204, %s206
  %v208 = vpack.c.bf16 %v202, %v13
  %209 = vst [vmem:[%s207] sm:$0xff] %v208
  %s210 = scalar_lea.vmem %s0, 140
  %v211 = vld [vmem:[%s210] sm:$0x7]
  %v212 = vunpack.c.l.bf16 %v211
  %v213 = vunpack.c.h.bf16 %v211
  %s214 = scalar_lea.vmem %s1, 148
  %s216 = ssub.s32 0, 4
  %s217 = scalar_lea.vmem %s214, %s216
  %v218 = vpack.c.bf16 %v212, %v18
  %219 = vst [vmem:[%s217] sm:$0xff] %v218
  %s220 = scalar_lea.vmem %s0, 92
  %v221 = vld [vmem:[%s220] sm:$0x7]
  %v222 = vunpack.c.l.bf16 %v221
  %v223 = vunpack.c.h.bf16 %v221
  %s224 = scalar_lea.vmem %s1, 196
  %s226 = ssub.s32 0, 4
  %s227 = scalar_lea.vmem %s224, %s226
  %v228 = vpack.c.bf16 %v222, %v23
  %229 = vst [vmem:[%s227] sm:$0xff] %v228
  %s230 = scalar_lea.vmem %s0, 44
  %v231 = vld [vmem:[%s230] sm:$0x7]
  %v232 = vunpack.c.l.bf16 %v231
  %v233 = vunpack.c.h.bf16 %v231
  %s234 = scalar_lea.vmem %s1, 244
  %s236 = ssub.s32 0, 4
  %s237 = scalar_lea.vmem %s234, %s236
  %v238 = vpack.c.bf16 %v232, %v28
  %239 = vst [vmem:[%s237] sm:$0xff] %v238
  %s240 = scalar_lea.vmem %s0, 276
  %v241 = vld [vmem:[%s240] sm:$0x7]
  %v242 = vunpack.c.l.bf16 %v241
  %v243 = vunpack.c.h.bf16 %v241
  %s244 = scalar_lea.vmem %s1, 12
  %s246 = ssub.s32 0, 4
  %s247 = scalar_lea.vmem %s244, %s246
  %v248 = vpack.c.bf16 %v242, %v33
  %249 = vst [vmem:[%s247] sm:$0xff] %v248
  %s250 = scalar_lea.vmem %s0, 228
  %v251 = vld [vmem:[%s250] sm:$0x7]
  %v252 = vunpack.c.l.bf16 %v251
  %v253 = vunpack.c.h.bf16 %v251
  %s254 = scalar_lea.vmem %s1, 60
  %s256 = ssub.s32 0, 4
  %s257 = scalar_lea.vmem %s254, %s256
  %v258 = vpack.c.bf16 %v252, %v38
  %259 = vst [vmem:[%s257] sm:$0xff] %v258
  %s260 = scalar_lea.vmem %s0, 180
  %v261 = vld [vmem:[%s260] sm:$0x7]
  %v262 = vunpack.c.l.bf16 %v261
  %v263 = vunpack.c.h.bf16 %v261
  %s264 = scalar_lea.vmem %s1, 108
  %s266 = ssub.s32 0, 4
  %s267 = scalar_lea.vmem %s264, %s266
  %v268 = vpack.c.bf16 %v262, %v43
  %269 = vst [vmem:[%s267] sm:$0xff] %v268
  %s270 = scalar_lea.vmem %s0, 132
  %v271 = vld [vmem:[%s270] sm:$0x7]
  %v272 = vunpack.c.l.bf16 %v271
  %v273 = vunpack.c.h.bf16 %v271
  %s274 = scalar_lea.vmem %s1, 156
  %s276 = ssub.s32 0, 4
  %s277 = scalar_lea.vmem %s274, %s276
  %v278 = vpack.c.bf16 %v272, %v48
  %279 = vst [vmem:[%s277] sm:$0xff] %v278
  %s280 = scalar_lea.vmem %s0, 84
  %v281 = vld [vmem:[%s280] sm:$0x7]
  %v282 = vunpack.c.l.bf16 %v281
  %v283 = vunpack.c.h.bf16 %v281
  %s284 = scalar_lea.vmem %s1, 204
  %s286 = ssub.s32 0, 4
  %s287 = scalar_lea.vmem %s284, %s286
  %v288 = vpack.c.bf16 %v282, %v53
  %289 = vst [vmem:[%s287] sm:$0xff] %v288
  %s290 = scalar_lea.vmem %s0, 36
  %v291 = vld [vmem:[%s290] sm:$0x7]
  %v292 = vunpack.c.l.bf16 %v291
  %v293 = vunpack.c.h.bf16 %v291
  %s294 = scalar_lea.vmem %s1, 252
  %s296 = ssub.s32 0, 4
  %s297 = scalar_lea.vmem %s294, %s296
  %v298 = vpack.c.bf16 %v292, %v58
  %299 = vst [vmem:[%s297] sm:$0xff] %v298
  %s300 = scalar_lea.vmem %s0, 268
  %v301 = vld [vmem:[%s300] sm:$0x7]
  %v302 = vunpack.c.l.bf16 %v301
  %v303 = vunpack.c.h.bf16 %v301
  %s304 = scalar_lea.vmem %s1, 20
  %s306 = ssub.s32 0, 4
  %s307 = scalar_lea.vmem %s304, %s306
  %v308 = vpack.c.bf16 %v302, %v63
  %309 = vst [vmem:[%s307] sm:$0xff] %v308
  %s310 = scalar_lea.vmem %s0, 220
  %v311 = vld [vmem:[%s310] sm:$0x7]
  %v312 = vunpack.c.l.bf16 %v311
  %v313 = vunpack.c.h.bf16 %v311
  %s314 = scalar_lea.vmem %s1, 68
  %s316 = ssub.s32 0, 4
  %s317 = scalar_lea.vmem %s314, %s316
  %v318 = vpack.c.bf16 %v312, %v68
  %319 = vst [vmem:[%s317] sm:$0xff] %v318
  %s320 = scalar_lea.vmem %s0, 172
  %v321 = vld [vmem:[%s320] sm:$0x7]
  %v322 = vunpack.c.l.bf16 %v321
  %v323 = vunpack.c.h.bf16 %v321
  %s324 = scalar_lea.vmem %s1, 116
  %s326 = ssub.s32 0, 4
  %s327 = scalar_lea.vmem %s324, %s326
  %v328 = vpack.c.bf16 %v322, %v73
  %329 = vst [vmem:[%s327] sm:$0xff] %v328
  %s330 = scalar_lea.vmem %s0, 124
  %v331 = vld [vmem:[%s330] sm:$0x7]
  %v332 = vunpack.c.l.bf16 %v331
  %v333 = vunpack.c.h.bf16 %v331
  %s334 = scalar_lea.vmem %s1, 164
  %s336 = ssub.s32 0, 4
  %s337 = scalar_lea.vmem %s334, %s336
  %v338 = vpack.c.bf16 %v332, %v78
  %339 = vst [vmem:[%s337] sm:$0xff] %v338
  %s340 = scalar_lea.vmem %s0, 76
  %v341 = vld [vmem:[%s340] sm:$0x7]
  %v342 = vunpack.c.l.bf16 %v341
  %v343 = vunpack.c.h.bf16 %v341
  %s344 = scalar_lea.vmem %s1, 212
  %s346 = ssub.s32 0, 4
  %s347 = scalar_lea.vmem %s344, %s346
  %v348 = vpack.c.bf16 %v342, %v83
  %349 = vst [vmem:[%s347] sm:$0xff] %v348
  %s350 = scalar_lea.vmem %s0, 28
  %v351 = vld [vmem:[%s350] sm:$0x7]
  %v352 = vunpack.c.l.bf16 %v351
  %v353 = vunpack.c.h.bf16 %v351
  %s354 = scalar_lea.vmem %s1, 260
  %s356 = ssub.s32 0, 4
  %s357 = scalar_lea.vmem %s354, %s356
  %v358 = vpack.c.bf16 %v352, %v88
  %359 = vst [vmem:[%s357] sm:$0xff] %v358
  %s360 = scalar_lea.vmem %s0, 260
  %v361 = vld [vmem:[%s360] sm:$0x7]
  %v362 = vunpack.c.l.bf16 %v361
  %v363 = vunpack.c.h.bf16 %v361
  %s364 = scalar_lea.vmem %s1, 28
  %s366 = ssub.s32 0, 4
  %s367 = scalar_lea.vmem %s364, %s366
  %v368 = vpack.c.bf16 %v362, %v93
  %369 = vst [vmem:[%s367] sm:$0xff] %v368
  %s370 = scalar_lea.vmem %s0, 212
  %v371 = vld [vmem:[%s370] sm:$0x7]
  %v372 = vunpack.c.l.bf16 %v371
  %v373 = vunpack.c.h.bf16 %v371
  %s374 = scalar_lea.vmem %s1, 76
  %s376 = ssub.s32 0, 4
  %s377 = scalar_lea.vmem %s374, %s376
  %v378 = vpack.c.bf16 %v372, %v98
  %379 = vst [vmem:[%s377] sm:$0xff] %v378
  %s380 = scalar_lea.vmem %s0, 164
  %v381 = vld [vmem:[%s380] sm:$0x7]
  %v382 = vunpack.c.l.bf16 %v381
  %v383 = vunpack.c.h.bf16 %v381
  %s384 = scalar_lea.vmem %s1, 124
  %s386 = ssub.s32 0, 4
  %s387 = scalar_lea.vmem %s384, %s386
  %v388 = vpack.c.bf16 %v382, %v103
  %389 = vst [vmem:[%s387] sm:$0xff] %v388
  %s390 = scalar_lea.vmem %s0, 116
  %v391 = vld [vmem:[%s390] sm:$0x7]
  %v392 = vunpack.c.l.bf16 %v391
  %v393 = vunpack.c.h.bf16 %v391
  %s394 = scalar_lea.vmem %s1, 172
  %s396 = ssub.s32 0, 4
  %s397 = scalar_lea.vmem %s394, %s396
  %v398 = vpack.c.bf16 %v392, %v108
  %399 = vst [vmem:[%s397] sm:$0xff] %v398
  %s400 = scalar_lea.vmem %s0, 68
  %v401 = vld [vmem:[%s400] sm:$0x7]
  %v402 = vunpack.c.l.bf16 %v401
  %v403 = vunpack.c.h.bf16 %v401
  %s404 = scalar_lea.vmem %s1, 220
  %s406 = ssub.s32 0, 4
  %s407 = scalar_lea.vmem %s404, %s406
  %v408 = vpack.c.bf16 %v402, %v113
  %409 = vst [vmem:[%s407] sm:$0xff] %v408
  %s410 = scalar_lea.vmem %s0, 20
  %v411 = vld [vmem:[%s410] sm:$0x7]
  %v412 = vunpack.c.l.bf16 %v411
  %v413 = vunpack.c.h.bf16 %v411
  %s414 = scalar_lea.vmem %s1, 268
  %s416 = ssub.s32 0, 4
  %s417 = scalar_lea.vmem %s414, %s416
  %v418 = vpack.c.bf16 %v412, %v118
  %419 = vst [vmem:[%s417] sm:$0xff] %v418
  %s420 = scalar_lea.vmem %s0, 252
  %v421 = vld [vmem:[%s420] sm:$0x7]
  %v422 = vunpack.c.l.bf16 %v421
  %v423 = vunpack.c.h.bf16 %v421
  %s424 = scalar_lea.vmem %s1, 36
  %s426 = ssub.s32 0, 4
  %s427 = scalar_lea.vmem %s424, %s426
  %v428 = vpack.c.bf16 %v422, %v123
  %429 = vst [vmem:[%s427] sm:$0xff] %v428
  %s430 = scalar_lea.vmem %s0, 204
  %v431 = vld [vmem:[%s430] sm:$0x7]
  %v432 = vunpack.c.l.bf16 %v431
  %v433 = vunpack.c.h.bf16 %v431
  %s434 = scalar_lea.vmem %s1, 84
  %s436 = ssub.s32 0, 4
  %s437 = scalar_lea.vmem %s434, %s436
  %v438 = vpack.c.bf16 %v432, %v128
  %439 = vst [vmem:[%s437] sm:$0xff] %v438
  %s440 = scalar_lea.vmem %s0, 156
  %v441 = vld [vmem:[%s440] sm:$0x7]
  %v442 = vunpack.c.l.bf16 %v441
  %v443 = vunpack.c.h.bf16 %v441
  %s444 = scalar_lea.vmem %s1, 132
  %s446 = ssub.s32 0, 4
  %s447 = scalar_lea.vmem %s444, %s446
  %v448 = vpack.c.bf16 %v442, %v133
  %449 = vst [vmem:[%s447] sm:$0xff] %v448
  %s450 = scalar_lea.vmem %s0, 108
  %v451 = vld [vmem:[%s450] sm:$0x7]
  %v452 = vunpack.c.l.bf16 %v451
  %v453 = vunpack.c.h.bf16 %v451
  %s454 = scalar_lea.vmem %s1, 180
  %s456 = ssub.s32 0, 4
  %s457 = scalar_lea.vmem %s454, %s456
  %v458 = vpack.c.bf16 %v452, %v138
  %459 = vst [vmem:[%s457] sm:$0xff] %v458
  %s460 = scalar_lea.vmem %s0, 60
  %v461 = vld [vmem:[%s460] sm:$0x7]
  %v462 = vunpack.c.l.bf16 %v461
  %v463 = vunpack.c.h.bf16 %v461
  %s464 = scalar_lea.vmem %s1, 228
  %s466 = ssub.s32 0, 4
  %s467 = scalar_lea.vmem %s464, %s466
  %v468 = vpack.c.bf16 %v462, %v143
  %469 = vst [vmem:[%s467] sm:$0xff] %v468
  %s470 = scalar_lea.vmem %s0, 12
  %v471 = vld [vmem:[%s470] sm:$0x7]
  %v472 = vunpack.c.l.bf16 %v471
  %v473 = vunpack.c.h.bf16 %v471
  %s474 = scalar_lea.vmem %s1, 276
  %s476 = ssub.s32 0, 4
  %s477 = scalar_lea.vmem %s474, %s476
  %v478 = vpack.c.bf16 %v472, %v148
  %479 = vst [vmem:[%s477] sm:$0xff] %v478
  %s480 = scalar_lea.vmem %s0, 244
  %v481 = vld [vmem:[%s480] sm:$0x7]
  %v482 = vunpack.c.l.bf16 %v481
  %v483 = vunpack.c.h.bf16 %v481
  %s484 = scalar_lea.vmem %s1, 44
  %s486 = ssub.s32 0, 4
  %s487 = scalar_lea.vmem %s484, %s486
  %v488 = vpack.c.bf16 %v482, %v153
  %489 = vst [vmem:[%s487] sm:$0xff] %v488
  %s490 = scalar_lea.vmem %s0, 196
  %v491 = vld [vmem:[%s490] sm:$0x7]
  %v492 = vunpack.c.l.bf16 %v491
  %v493 = vunpack.c.h.bf16 %v491
  %s494 = scalar_lea.vmem %s1, 92
  %s496 = ssub.s32 0, 4
  %s497 = scalar_lea.vmem %s494, %s496
  %v498 = vpack.c.bf16 %v492, %v158
  %499 = vst [vmem:[%s497] sm:$0xff] %v498
  %s500 = scalar_lea.vmem %s0, 148
  %v501 = vld [vmem:[%s500] sm:$0x7]
  %v502 = vunpack.c.l.bf16 %v501
  %v503 = vunpack.c.h.bf16 %v501
  %s504 = scalar_lea.vmem %s1, 140
  %s506 = ssub.s32 0, 4
  %s507 = scalar_lea.vmem %s504, %s506
  %v508 = vpack.c.bf16 %v502, %v163
  %509 = vst [vmem:[%s507] sm:$0xff] %v508
  %s510 = scalar_lea.vmem %s0, 100
  %v511 = vld [vmem:[%s510] sm:$0x7]
  %v512 = vunpack.c.l.bf16 %v511
  %v513 = vunpack.c.h.bf16 %v511
  %s514 = scalar_lea.vmem %s1, 188
  %s516 = ssub.s32 0, 4
  %s517 = scalar_lea.vmem %s514, %s516
  %v518 = vpack.c.bf16 %v512, %v168
  %519 = vst [vmem:[%s517] sm:$0xff] %v518
  %s520 = scalar_lea.vmem %s0, 52
  %v521 = vld [vmem:[%s520] sm:$0x7]
  %v522 = vunpack.c.l.bf16 %v521
  %v523 = vunpack.c.h.bf16 %v521
  %s524 = scalar_lea.vmem %s1, 236
  %s526 = ssub.s32 0, 4
  %s527 = scalar_lea.vmem %s524, %s526
  %v528 = vpack.c.bf16 %v522, %v173
  %529 = vst [vmem:[%s527] sm:$0xff] %v528
  %s530 = scalar_lea.vmem %s0, 4
  %v531 = vld [vmem:[%s530] sm:$0x7]
  %v532 = vunpack.c.l.bf16 %v531
  %v533 = vunpack.c.h.bf16 %v531
  %s534 = scalar_lea.vmem %s1, 284
  %s536 = ssub.s32 0, 4
  %s537 = scalar_lea.vmem %s534, %s536
  %v538 = vpack.c.bf16 %v532, %v177
  %539 = vst [vmem:[%s537] sm:$0xff] %v538

// kernel: net_forward.4
$region0: #{net_forward.4}
  #allocation0 [shape = 'u32[]', space=smem, size = 0x4, offset = 0x4, fixed_abs, tag = 'smem constant byte address 0x4 - core index']
  #allocation1 [shape = 'u32[144,128]{1,0:T(1,128)}', space=vmem, size = 0x12000, scoped, tag = 'internal scratch']
  %s0 = inlined_call_operand.vmem [shape: bf16[50,256], index: 0, kind: input, shape index: {}]
  %s1 = inlined_call_operand.vmem [shape: bf16[256,512], index: 1, kind: input, shape index: {}]
  %s2 = inlined_call_operand.vmem [shape: f32[1,128], index: 2, kind: input, shape index: {}]
  %s3 = inlined_call_operand.vmem [shape: bf16[50,16], index: 3, kind: output, shape index: {}]
  %s4 = sld [smem:[#allocation0]]
  $region89: #{net_forward.4} parent=0
    _
  %s6 = ssub.s32 1, %s4
  %s7 = scalar_select 0, %s6, %s4
  $region1: #{net_forward.4} parent=0
    #allocation2 [shape = 'u8[16384]{0}', space=vmem, size = 0x4000, scoped, tag = 'output window, operand 0']
    loop: start=0, step=1, limit=4
    $region2: #{net_forward.4} parent=1 // loop_pre_header
      _
    $region3: #{net_forward.4} parent=1 // loop_header
      %s9 = sphi 0, %s13
      %p10 = scmp.ge.s32.totalorder %s9, 4
      %s19 = sphi 0, %s21
      %s22 = sphi 0, %s19
      %s23 = sphi 0, %s22
      %s39 = sphi 0, %s23
      %s43 = sphi 0, %s43
      %s45 = sphi 0, %s43
      %s46 = sphi 0, %s45
      %s60 = sphi 0, %s46
      %s64 = sphi 0, %s64
      %s66 = sphi 0, %s64
      %s67 = sphi 0, %s66
      %s81 = sphi 0, %s67
      %s87 = sphi 0, %s89
      %s90 = sphi 0, %s87
      %s91 = sphi 0, %s90
      %s107 = sphi 0, %s91
    $region4: #{net_forward.4} parent=1 // loop_header_branch
      %12 = sbr.rel (%p10) target = $region8
    $region5: #{net_forward.4} parent=1 // loop_body
      %s14 = ssub.s32 %s9, 1
      %s15 = ssub.s32 %s9, 2
      %s16 = sadd.s32 %s9, 1
      %s17 = ssub.s32 %s9, %s16
      %p18 = scmp.eq.s32.totalorder %s17, 0
      %s20 = sadd.s32 %s19, 1
      %s21 = scalar_select %p18, %s19, %s20
      %p24 = pneg %p18
      %p25 = scmp.eq.s32.totalorder %s9, 1
      %p26 = por %p24, %p25
      %p27 = scmp.ne.s32.totalorder %s19, %s22
      %p28 = scmp.eq.s32.totalorder %s9, 0
      %p29 = por %p27, %p28
      %p30 = scmp.ne.s32.totalorder %s19, %s22
      %p31 = scmp.eq.s32.totalorder %s14, 1
      %p32 = por %p30, %p31
      %p33 = scmp.ne.s32.totalorder %s22, %s23
      %p34 = scmp.eq.s32.totalorder %s14, 0
      %p35 = por %p33, %p34
      %p36 = scmp.ne.s32.totalorder %s22, %s23
      %p37 = scmp.eq.s32.totalorder %s15, 1
      %p38 = por %p36, %p37
      %p40 = scmp.ne.s32.totalorder %s23, %s39
      %p41 = scmp.eq.s32.totalorder %s15, 0
      %p42 = por %p40, %p41
      %s44 = sadd.s32 %s43, 1
      %p47 = scmp.eq.s32.totalorder %s9, 1
      %p48 = scmp.ne.s32.totalorder %s43, %s45
      %p49 = scmp.eq.s32.totalorder %s9, 0
      %p50 = por %p48, %p49
      %p51 = scmp.ne.s32.totalorder %s43, %s45
      %p52 = scmp.eq.s32.totalorder %s14, 1
      %p53 = por %p51, %p52
      %p54 = scmp.ne.s32.totalorder %s45, %s46
      %p55 = scmp.eq.s32.totalorder %s14, 0
      %p56 = por %p54, %p55
      %p57 = scmp.ne.s32.totalorder %s45, %s46
      %p58 = scmp.eq.s32.totalorder %s15, 1
      %p59 = por %p57, %p58
      %p61 = scmp.ne.s32.totalorder %s46, %s60
      %p62 = scmp.eq.s32.totalorder %s15, 0
      %p63 = por %p61, %p62
      %s65 = sadd.s32 %s64, 1
      %p68 = scmp.eq.s32.totalorder %s9, 1
      %p69 = scmp.ne.s32.totalorder %s64, %s66
      %p70 = scmp.eq.s32.totalorder %s9, 0
      %p71 = por %p69, %p70
      %p72 = scmp.ne.s32.totalorder %s64, %s66
      %p73 = scmp.eq.s32.totalorder %s14, 1
      %p74 = por %p72, %p73
      %p75 = scmp.ne.s32.totalorder %s66, %s67
      %p76 = scmp.eq.s32.totalorder %s14, 0
      %p77 = por %p75, %p76
      %p78 = scmp.ne.s32.totalorder %s66, %s67
      %p79 = scmp.eq.s32.totalorder %s15, 1
      %p80 = por %p78, %p79
      %p82 = scmp.ne.s32.totalorder %s67, %s81
      %p83 = scmp.eq.s32.totalorder %s15, 0
      %p84 = por %p82, %p83
      %s85 = ssub.s32 %s9, %s16
      %p86 = scmp.eq.s32.totalorder %s85, 0
      %s88 = sadd.s32 %s87, 1
      %s89 = scalar_select %p86, %s87, %s88
      %p92 = pneg %p86
      %p93 = scmp.eq.s32.totalorder %s9, 1
      %p94 = por %p92, %p93
      %p95 = scmp.ne.s32.totalorder %s87, %s90
      %p96 = scmp.eq.s32.totalorder %s9, 0
      %p97 = por %p95, %p96
      %p98 = scmp.ne.s32.totalorder %s87, %s90
      %p99 = scmp.eq.s32.totalorder %s14, 1
      %p100 = por %p98, %p99
      %p101 = scmp.ne.s32.totalorder %s90, %s91
      %p102 = scmp.eq.s32.totalorder %s14, 0
      %p103 = por %p101, %p102
      %p104 = scmp.ne.s32.totalorder %s90, %s91
      %p105 = scmp.eq.s32.totalorder %s15, 1
      %p106 = por %p104, %p105
      %p108 = scmp.ne.s32.totalorder %s91, %s107
      %p109 = scmp.eq.s32.totalorder %s15, 0
      %p110 = por %p108, %p109
      %p111 = scmp.le.s32.totalorder 1, %s9
      %p112 = scmp.lt.s32.totalorder %s9, 3
      %p113 = pnand %p111, %p112
      %p114 = pneg %p113
      // Predicated region
      $region9: #{net_forward.4} parent=5 // pred_check
        _
      $region10: #{net_forward.4} parent=5 // pred_check_branch
        %116 = sbr.rel (%p113) target = $region12
      $region11: #{net_forward.4} parent=5 // pred_region
        %s117 = ssub.s32 %s9, 1
        // Predicated region
        $region13: #{net_forward.4} parent=11 // pred_check
          %p118 = pneg %p56
        $region14: #{net_forward.4} parent=11 // pred_check_branch
          %120 = sbr.rel (%p118) target = $region16
        $region15: #{net_forward.4} parent=11 // pred_region
          _
        $region16: #{net_forward.4} parent=11 // pred_fallthru
          _
        // Predicated region
        $region17: #{net_forward.4} parent=11 // pred_check
          %p121 = pneg %p77
        $region18: #{net_forward.4} parent=11 // pred_check_branch
          %123 = sbr.rel (%p121) target = $region20
        $region19: #{net_forward.4} parent=11 // pred_region
          _
        $region20: #{net_forward.4} parent=11 // pred_fallthru
          _
      $region12: #{net_forward.4} parent=5 // pred_fallthru
        _
      %p124 = scmp.lt.s32.totalorder %s9, 2
      // Predicated region
      $region21: #{net_forward.4} parent=5 // pred_check
        %p125 = pneg %p124
      $region22: #{net_forward.4} parent=5 // pred_check_branch
        %127 = sbr.rel (%p125) target = $region24
      $region23: #{net_forward.4} parent=5 // pred_region
        // Predicated region
        $region25: #{net_forward.4} parent=23 // pred_check
          %p128 = pneg %p29
        $region26: #{net_forward.4} parent=23 // pred_check_branch
          %130 = sbr.rel (%p128) target = $region28
        $region27: #{net_forward.4} parent=23 // pred_region
          %s131 = smul.u32 4, %s9
          %s132 = ssub.s32 7, %s131
          %p133 = scmp.lt.s32.totalorder %s132, 4
          %s134 = scalar_select %p133, %s132, 4
          %s135 = smul.u32 64, %s134
          %s136 = smul.u32 %s135, 2
          %p137 = scmp.lt.s32.totalorder %s131, 6
          %s138 = scalar_select %p137, %s131, 6
          %s139 = smul.addr %s138, 2
          %s140 = smul.addr %s139, 4
          %s141 = scalar_lea.vmem %s0, %s140
          %s142 = smul.u32 4, %s9
          %s143 = ssub.s32 7, %s142
          %p144 = scmp.lt.s32.totalorder %s143, 4
          %s145 = scalar_select %p144, %s143, 4
          %s146 = smul.u32 64, %s145
          %s147 = smul.u32 %s146, 2
        $region28: #{net_forward.4} parent=23 // pred_fallthru
          _
      $region24: #{net_forward.4} parent=5 // pred_fallthru
        _
      %p148 = scmp.le.s32.totalorder 1, %s9
      %p149 = scmp.lt.s32.totalorder %s9, 3
      %p150 = pnand %p148, %p149
      %p151 = pneg %p150
      // Predicated region
      $region29: #{net_forward.4} parent=5 // pred_check
        _
      $region30: #{net_forward.4} parent=5 // pred_check_branch
        %153 = sbr.rel (%p150) target = $region32
      $region31: #{net_forward.4} parent=5 // pred_region
        %s154 = ssub.s32 %s9, 1
        %s155 = smul.u32 4, %s14
        %s156 = ssub.s32 7, %s155
        %p157 = scmp.lt.s32.totalorder %s156, 4
        %s158 = scalar_select %p157, %s156, 4
        %s159 = smul.u32 64, %s158
        %s160 = smul.u32 %s159, 2
        %p161 = scmp.lt.s32.totalorder %s155, 6
        %s162 = scalar_select %p161, %s155, 6
        %s163 = smul.addr %s162, 2
        %s164 = smul.addr %s163, 4
        %s165 = scalar_lea.vmem %s0, %s164
        %p166 = pneg %p35
        %p167 = pneg %p32
        %p168 = pneg %p56
        %p169 = pneg %p53
        %p170 = pneg %p77
        %p171 = pneg %p74
        %p172 = pneg %p103
        %p173 = pneg %p100
        %s174 = sand.u32 %s90, 1
        %s175 = sand.u32 %s90, 1
        %s176 = smul.addr %s175, 16
        %s177 = scalar_lea.vmem [#allocation2], %s176
        %s178 = smul.u32 4, %s14
        %s179 = ssub.s32 7, %s178
        %p180 = scmp.lt.s32.totalorder %s179, 4
        %s181 = scalar_select %p180, %s179, 4
        %s182 = smul.u32 64, %s181
        %s183 = smul.u32 %s182, 2
        %p184 = scmp.lt.s32.totalorder %s178, 6
        %s185 = scalar_select %p184, %s178, 6
        %s186 = smul.addr %s185, 2
        %s187 = smul.addr %s186, 4
        %s188 = scalar_lea.vmem %s0, %s187
        %s189 = smul.u32 4, %s14
        %s190 = ssub.s32 7, %s189
        %p191 = scmp.lt.s32.totalorder %s190, 4
        %s192 = scalar_select %p191, %s190, 4
        %s193 = smul.u32 64, %s192
        %s194 = smul.u32 %s193, 2
        %s195 = smul.u32 4, %s14
        %s196 = ssub.s32 7, %s195
        %p197 = scmp.lt.s32.totalorder %s196, 4
        %s198 = scalar_select %p197, %s196, 4
        %s199 = smul.u32 64, %s198
        %v200 = vld [vmem:[%s188] sm:$0xff]
        %v201 = vld [vmem:[%s188 + $0x8] sm:$0xff]
        %v202 = vld [vmem:[%s188 + $0x10] sm:$0xff]
        %v203 = vld [vmem:[%s188 + $0x18] sm:$0xff]
        %v204 = vld [vmem:[%s1] sm:$0xff]
        %v205 = vld [vmem:[%s1 + $0x8] sm:$0xff]
        %v206 = vld [vmem:[%s1 + $0x10] sm:$0xff]
        %v207 = vld [vmem:[%s1 + $0x18] sm:$0xff]
        %v208 = vld [vmem:[%s1 + $0x20] sm:$0xff]
        %v209 = vld [vmem:[%s1 + $0x28] sm:$0xff]
        %v210 = vld [vmem:[%s1 + $0x30] sm:$0xff]
        %v211 = vld [vmem:[%s1 + $0x38] sm:$0xff]
        %v212 = vld [vmem:[%s1 + $0x40] sm:$0xff]
        %v213 = vld [vmem:[%s1 + $0x48] sm:$0xff]
        %v214 = vld [vmem:[%s1 + $0x50] sm:$0xff]
        %v215 = vld [vmem:[%s1 + $0x58] sm:$0xff]
        %v216 = vld [vmem:[%s1 + $0x60] sm:$0xff]
        %v217 = vld [vmem:[%s1 + $0x68] sm:$0xff]
        %v218 = vld [vmem:[%s1 + $0x70] sm:$0xff]
        %v219 = vld [vmem:[%s1 + $0x78] sm:$0xff]
        %v220 = vld [vmem:[%s1 + $0x80] sm:$0xff]
        %v221 = vld [vmem:[%s1 + $0x88] sm:$0xff]
        %v222 = vld [vmem:[%s1 + $0x90] sm:$0xff]
        %v223 = vld [vmem:[%s1 + $0x98] sm:$0xff]
        %v224 = vld [vmem:[%s1 + $0xa0] sm:$0xff]
        %v225 = vld [vmem:[%s1 + $0xa8] sm:$0xff]
        %v226 = vld [vmem:[%s1 + $0xb0] sm:$0xff]
        %v227 = vld [vmem:[%s1 + $0xb8] sm:$0xff]
        %v228 = vld [vmem:[%s1 + $0xc0] sm:$0xff]
        %v229 = vld [vmem:[%s1 + $0xc8] sm:$0xff]
        %v230 = vld [vmem:[%s1 + $0xd0] sm:$0xff]
        %v231 = vld [vmem:[%s1 + $0xd8] sm:$0xff]
        %v232 = vld [vmem:[%s1 + $0xe0] sm:$0xff]
        %v233 = vld [vmem:[%s1 + $0xe8] sm:$0xff]
        %v234 = vld [vmem:[%s1 + $0xf0] sm:$0xff]
        %v235 = vld [vmem:[%s1 + $0xf8] sm:$0xff]
        %v236 = vld [vmem:[%s1 + $0x100] sm:$0xff]
        %v237 = vld [vmem:[%s1 + $0x108] sm:$0xff]
        %v238 = vld [vmem:[%s1 + $0x110] sm:$0xff]
        %v239 = vld [vmem:[%s1 + $0x118] sm:$0xff]
        %v240 = vld [vmem:[%s1 + $0x120] sm:$0xff]
        %v241 = vld [vmem:[%s1 + $0x128] sm:$0xff]
        %v242 = vld [vmem:[%s1 + $0x130] sm:$0xff]
        %v243 = vld [vmem:[%s1 + $0x138] sm:$0xff]
        %v244 = vld [vmem:[%s1 + $0x140] sm:$0xff]
        %v245 = vld [vmem:[%s1 + $0x148] sm:$0xff]
        %v246 = vld [vmem:[%s1 + $0x150] sm:$0xff]
        %v247 = vld [vmem:[%s1 + $0x158] sm:$0xff]
        %v248 = vld [vmem:[%s1 + $0x160] sm:$0xff]
        %v249 = vld [vmem:[%s1 + $0x168] sm:$0xff]
        %v250 = vld [vmem:[%s1 + $0x170] sm:$0xff]
        %v251 = vld [vmem:[%s1 + $0x178] sm:$0xff]
        %v252 = vld [vmem:[%s1 + $0x180] sm:$0xff]
        %v253 = vld [vmem:[%s1 + $0x188] sm:$0xff]
        %v254 = vld [vmem:[%s1 + $0x190] sm:$0xff]
        %v255 = vld [vmem:[%s1 + $0x198] sm:$0xff]
        %v256 = vld [vmem:[%s1 + $0x1a0] sm:$0xff]
        %v257 = vld [vmem:[%s1 + $0x1a8] sm:$0xff]
        %v258 = vld [vmem:[%s1 + $0x1b0] sm:$0xff]
        %v259 = vld [vmem:[%s1 + $0x1b8] sm:$0xff]
        %v260 = vld [vmem:[%s1 + $0x1c0] sm:$0xff]
        %v261 = vld [vmem:[%s1 + $0x1c8] sm:$0xff]
        %v262 = vld [vmem:[%s1 + $0x1d0] sm:$0xff]
        %v263 = vld [vmem:[%s1 + $0x1d8] sm:$0xff]
        %v264 = vld [vmem:[%s1 + $0x1e0] sm:$0xff]
        %v265 = vld [vmem:[%s1 + $0x1e8] sm:$0xff]
        %v266 = vld [vmem:[%s1 + $0x1f0] sm:$0xff]
        %v267 = vld [vmem:[%s1 + $0x1f8] sm:$0xff]
        %v272 = vunpack.c.l.b16 %v200
        %v273 = vunpack.c.h.b16 %v200
        %v274 = vunpack.c.l.b16 %v201
        %v275 = vunpack.c.h.b16 %v201
        %v276 = vunpack.c.l.b16 %v202
        %v277 = vunpack.c.h.b16 %v202
        %v278 = vunpack.c.l.b16 %v203
        %v279 = vunpack.c.h.b16 %v203
        %v280 = vpack.c.b16 %v274, %v272
        %v281 = vpack.c.b16 %v275, %v273
        %v282 = vpack.c.b16 %v278, %v276
        %v283 = vpack.c.b16 %v279, %v277
        %v352 = vunpack.c.l.b16 %v204
        %v353 = vunpack.c.h.b16 %v204
        %v354 = vunpack.c.l.b16 %v205
        %v355 = vunpack.c.h.b16 %v205
        %v356 = vunpack.c.l.b16 %v206
        %v357 = vunpack.c.h.b16 %v206
        %v358 = vunpack.c.l.b16 %v207
        %v359 = vunpack.c.h.b16 %v207
        %v360 = vunpack.c.l.b16 %v208
        %v361 = vunpack.c.h.b16 %v208
        %v362 = vunpack.c.l.b16 %v209
        %v363 = vunpack.c.h.b16 %v209
        %v364 = vunpack.c.l.b16 %v210
        %v365 = vunpack.c.h.b16 %v210
        %v366 = vunpack.c.l.b16 %v211
        %v367 = vunpack.c.h.b16 %v211
        %v368 = vunpack.c.l.b16 %v212
        %v369 = vunpack.c.h.b16 %v212
        %v370 = vunpack.c.l.b16 %v213
        %v371 = vunpack.c.h.b16 %v213
        %v372 = vunpack.c.l.b16 %v214
        %v373 = vunpack.c.h.b16 %v214
        %v374 = vunpack.c.l.b16 %v215
        %v375 = vunpack.c.h.b16 %v215
        %v376 = vunpack.c.l.b16 %v216
        %v377 = vunpack.c.h.b16 %v216
        %v378 = vunpack.c.l.b16 %v217
        %v379 = vunpack.c.h.b16 %v217
        %v380 = vunpack.c.l.b16 %v218
        %v381 = vunpack.c.h.b16 %v218
        %v382 = vunpack.c.l.b16 %v219
        %v383 = vunpack.c.h.b16 %v219
        %v384 = vunpack.c.l.b16 %v220
        %v385 = vunpack.c.h.b16 %v220
        %v386 = vunpack.c.l.b16 %v221
        %v387 = vunpack.c.h.b16 %v221
        %v388 = vunpack.c.l.b16 %v222
        %v389 = vunpack.c.h.b16 %v222
        %v390 = vunpack.c.l.b16 %v223
        %v391 = vunpack.c.h.b16 %v223
        %v392 = vunpack.c.l.b16 %v224
        %v393 = vunpack.c.h.b16 %v224
        %v394 = vunpack.c.l.b16 %v225
        %v395 = vunpack.c.h.b16 %v225
        %v396 = vunpack.c.l.b16 %v226
        %v397 = vunpack.c.h.b16 %v226
        %v398 = vunpack.c.l.b16 %v227
        %v399 = vunpack.c.h.b16 %v227
        %v400 = vunpack.c.l.b16 %v228
        %v401 = vunpack.c.h.b16 %v228
        %v402 = vunpack.c.l.b16 %v229
        %v403 = vunpack.c.h.b16 %v229
        %v404 = vunpack.c.l.b16 %v230
        %v405 = vunpack.c.h.b16 %v230
        %v406 = vunpack.c.l.b16 %v231
        %v407 = vunpack.c.h.b16 %v231
        %v408 = vunpack.c.l.b16 %v232
        %v409 = vunpack.c.h.b16 %v232
        %v410 = vunpack.c.l.b16 %v233
        %v411 = vunpack.c.h.b16 %v233
        %v412 = vunpack.c.l.b16 %v234
        %v413 = vunpack.c.h.b16 %v234
        %v414 = vunpack.c.l.b16 %v235
        %v415 = vunpack.c.h.b16 %v235
        %v416 = vunpack.c.l.b16 %v236
        %v417 = vunpack.c.h.b16 %v236
        %v418 = vunpack.c.l.b16 %v237
        %v419 = vunpack.c.h.b16 %v237
        %v420 = vunpack.c.l.b16 %v238
        %v421 = vunpack.c.h.b16 %v238
        %v422 = vunpack.c.l.b16 %v239
        %v423 = vunpack.c.h.b16 %v239
        %v424 = vunpack.c.l.b16 %v240
        %v425 = vunpack.c.h.b16 %v240
        %v426 = vunpack.c.l.b16 %v241
        %v427 = vunpack.c.h.b16 %v241
        %v428 = vunpack.c.l.b16 %v242
        %v429 = vunpack.c.h.b16 %v242
        %v430 = vunpack.c.l.b16 %v243
        %v431 = vunpack.c.h.b16 %v243
        %v432 = vunpack.c.l.b16 %v244
        %v433 = vunpack.c.h.b16 %v244
        %v434 = vunpack.c.l.b16 %v245
        %v435 = vunpack.c.h.b16 %v245
        %v436 = vunpack.c.l.b16 %v246
        %v437 = vunpack.c.h.b16 %v246
        %v438 = vunpack.c.l.b16 %v247
        %v439 = vunpack.c.h.b16 %v247
        %v440 = vunpack.c.l.b16 %v248
        %v441 = vunpack.c.h.b16 %v248
        %v442 = vunpack.c.l.b16 %v249
        %v443 = vunpack.c.h.b16 %v249
        %v444 = vunpack.c.l.b16 %v250
        %v445 = vunpack.c.h.b16 %v250
        %v446 = vunpack.c.l.b16 %v251
        %v447 = vunpack.c.h.b16 %v251
        %v448 = vunpack.c.l.b16 %v252
        %v449 = vunpack.c.h.b16 %v252
        %v450 = vunpack.c.l.b16 %v253
        %v451 = vunpack.c.h.b16 %v253
        %v452 = vunpack.c.l.b16 %v254
        %v453 = vunpack.c.h.b16 %v254
        %v454 = vunpack.c.l.b16 %v255
        %v455 = vunpack.c.h.b16 %v255
        %v456 = vunpack.c.l.b16 %v256
        %v457 = vunpack.c.h.b16 %v256
        %v458 = vunpack.c.l.b16 %v257
        %v459 = vunpack.c.h.b16 %v257
        %v460 = vunpack.c.l.b16 %v258
        %v461 = vunpack.c.h.b16 %v258
        %v462 = vunpack.c.l.b16 %v259
        %v463 = vunpack.c.h.b16 %v259
        %v464 = vunpack.c.l.b16 %v260
        %v465 = vunpack.c.h.b16 %v260
        %v466 = vunpack.c.l.b16 %v261
        %v467 = vunpack.c.h.b16 %v261
        %v468 = vunpack.c.l.b16 %v262
        %v469 = vunpack.c.h.b16 %v262
        %v470 = vunpack.c.l.b16 %v263
        %v471 = vunpack.c.h.b16 %v263
        %v472 = vunpack.c.l.b16 %v264
        %v473 = vunpack.c.h.b16 %v264
        %v474 = vunpack.c.l.b16 %v265
        %v475 = vunpack.c.h.b16 %v265
        %v476 = vunpack.c.l.b16 %v266
        %v477 = vunpack.c.h.b16 %v266
        %v478 = vunpack.c.l.b16 %v267
        %v479 = vunpack.c.h.b16 %v267
        %v480 = vpack.c.b16 %v356, %v352
        %v481 = vpack.c.b16 %v357, %v353
        %v482 = vpack.c.b16 %v358, %v354
        %v483 = vpack.c.b16 %v359, %v355
        %v484 = vpack.c.b16 %v364, %v360
        %v485 = vpack.c.b16 %v365, %v361
        %v486 = vpack.c.b16 %v366, %v362
        %v487 = vpack.c.b16 %v367, %v363
        %v488 = vpack.c.b16 %v372, %v368
        %v489 = vpack.c.b16 %v373, %v369
        %v490 = vpack.c.b16 %v374, %v370
        %v491 = vpack.c.b16 %v375, %v371
        %v492 = vpack.c.b16 %v380, %v376
        %v493 = vpack.c.b16 %v381, %v377
        %v494 = vpack.c.b16 %v382, %v378
        %v495 = vpack.c.b16 %v383, %v379
        %v496 = vpack.c.b16 %v388, %v384
        %v497 = vpack.c.b16 %v389, %v385
        %v498 = vpack.c.b16 %v390, %v386
        %v499 = vpack.c.b16 %v391, %v387
        %v500 = vpack.c.b16 %v396, %v392
        %v501 = vpack.c.b16 %v397, %v393
        %v502 = vpack.c.b16 %v398, %v394
        %v503 = vpack.c.b16 %v399, %v395
        %v504 = vpack.c.b16 %v404, %v400
        %v505 = vpack.c.b16 %v405, %v401
        %v506 = vpack.c.b16 %v406, %v402
        %v507 = vpack.c.b16 %v407, %v403
        %v508 = vpack.c.b16 %v412, %v408
        %v509 = vpack.c.b16 %v413, %v409
        %v510 = vpack.c.b16 %v414, %v410
        %v511 = vpack.c.b16 %v415, %v411
        %v512 = vpack.c.b16 %v420, %v416
        %v513 = vpack.c.b16 %v421, %v417
        %v514 = vpack.c.b16 %v422, %v418
        %v515 = vpack.c.b16 %v423, %v419
        %v516 = vpack.c.b16 %v428, %v424
        %v517 = vpack.c.b16 %v429, %v425
        %v518 = vpack.c.b16 %v430, %v426
        %v519 = vpack.c.b16 %v431, %v427
        %v520 = vpack.c.b16 %v436, %v432
        %v521 = vpack.c.b16 %v437, %v433
        %v522 = vpack.c.b16 %v438, %v434
        %v523 = vpack.c.b16 %v439, %v435
        %v524 = vpack.c.b16 %v444, %v440
        %v525 = vpack.c.b16 %v445, %v441
        %v526 = vpack.c.b16 %v446, %v442
        %v527 = vpack.c.b16 %v447, %v443
        %v528 = vpack.c.b16 %v452, %v448
        %v529 = vpack.c.b16 %v453, %v449
        %v530 = vpack.c.b16 %v454, %v450
        %v531 = vpack.c.b16 %v455, %v451
        %v532 = vpack.c.b16 %v460, %v456
        %v533 = vpack.c.b16 %v461, %v457
        %v534 = vpack.c.b16 %v462, %v458
        %v535 = vpack.c.b16 %v463, %v459
        %v536 = vpack.c.b16 %v468, %v464
        %v537 = vpack.c.b16 %v469, %v465
        %v538 = vpack.c.b16 %v470, %v466
        %v539 = vpack.c.b16 %v471, %v467
        %v540 = vpack.c.b16 %v476, %v472
        %v541 = vpack.c.b16 %v477, %v473
        %v542 = vpack.c.b16 %v478, %v474
        %v543 = vpack.c.b16 %v479, %v475
        %608 = vmatprep.subr.bf16.mxu0 %v481
        %609 = vmatpush1.bf16.msra.mxu0 %v480
        %610 = vmatprep.subr.bf16.mxu0 %v485
        %611 = vmatpush1.bf16.msra.mxu0 %v484
        %612 = vmatprep.subr.bf16.mxu0 %v489
        %613 = vmatpush1.bf16.msra.mxu0 %v488
        %614 = vmatprep.subr.bf16.mxu0 %v493
        %615 = vmatpush1.bf16.msra.mxu0 %v492
        %616 = vmatprep.subr.bf16.mxu0 %v497
        %617 = vmatpush1.bf16.msra.mxu0 %v496
        %618 = vmatprep.subr.bf16.mxu0 %v501
        %619 = vmatpush1.bf16.msra.mxu0 %v500
        %620 = vmatprep.subr.bf16.mxu0 %v505
        %621 = vmatpush1.bf16.msra.mxu0 %v504
        %622 = vmatprep.subr.bf16.mxu0 %v509
        %623 = vmatpush1.bf16.msra.mxu0 %v508
        %624 = vmatprep.subr.bf16.mxu0 %v513
        %625 = vmatpush1.bf16.msra.mxu0 %v512
        %626 = vmatprep.subr.bf16.mxu0 %v517
        %627 = vmatpush1.bf16.msra.mxu0 %v516
        %628 = vmatprep.subr.bf16.mxu0 %v521
        %629 = vmatpush1.bf16.msra.mxu0 %v520
        %630 = vmatprep.subr.bf16.mxu0 %v525
        %631 = vmatpush1.bf16.msra.mxu0 %v524
        %632 = vmatprep.subr.bf16.mxu0 %v529
        %633 = vmatpush1.bf16.msra.mxu0 %v528
        %634 = vmatprep.subr.bf16.mxu0 %v533
        %635 = vmatpush1.bf16.msra.mxu0 %v532
        %636 = vmatprep.subr.bf16.mxu0 %v537
        %637 = vmatpush1.bf16.msra.mxu0 %v536
        %638 = vmatprep.subr.bf16.mxu0 %v541
        %639 = vmatpush1.bf16.msra.mxu0 %v540
        %640 = vmatprep.mubr.bf16.mxu0 %v281
        %641 = vmatmul.mubr.bf16.gmra.mrb[0].mxu0 %v280
        %v642 = vpop.f32.mrb[0].mxu0
        %v643 = vadd.f32 0.0, %v642
        %v644 = vpop.f32.mrb[0].mxu0
        %v645 = vadd.f32 0.0, %v644
        %v646 = vpop.f32.mrb[0].mxu0
        %v647 = vadd.f32 0.0, %v646
        %v648 = vpop.f32.mrb[0].mxu0
        %v649 = vadd.f32 0.0, %v648
        %650 = vmatprep.mubr.bf16.mxu0 %v283
        %651 = vmatmul.mubr.bf16.gmra.mrb[0].mxu0 %v282
        %v652 = vpop.f32.mrb[0].mxu0
        %v653 = vadd.f32 0.0, %v652
        %v654 = vpop.f32.mrb[0].mxu0
        %v655 = vadd.f32 0.0, %v654
        %v656 = vpop.f32.mrb[0].mxu0
        %v657 = vadd.f32 0.0, %v656
        %v658 = vpop.f32.mrb[0].mxu0
        %v659 = vadd.f32 0.0, %v658
        %660 = vdwg.mxu0
        %661 = vmatprep.subr.bf16.mxu0 %v483
        %662 = vmatpush1.bf16.msra.mxu0 %v482
        %663 = vmatprep.subr.bf16.mxu0 %v487
        %664 = vmatpush1.bf16.msra.mxu0 %v486
        %665 = vmatprep.subr.bf16.mxu0 %v491
        %666 = vmatpush1.bf16.msra.mxu0 %v490
        %667 = vmatprep.subr.bf16.mxu0 %v495
        %668 = vmatpush1.bf16.msra.mxu0 %v494
        %669 = vmatprep.subr.bf16.mxu0 %v499
        %670 = vmatpush1.bf16.msra.mxu0 %v498
        %671 = vmatprep.subr.bf16.mxu0 %v503
        %672 = vmatpush1.bf16.msra.mxu0 %v502
        %673 = vmatprep.subr.bf16.mxu0 %v507
        %674 = vmatpush1.bf16.msra.mxu0 %v506
        %675 = vmatprep.subr.bf16.mxu0 %v511
        %676 = vmatpush1.bf16.msra.mxu0 %v510
        %677 = vmatprep.subr.bf16.mxu0 %v515
        %678 = vmatpush1.bf16.msra.mxu0 %v514
        %679 = vmatprep.subr.bf16.mxu0 %v519
        %680 = vmatpush1.bf16.msra.mxu0 %v518
        %681 = vmatprep.subr.bf16.mxu0 %v523
        %682 = vmatpush1.bf16.msra.mxu0 %v522
        %683 = vmatprep.subr.bf16.mxu0 %v527
        %684 = vmatpush1.bf16.msra.mxu0 %v526
        %685 = vmatprep.subr.bf16.mxu0 %v531
        %686 = vmatpush1.bf16.msra.mxu0 %v530
        %687 = vmatprep.subr.bf16.mxu0 %v535
        %688 = vmatpush1.bf16.msra.mxu0 %v534
        %689 = vmatprep.subr.bf16.mxu0 %v539
        %690 = vmatpush1.bf16.msra.mxu0 %v538
        %691 = vmatprep.subr.bf16.mxu0 %v543
        %692 = vmatpush1.bf16.msra.mxu0 %v542
        %693 = vmatprep.mubr.bf16.mxu0 %v281
        %694 = vmatmul.mubr.bf16.gmra.mrb[0].mxu0 %v280
        %v695 = vpop.f32.mrb[0].mxu0
        %v696 = vadd.f32 0.0, %v695
        %v697 = vpop.f32.mrb[0].mxu0
        %v698 = vadd.f32 0.0, %v697
        %v699 = vpop.f32.mrb[0].mxu0
        %v700 = vadd.f32 0.0, %v699
        %v701 = vpop.f32.mrb[0].mxu0
        %v702 = vadd.f32 0.0, %v701
        %703 = vmatprep.mubr.bf16.mxu0 %v283
        %704 = vmatmul.mubr.bf16.gmra.mrb[0].mxu0 %v282
        %v705 = vpop.f32.mrb[0].mxu0
        %v706 = vadd.f32 0.0, %v705
        %v707 = vpop.f32.mrb[0].mxu0
        %v708 = vadd.f32 0.0, %v707
        %v709 = vpop.f32.mrb[0].mxu0
        %v710 = vadd.f32 0.0, %v709
        %v711 = vpop.f32.mrb[0].mxu0
        %v712 = vadd.f32 0.0, %v711
        %713 = vdwg.mxu0
        %v714 = vmax.f32 %v643, %v645
        %v715 = vmax.f32 %v647, %v649
        %v716 = vmax.f32 %v653, %v655
        %v717 = vmax.f32 %v657, %v659
        %v718 = vmax.f32 %v696, %v698
        %v719 = vmax.f32 %v700, %v702
        %v720 = vmax.f32 %v706, %v708
        %v721 = vmax.f32 %v710, %v712
        %v722 = vmax.f32 %v714, %v718
        %v723 = vmax.f32 %v715, %v719
        %v724 = vmax.f32 %v716, %v720
        %v725 = vmax.f32 %v717, %v721
        %v726 = vld [vmem:[%s2] sm:$0x1]
        %v728 = vlaneseq
        %v729 = vshrl.u32 %v728, 7
        %v730 = vsub.s32 0, %v729
        %v731 = vrot.slane %v726, %v730
        %v733 = vadd.f32 %v722, %v731
        %v734 = vadd.f32 %v723, %v731
        %v735 = vadd.f32 %v724, %v731
        %v736 = vadd.f32 %v725, %v731
        %v737 = vmax.f32 %v733, 0.0
        %v738 = vmax.f32 %v734, 0.0
        %v739 = vmax.f32 %v735, 0.0
        %v740 = vmax.f32 %v736, 0.0
        %v741 = vpack.c.bf16 %v738, %v737
        %v742 = vpack.c.bf16 %v740, %v739
        %v745 = vunpack.c.l.b16 %v741
        %v746 = vunpack.c.h.b16 %v741
        %v747 = vunpack.c.l.b16 %v742
        %v748 = vunpack.c.h.b16 %v742
        %v749 = vpack.c.b16 %v745, %v745
        %v750 = vpack.c.b16 %v746, %v746
        %v751 = vpack.c.b16 %v747, %v747
        %v752 = vpack.c.b16 %v748, %v748
        %vm757 = vcmask 125952
        %758 = vst.msk [vmem:[%s177] sm:$0xf] %vm757, %v749
        %759 = vst.msk [vmem:[%s177 + $0x4] sm:$0xf] %vm757, %v750
        %760 = vst.msk [vmem:[%s177 + $0x8] sm:$0xf] %vm757, %v751
        %761 = vst.msk [vmem:[%s177 + $0xc] sm:$0xf] %vm757, %v752
        %s762 = sand.u32 %s90, 1
        %s763 = sand.u32 %s90, 1
        %s764 = smul.addr %s763, 16
        %s765 = scalar_lea.vmem [#allocation2], %s764
        // Predicated region
        $region33: #{net_forward.4} parent=31 // pred_check
          %p766 = pneg %p100
        $region34: #{net_forward.4} parent=31 // pred_check_branch
          %768 = sbr.rel (%p766) target = $region36
        $region35: #{net_forward.4} parent=31 // pred_region
          %s769 = smul.u32 4, %s14
          %s770 = ssub.s32 7, %s769
          %p771 = scmp.lt.s32.totalorder %s770, 4
          %s772 = scalar_select %p771, %s770, 4
          %s773 = smul.u32 64, %s772
          %p774 = scmp.ne.s32.totalorder 0, %s773
          %s775 = smul.addr %s769, 4
          %s776 = scalar_lea.vmem %s3, %s775
          // Predicated region
          $region37: #{net_forward.4} parent=35 // pred_check
            %p777 = pneg %p774
          $region38: #{net_forward.4} parent=35 // pred_check_branch
            %779 = sbr.rel (%p777) target = $region40
          $region39: #{net_forward.4} parent=35 // pred_region
            // Predicated region
            $region41: #{net_forward.4} parent=39 // pred_check
              _
            $region42: #{net_forward.4} parent=39 // pred_check_branch
              %781 = sbr.rel target = $region44
            $region43: #{net_forward.4} parent=39 // pred_region
              // Predicated region
              $region63: #{net_forward.4} parent=43 // pred_check
                _
              $region64: #{net_forward.4} parent=43 // pred_check_branch
                %836 = sbr.rel (0) target = $region66
              $region65: #{net_forward.4} parent=43 // pred_region
                %s838 = sshrl.u32 %s772, 2
                // While loop
                $region67: #{net_forward.4} parent=65 // loop_pre_header
                  _
                $region68: #{net_forward.4} parent=65 // loop_header
                  %s840 = sphi 0, %s842
                  %p841 = scmp.ge.s32.totalorder %s840, %s838
                  %s845 = sphi 0, %s858
                  %s846 = sphi %s765, %s861
                  %s847 = sphi %s776, %s862
                $region69: #{net_forward.4} parent=65 // loop_header_branch
                  %844 = sbr.rel (%p841) target = $region73
                $region70: #{net_forward.4} parent=65 // loop_body
                  %v848 = vld [vmem:[%s846] sm:$0xf]
                  %849 = vst [vmem:[%s847] sm:$0xf] %v848
                  %v850 = vld [vmem:[%s846 + $0x4] sm:$0xf]
                  %851 = vst [vmem:[%s847 + $0x4] sm:$0xf] %v850
                  %v852 = vld [vmem:[%s846 + $0x8] sm:$0xf]
                  %853 = vst [vmem:[%s847 + $0x8] sm:$0xf] %v852
                  %v854 = vld [vmem:[%s846 + $0xc] sm:$0xf]
                  %855 = vst [vmem:[%s847 + $0xc] sm:$0xf] %v854
                  %s856 = sadd.s32 1, %s845
                  %p857 = scmp.ge.s32.totalorder %s856, %s838
                  %s858 = scalar_select %p857, 0, %s856
                  %s859 = smul.u32 %s858, 16
                  %s860 = smul.u32 %s858, 16
                  %s861 = scalar_lea.vmem %s765, %s859 [#allocation2]
                  %s862 = scalar_lea.vmem %s776, %s860
                $region71: #{net_forward.4} parent=65 // loop_footer
                  %s842 = sadd.s32 %s840, 1
                $region72: #{net_forward.4} parent=65 // loop_footer_branch
                  %839 = sbr.rel target = $region68
                $region73: #{net_forward.4} parent=65 // loop_exit
                  _
                %s863 = sshrl.u32 %s772, 2
                %s864 = sand.u32 %s772, 3
                %s865 = smul.u32 %s863, 4
                %s866 = smul.u32 4, %s865
                %s867 = scalar_lea.vmem %s765, %s866 [#allocation2]
                %s868 = smul.u32 4, %s865
                %s869 = scalar_lea.vmem %s776, %s868
                // While loop
                $region74: #{net_forward.4} parent=65 // loop_pre_header
                  _
                $region75: #{net_forward.4} parent=65 // loop_header
                  %s871 = sphi 0, %s873
                  %p872 = scmp.ge.s32.totalorder %s871, %s864
                  %s876 = sphi 0, %s883
                  %s877 = sphi %s867, %s886
                  %s878 = sphi %s869, %s887
                $region76: #{net_forward.4} parent=65 // loop_header_branch
                  %875 = sbr.rel (%p872) target = $region80
                $region77: #{net_forward.4} parent=65 // loop_body
                  %v879 = vld [vmem:[%s877] sm:$0xf]
                  %880 = vst [vmem:[%s878] sm:$0xf] %v879
                  %s881 = sadd.s32 1, %s876
                  %p882 = scmp.ge.s32.totalorder %s881, %s864
                  %s883 = scalar_select %p882, 0, %s881
                  %s884 = smul.u32 %s883, 4
                  %s885 = smul.u32 %s883, 4
                  %s886 = scalar_lea.vmem %s867, %s884 [#allocation2]
                  %s887 = scalar_lea.vmem %s869, %s885
                $region78: #{net_forward.4} parent=65 // loop_footer
                  %s873 = sadd.s32 %s871, 1
                $region79: #{net_forward.4} parent=65 // loop_footer_branch
                  %870 = sbr.rel target = $region75
                $region80: #{net_forward.4} parent=65 // loop_exit
                  _
              $region66: #{net_forward.4} parent=43 // pred_fallthru
                _
            $region44: #{net_forward.4} parent=39 // pred_fallthru
              _
            // Predicated region
            $region45: #{net_forward.4} parent=39 // pred_check
              _
            $region46: #{net_forward.4} parent=39 // pred_check_branch
              %783 = sbr.rel (0) target = $region48
            $region47: #{net_forward.4} parent=39 // pred_region
              %s785 = sshrl.u32 %s772, 2
              // While loop
              $region49: #{net_forward.4} parent=47 // loop_pre_header
                _
              $region50: #{net_forward.4} parent=47 // loop_header
                %s787 = sphi 0, %s789
                %p788 = scmp.ge.s32.totalorder %s787, %s785
                %s792 = sphi 0, %s805
                %s793 = sphi %s765, %s808
                %s794 = sphi %s776, %s809
              $region51: #{net_forward.4} parent=47 // loop_header_branch
                %791 = sbr.rel (%p788) target = $region55
              $region52: #{net_forward.4} parent=47 // loop_body
                %v795 = vld [vmem:[%s793] sm:$0xf]
                %796 = vst [vmem:[%s794] sm:$0xf] %v795
                %v797 = vld [vmem:[%s793 + $0x4] sm:$0xf]
                %798 = vst [vmem:[%s794 + $0x4] sm:$0xf] %v797
                %v799 = vld [vmem:[%s793 + $0x8] sm:$0xf]
                %800 = vst [vmem:[%s794 + $0x8] sm:$0xf] %v799
                %v801 = vld [vmem:[%s793 + $0xc] sm:$0xf]
                %802 = vst [vmem:[%s794 + $0xc] sm:$0xf] %v801
                %s803 = sadd.s32 1, %s792
                %p804 = scmp.ge.s32.totalorder %s803, %s785
                %s805 = scalar_select %p804, 0, %s803
                %s806 = smul.u32 %s805, 16
                %s807 = smul.u32 %s805, 16
                %s808 = scalar_lea.vmem %s765, %s806 [#allocation2]
                %s809 = scalar_lea.vmem %s776, %s807
              $region53: #{net_forward.4} parent=47 // loop_footer
                %s789 = sadd.s32 %s787, 1
              $region54: #{net_forward.4} parent=47 // loop_footer_branch
                %786 = sbr.rel target = $region50
              $region55: #{net_forward.4} parent=47 // loop_exit
                _
              %s810 = sshrl.u32 %s772, 2
              %s811 = sand.u32 %s772, 3
              %s812 = smul.u32 %s810, 4
              %s813 = smul.u32 4, %s812
              %s814 = scalar_lea.vmem %s765, %s813 [#allocation2]
              %s815 = smul.u32 4, %s812
              %s816 = scalar_lea.vmem %s776, %s815
              // While loop
              $region56: #{net_forward.4} parent=47 // loop_pre_header
                _
              $region57: #{net_forward.4} parent=47 // loop_header
                %s818 = sphi 0, %s820
                %p819 = scmp.ge.s32.totalorder %s818, %s811
                %s823 = sphi 0, %s830
                %s824 = sphi %s814, %s833
                %s825 = sphi %s816, %s834
              $region58: #{net_forward.4} parent=47 // loop_header_branch
                %822 = sbr.rel (%p819) target = $region62
              $region59: #{net_forward.4} parent=47 // loop_body
                %v826 = vld [vmem:[%s824] sm:$0xf]
                %827 = vst [vmem:[%s825] sm:$0xf] %v826
                %s828 = sadd.s32 1, %s823
                %p829 = scmp.ge.s32.totalorder %s828, %s811
                %s830 = scalar_select %p829, 0, %s828
                %s831 = smul.u32 %s830, 4
                %s832 = smul.u32 %s830, 4
                %s833 = scalar_lea.vmem %s814, %s831 [#allocation2]
                %s834 = scalar_lea.vmem %s816, %s832
              $region60: #{net_forward.4} parent=47 // loop_footer
                %s820 = sadd.s32 %s818, 1
              $region61: #{net_forward.4} parent=47 // loop_footer_branch
                %817 = sbr.rel target = $region57
              $region62: #{net_forward.4} parent=47 // loop_exit
                _
            $region48: #{net_forward.4} parent=39 // pred_fallthru
              _
          $region40: #{net_forward.4} parent=35 // pred_fallthru
            _
          %888 = vnop
        $region36: #{net_forward.4} parent=31 // pred_fallthru
          _
      $region32: #{net_forward.4} parent=5 // pred_fallthru
        _
      %p889 = scmp.le.s32.totalorder 2, %s9
      // Predicated region
      $region81: #{net_forward.4} parent=5 // pred_check
        %p890 = pneg %p889
      $region82: #{net_forward.4} parent=5 // pred_check_branch
        %892 = sbr.rel (%p890) target = $region84
      $region83: #{net_forward.4} parent=5 // pred_region
        %s893 = ssub.s32 %s9, 2
        // Predicated region
        $region85: #{net_forward.4} parent=83 // pred_check
          %p894 = pneg %p106
        $region86: #{net_forward.4} parent=83 // pred_check_branch
          %896 = sbr.rel (%p894) target = $region88
        $region87: #{net_forward.4} parent=83 // pred_region
          %s897 = sand.u32 %s91, 1
          %s898 = sand.u32 %s91, 1
          %s899 = smul.addr %s898, 16
          %s900 = scalar_lea.vmem [#allocation2], %s899
        $region88: #{net_forward.4} parent=83 // pred_fallthru
          _
      $region84: #{net_forward.4} parent=5 // pred_fallthru
        _
    $region6: #{net_forward.4} parent=1 // loop_footer
      %s13 = sadd.s32 1, %s9
    $region7: #{net_forward.4} parent=1 // loop_footer_branch
      %8 = sbr.rel target = $region3
    $region8: #{net_forward.4} parent=1 // loop_exit
      _

// kernel: net_forward.5
$region0: #{net_forward.5}
  #allocation0 [shape = 'u32[]', space=smem, size = 0x4, offset = 0x4, fixed_abs, tag = 'smem constant byte address 0x4 - core index']
  #allocation1 [shape = 'u32[144,128]{1,0:T(1,128)}', space=vmem, size = 0x12000, scoped, tag = 'internal scratch']
  %s0 = inlined_call_operand.vmem [shape: bf16[2,400], index: 0, kind: input, shape index: {}]
  %s1 = inlined_call_operand.vmem [shape: bf16[400,128], index: 1, kind: input, shape index: {}]
  %s2 = inlined_call_operand.vmem [shape: f32[1,128], index: 2, kind: input, shape index: {}]
  %s3 = inlined_call_operand.vmem [shape: bf16[128,128], index: 3, kind: input, shape index: {}]
  %s4 = inlined_call_operand.vmem [shape: f32[1,128], index: 4, kind: input, shape index: {}]
  %s5 = inlined_call_operand.vmem [shape: bf16[128,128], index: 5, kind: input, shape index: {}]
  %s6 = inlined_call_operand.vmem [shape: f32[1,128], index: 6, kind: input, shape index: {}]
  %s7 = inlined_call_operand.hbm [shape: f32[2,128], index: 7, kind: output, shape index: {}]
  %s8 = sld [smem:[#allocation0]]
  $region38: #{net_forward.5} parent=0
    _
  %s10 = ssub.s32 1, %s8
  %s11 = scalar_select 0, %s10, %s8
  $region1: #{net_forward.5} parent=0
    #allocation2 [shape = 'u8[1024]{0}', space=vmem, size = 0x400, scoped, tag = 'output window, operand 0, single buffered']
    #allocation3 [shape = 's32[1]{0}', space=sflag, size = 0x4, scoped, tag = 'scoped memory for net_forward.5']
    %12 = vsyncpa [#allocation3], 0
    // Predicated region
    $region2: #{net_forward.5} parent=1 // pred_check
      _
    $region3: #{net_forward.5} parent=1 // pred_check_branch
      %14 = sbr.rel (0) target = $region5
    $region4: #{net_forward.5} parent=1 // pred_region
      _
    $region5: #{net_forward.5} parent=1 // pred_fallthru
      _
    // Predicated region
    $region6: #{net_forward.5} parent=1 // pred_check
      _
    $region7: #{net_forward.5} parent=1 // pred_check_branch
      %16 = sbr.rel (0) target = $region9
    $region8: #{net_forward.5} parent=1 // pred_region
      _
    $region9: #{net_forward.5} parent=1 // pred_fallthru
      _
    // Predicated region
    $region10: #{net_forward.5} parent=1 // pred_check
      _
    $region11: #{net_forward.5} parent=1 // pred_check_branch
      %18 = sbr.rel (0) target = $region13
    $region12: #{net_forward.5} parent=1 // pred_region
      _
    $region13: #{net_forward.5} parent=1 // pred_fallthru
      _
    // Predicated region
    $region14: #{net_forward.5} parent=1 // pred_check
      _
    $region15: #{net_forward.5} parent=1 // pred_check_branch
      %20 = sbr.rel (0) target = $region17
    $region16: #{net_forward.5} parent=1 // pred_region
      _
    $region17: #{net_forward.5} parent=1 // pred_fallthru
      _
    // Predicated region
    $region18: #{net_forward.5} parent=1 // pred_check
      _
    $region19: #{net_forward.5} parent=1 // pred_check_branch
      %22 = sbr.rel (0) target = $region21
    $region20: #{net_forward.5} parent=1 // pred_region
      _
    $region21: #{net_forward.5} parent=1 // pred_fallthru
      _
    // Predicated region
    $region22: #{net_forward.5} parent=1 // pred_check
      _
    $region23: #{net_forward.5} parent=1 // pred_check_branch
      %24 = sbr.rel (0) target = $region25
    $region24: #{net_forward.5} parent=1 // pred_region
      _
    $region25: #{net_forward.5} parent=1 // pred_fallthru
      _
    // Predicated region
    $region26: #{net_forward.5} parent=1 // pred_check
      _
    $region27: #{net_forward.5} parent=1 // pred_check_branch
      %26 = sbr.rel (0) target = $region29
    $region28: #{net_forward.5} parent=1 // pred_region
      _
    $region29: #{net_forward.5} parent=1 // pred_fallthru
      _
    %v28 = vld [vmem:[%s0] sm:$0xf]
    %v29 = vld [vmem:[%s1] sm:$0xf]
    %v30 = vld [vmem:[%s1 + $0x4] sm:$0xf]
    %v31 = vld [vmem:[%s1 + $0x8] sm:$0xf]
    %v32 = vld [vmem:[%s1 + $0xc] sm:$0xf]
    %v33 = vld [vmem:[%s1 + $0x10] sm:$0xf]
    %v34 = vld [vmem:[%s1 + $0x14] sm:$0xf]
    %v35 = vld [vmem:[%s1 + $0x18] sm:$0xf]
    %v36 = vld [vmem:[%s1 + $0x1c] sm:$0xf]
    %v37 = vld [vmem:[%s1 + $0x20] sm:$0xf]
    %v38 = vld [vmem:[%s1 + $0x24] sm:$0xf]
    %v39 = vld [vmem:[%s1 + $0x28] sm:$0xf]
    %v40 = vld [vmem:[%s1 + $0x2c] sm:$0xf]
    %v41 = vld [vmem:[%s1 + $0x30] sm:$0xf]
    %v42 = vld [vmem:[%s1 + $0x34] sm:$0xf]
    %v43 = vld [vmem:[%s1 + $0x38] sm:$0xf]
    %v44 = vld [vmem:[%s1 + $0x3c] sm:$0xf]
    %v45 = vld [vmem:[%s1 + $0x40] sm:$0xf]
    %v46 = vld [vmem:[%s1 + $0x44] sm:$0xf]
    %v47 = vld [vmem:[%s1 + $0x48] sm:$0xf]
    %v48 = vld [vmem:[%s1 + $0x4c] sm:$0xf]
    %v49 = vld [vmem:[%s1 + $0x50] sm:$0xf]
    %v50 = vld [vmem:[%s1 + $0x54] sm:$0xf]
    %v51 = vld [vmem:[%s1 + $0x58] sm:$0xf]
    %v52 = vld [vmem:[%s1 + $0x5c] sm:$0xf]
    %v53 = vld [vmem:[%s1 + $0x60] sm:$0xf]
    %v54 = vld [vmem:[%s1 + $0x64] sm:$0xf]
    %v55 = vld [vmem:[%s1 + $0x68] sm:$0xf]
    %v56 = vld [vmem:[%s1 + $0x6c] sm:$0xf]
    %v57 = vld [vmem:[%s1 + $0x70] sm:$0xf]
    %v58 = vld [vmem:[%s1 + $0x74] sm:$0xf]
    %v59 = vld [vmem:[%s1 + $0x78] sm:$0xf]
    %v60 = vld [vmem:[%s1 + $0x7c] sm:$0xf]
    %v61 = vld [vmem:[%s1 + $0x80] sm:$0xf]
    %v62 = vld [vmem:[%s1 + $0x84] sm:$0xf]
    %v63 = vld [vmem:[%s1 + $0x88] sm:$0xf]
    %v64 = vld [vmem:[%s1 + $0x8c] sm:$0xf]
    %v65 = vld [vmem:[%s1 + $0x90] sm:$0xf]
    %v66 = vld [vmem:[%s1 + $0x94] sm:$0xf]
    %v67 = vld [vmem:[%s1 + $0x98] sm:$0xf]
    %v68 = vld [vmem:[%s1 + $0x9c] sm:$0xf]
    %v69 = vld [vmem:[%s1 + $0xa0] sm:$0xf]
    %v70 = vld [vmem:[%s1 + $0xa4] sm:$0xf]
    %v71 = vld [vmem:[%s1 + $0xa8] sm:$0xf]
    %v72 = vld [vmem:[%s1 + $0xac] sm:$0xf]
    %v73 = vld [vmem:[%s1 + $0xb0] sm:$0xf]
    %v74 = vld [vmem:[%s1 + $0xb4] sm:$0xf]
    %v75 = vld [vmem:[%s1 + $0xb8] sm:$0xf]
    %v76 = vld [vmem:[%s1 + $0xbc] sm:$0xf]
    %v77 = vld [vmem:[%s1 + $0xc0] sm:$0xf]
    %v78 = vld [vmem:[%s1 + $0xc4] sm:$0xf]
    %v79 = vld [vmem:[%s2] sm:$0x1]
    %v81 = vlaneseq
    %v82 = vshrl.u32 %v81, 7
    %v83 = vsub.s32 0, %v82
    %v84 = vrot.slane %v79, %v83
    %v88 = vunpack.c.l.s4 1966171168
    %v89 = vunpack.c.0.s8 %v88
    %v90 = vlaneseq
    %v91 = vshrl.u32 %v90, 7
    %v92 = vsub.s32 %v89, %v91
    %v93 = vrot.slane %v28, %v92
    %v94 = vcombine.high %v93, %v93
    %v96 = vunpack.c.l.s4 1966171168
    %v97 = vunpack.c.0.s8 %v96
    %v98 = vlaneseq
    %v99 = vshrl.u32 %v98, 7
    %v100 = vsub.s32 %v97, %v99
    %v101 = vrot.slane %v93, %v100
    %v103 = vunpack.c.l.s4 1966171168
    %v104 = vunpack.c.0.s8 %v103
    %v105 = vlaneseq
    %v106 = vshrl.u32 %v105, 7
    %v107 = vsub.s32 %v104, %v106
    %v108 = vrot.slane %v94, %v107
    %v109 = vcombine.high %v101, %v101
    %v110 = vcombine.high %v108, %v108
    %v164 = vunpack.c.l.b16 %v29
    %v165 = vunpack.c.l.b16 %v30
    %v166 = vunpack.c.l.b16 %v31
    %v167 = vunpack.c.l.b16 %v32
    %v168 = vunpack.c.l.b16 %v33
    %v169 = vunpack.c.l.b16 %v34
    %v170 = vunpack.c.l.b16 %v35
    %v171 = vunpack.c.l.b16 %v36
    %v172 = vunpack.c.l.b16 %v37
    %v173 = vunpack.c.l.b16 %v38
    %v174 = vunpack.c.l.b16 %v39
    %v175 = vunpack.c.l.b16 %v40
    %v176 = vunpack.c.l.b16 %v41
    %v177 = vunpack.c.l.b16 %v42
    %v178 = vunpack.c.l.b16 %v43
    %v179 = vunpack.c.l.b16 %v44
    %v180 = vunpack.c.l.b16 %v45
    %v181 = vunpack.c.l.b16 %v46
    %v182 = vunpack.c.l.b16 %v47
    %v183 = vunpack.c.l.b16 %v48
    %v184 = vunpack.c.l.b16 %v49
    %v185 = vunpack.c.l.b16 %v50
    %v186 = vunpack.c.l.b16 %v51
    %v187 = vunpack.c.l.b16 %v52
    %v188 = vunpack.c.l.b16 %v53
    %v189 = vunpack.c.l.b16 %v54
    %v190 = vunpack.c.l.b16 %v55
    %v191 = vunpack.c.l.b16 %v56
    %v192 = vunpack.c.l.b16 %v57
    %v193 = vunpack.c.l.b16 %v58
    %v194 = vunpack.c.l.b16 %v59
    %v195 = vunpack.c.l.b16 %v60
    %v196 = vunpack.c.l.b16 %v61
    %v197 = vunpack.c.l.b16 %v62
    %v198 = vunpack.c.l.b16 %v63
    %v199 = vunpack.c.l.b16 %v64
    %v200 = vunpack.c.l.b16 %v65
    %v201 = vunpack.c.l.b16 %v66
    %v202 = vunpack.c.l.b16 %v67
    %v203 = vunpack.c.l.b16 %v68
    %v204 = vunpack.c.l.b16 %v69
    %v205 = vunpack.c.l.b16 %v70
    %v206 = vunpack.c.l.b16 %v71
    %v207 = vunpack.c.l.b16 %v72
    %v208 = vunpack.c.l.b16 %v73
    %v209 = vunpack.c.l.b16 %v74
    %v210 = vunpack.c.l.b16 %v75
    %v211 = vunpack.c.l.b16 %v76
    %v212 = vunpack.c.l.b16 %v77
    %v213 = vunpack.c.l.b16 %v78
    %v214 = vpack.c.b16 %v165, %v164
    %v215 = vpack.c.b16 %v167, %v166
    %v216 = vpack.c.b16 %v169, %v168
    %v217 = vpack.c.b16 %v171, %v170
    %v218 = vpack.c.b16 %v173, %v172
    %v219 = vpack.c.b16 %v175, %v174
    %v220 = vpack.c.b16 %v177, %v176
    %v221 = vpack.c.b16 %v179, %v178
    %v222 = vpack.c.b16 %v181, %v180
    %v223 = vpack.c.b16 %v183, %v182
    %v224 = vpack.c.b16 %v185, %v184
    %v225 = vpack.c.b16 %v187, %v186
    %v226 = vpack.c.b16 %v189, %v188
    %v227 = vpack.c.b16 %v191, %v190
    %v228 = vpack.c.b16 %v193, %v192
    %v229 = vpack.c.b16 %v195, %v194
    %v230 = vpack.c.b16 %v197, %v196
    %v231 = vpack.c.b16 %v199, %v198
    %v232 = vpack.c.b16 %v201, %v200
    %v233 = vpack.c.b16 %v203, %v202
    %v234 = vpack.c.b16 %v205, %v204
    %v235 = vpack.c.b16 %v207, %v206
    %v236 = vpack.c.b16 %v209, %v208
    %v237 = vpack.c.b16 %v211, %v210
    %v238 = vpack.c.b16 %v213, %v212
    %vm264 = vcmask 130048
    %v266 = vsel %vm264, %v110, 0
    %268 = vmatprep.subr.bf16.mxu0 0
    %269 = vmatpush1.bf16.msra.mxu0 %v214
    %270 = vmatprep.subr.bf16.mxu0 0
    %271 = vmatpush1.bf16.msra.mxu0 %v215
    %272 = vmatprep.subr.bf16.mxu0 0
    %273 = vmatpush1.bf16.msra.mxu0 %v216
    %274 = vmatprep.subr.bf16.mxu0 0
    %275 = vmatpush1.bf16.msra.mxu0 %v217
    %276 = vmatprep.subr.bf16.mxu0 0
    %277 = vmatpush1.bf16.msra.mxu0 %v218
    %278 = vmatprep.subr.bf16.mxu0 0
    %279 = vmatpush1.bf16.msra.mxu0 %v219
    %280 = vmatprep.subr.bf16.mxu0 0
    %281 = vmatpush1.bf16.msra.mxu0 %v220
    %282 = vmatprep.subr.bf16.mxu0 0
    %283 = vmatpush1.bf16.msra.mxu0 %v221
    %284 = vmatprep.subr.bf16.mxu0 0
    %285 = vmatpush1.bf16.msra.mxu0 %v222
    %286 = vmatprep.subr.bf16.mxu0 0
    %287 = vmatpush1.bf16.msra.mxu0 %v223
    %288 = vmatprep.subr.bf16.mxu0 0
    %289 = vmatpush1.bf16.msra.mxu0 %v224
    %290 = vmatprep.subr.bf16.mxu0 0
    %291 = vmatpush1.bf16.msra.mxu0 %v225
    %292 = vmatprep.subr.bf16.mxu0 0
    %293 = vmatpush1.bf16.msra.mxu0 %v226
    %294 = vmatprep.subr.bf16.mxu0 0
    %295 = vmatpush1.bf16.msra.mxu0 %v227
    %296 = vmatprep.subr.bf16.mxu0 0
    %297 = vmatpush1.bf16.msra.mxu0 %v228
    %298 = vmatprep.subr.bf16.mxu0 0
    %299 = vmatpush1.bf16.msra.mxu0 %v229
    %300 = vmatprep.mubr.bf16.mxu0 %v108
    %301 = vmatmul.mubr.bf16.gmra.mrb[0].mxu0 %v101
    %v302 = vpop.f32.mrb[0].mxu0
    %v303 = vadd.f32 %v84, %v302
    %v304 = vpop.f32.mrb[0].mxu0
    %v305 = vpop.f32.mrb[0].mxu0
    %v306 = vpop.f32.mrb[0].mxu0
    %307 = vdwg.mxu0
    %308 = vmatprep.subr.bf16.mxu0 0
    %309 = vmatpush1.bf16.msra.mxu0 %v230
    %310 = vmatprep.subr.bf16.mxu0 0
    %311 = vmatpush1.bf16.msra.mxu0 %v231
    %312 = vmatprep.subr.bf16.mxu0 0
    %313 = vmatpush1.bf16.msra.mxu0 %v232
    %314 = vmatprep.subr.bf16.mxu0 0
    %315 = vmatpush1.bf16.msra.mxu0 %v233
    %316 = vmatprep.subr.bf16.mxu0 0
    %317 = vmatpush1.bf16.msra.mxu0 %v234
    %318 = vmatprep.subr.bf16.mxu0 0
    %319 = vmatpush1.bf16.msra.mxu0 %v235
    %320 = vmatprep.subr.bf16.mxu0 0
    %321 = vmatpush1.bf16.msra.mxu0 %v236
    %322 = vmatprep.subr.bf16.mxu0 0
    %323 = vmatpush1.bf16.msra.mxu0 %v237
    %324 = vmatprep.subr.bf16.mxu0 0
    %325 = vmatpush1.bf16.msra.mxu0 %v238
    %326 = vmatprep.subr.bf16.mxu0 0
    %327 = vmatpush1.bf16.msra.mxu0 0
    %328 = vmatprep.subr.bf16.mxu0 0
    %329 = vmatpush1.bf16.msra.mxu0 0
    %330 = vmatprep.subr.bf16.mxu0 0
    %331 = vmatpush1.bf16.msra.mxu0 0
    %332 = vmatprep.subr.bf16.mxu0 0
    %333 = vmatpush1.bf16.msra.mxu0 0
    %334 = vmatprep.subr.bf16.mxu0 0
    %335 = vmatpush1.bf16.msra.mxu0 0
    %336 = vmatprep.subr.bf16.mxu0 0
    %337 = vmatpush1.bf16.msra.mxu0 0
    %338 = vmatprep.subr.bf16.mxu0 0
    %339 = vmatpush1.bf16.msra.mxu0 0
    %340 = vmatprep.mubr.bf16.mxu0 %v266
    %341 = vmatmul.mubr.bf16.gmra.mrb[0].mxu0 %v109
    %v342 = vpop.f32.mrb[0].mxu0
    %v343 = vadd.f32 %v303, %v342
    %v344 = vpop.f32.mrb[0].mxu0
    %v345 = vpop.f32.mrb[0].mxu0
    %v346 = vpop.f32.mrb[0].mxu0
    %347 = vdwg.mxu0
    %v348 = vmax.f32 %v343, 0.0
    %v349 = vpack.c.bf16 %v348, %v348
    %v350 = vld [vmem:[%s3] sm:$0xf]
    %v351 = vld [vmem:[%s3 + $0x4] sm:$0xf]
    %v352 = vld [vmem:[%s3 + $0x8] sm:$0xf]
    %v353 = vld [vmem:[%s3 + $0xc] sm:$0xf]
    %v354 = vld [vmem:[%s3 + $0x10] sm:$0xf]
    %v355 = vld [vmem:[%s3 + $0x14] sm:$0xf]
    %v356 = vld [vmem:[%s3 + $0x18] sm:$0xf]
    %v357 = vld [vmem:[%s3 + $0x1c] sm:$0xf]
    %v358 = vld [vmem:[%s3 + $0x20] sm:$0xf]
    %v359 = vld [vmem:[%s3 + $0x24] sm:$0xf]
    %v360 = vld [vmem:[%s3 + $0x28] sm:$0xf]
    %v361 = vld [vmem:[%s3 + $0x2c] sm:$0xf]
    %v362 = vld [vmem:[%s3 + $0x30] sm:$0xf]
    %v363 = vld [vmem:[%s3 + $0x34] sm:$0xf]
    %v364 = vld [vmem:[%s3 + $0x38] sm:$0xf]
    %v365 = vld [vmem:[%s3 + $0x3c] sm:$0xf]
    %v366 = vld [vmem:[%s4] sm:$0x1]
    %v368 = vlaneseq
    %v369 = vshrl.u32 %v368, 7
    %v370 = vsub.s32 0, %v369
    %v371 = vrot.slane %v366, %v370
    %v389 = vunpack.c.l.b16 %v350
    %v390 = vunpack.c.l.b16 %v351
    %v391 = vunpack.c.l.b16 %v352
    %v392 = vunpack.c.l.b16 %v353
    %v393 = vunpack.c.l.b16 %v354
    %v394 = vunpack.c.l.b16 %v355
    %v395 = vunpack.c.l.b16 %v356
    %v396 = vunpack.c.l.b16 %v357
    %v397 = vunpack.c.l.b16 %v358
    %v398 = vunpack.c.l.b16 %v359
    %v399 = vunpack.c.l.b16 %v360
    %v400 = vunpack.c.l.b16 %v361
    %v401 = vunpack.c.l.b16 %v362
    %v402 = vunpack.c.l.b16 %v363
    %v403 = vunpack.c.l.b16 %v364
    %v404 = vunpack.c.l.b16 %v365
    %v405 = vpack.c.b16 %v390, %v389
    %v406 = vpack.c.b16 %v392, %v391
    %v407 = vpack.c.b16 %v394, %v393
    %v408 = vpack.c.b16 %v396, %v395
    %v409 = vpack.c.b16 %v398, %v397
    %v410 = vpack.c.b16 %v400, %v399
    %v411 = vpack.c.b16 %v402, %v401
    %v412 = vpack.c.b16 %v404, %v403
    %421 = vmatprep.subr.bf16.mxu0 0
    %422 = vmatpush1.bf16.msra.mxu0 %v405
    %423 = vmatprep.subr.bf16.mxu0 0
    %424 = vmatpush1.bf16.msra.mxu0 %v406
    %425 = vmatprep.subr.bf16.mxu0 0
    %426 = vmatpush1.bf16.msra.mxu0 %v407
    %427 = vmatprep.subr.bf16.mxu0 0
    %428 = vmatpush1.bf16.msra.mxu0 %v408
    %429 = vmatprep.subr.bf16.mxu0 0
    %430 = vmatpush1.bf16.msra.mxu0 %v409
    %431 = vmatprep.subr.bf16.mxu0 0
    %432 = vmatpush1.bf16.msra.mxu0 %v410
    %433 = vmatprep.subr.bf16.mxu0 0
    %434 = vmatpush1.bf16.msra.mxu0 %v411
    %435 = vmatprep.subr.bf16.mxu0 0
    %436 = vmatpush1.bf16.msra.mxu0 %v412
    %437 = vmatprep.subr.bf16.mxu0 0
    %438 = vmatpush1.bf16.msra.mxu0 0
    %439 = vmatprep.subr.bf16.mxu0 0
    %440 = vmatpush1.bf16.msra.mxu0 0
    %441 = vmatprep.subr.bf16.mxu0 0
    %442 = vmatpush1.bf16.msra.mxu0 0
    %443 = vmatprep.subr.bf16.mxu0 0
    %444 = vmatpush1.bf16.msra.mxu0 0
    %445 = vmatprep.subr.bf16.mxu0 0
    %446 = vmatpush1.bf16.msra.mxu0 0
    %447 = vmatprep.subr.bf16.mxu0 0
    %448 = vmatpush1.bf16.msra.mxu0 0
    %449 = vmatprep.subr.bf16.mxu0 0
    %450 = vmatpush1.bf16.msra.mxu0 0
    %451 = vmatprep.subr.bf16.mxu0 0
    %452 = vmatpush1.bf16.msra.mxu0 0
    %453 = vmatprep.mubr.bf16.mxu0 0
    %454 = vmatmul.mubr.bf16.gmra.mrb[0].mxu0 %v349
    %v455 = vpop.f32.mrb[0].mxu0
    %v456 = vadd.f32 %v371, %v455
    %v457 = vpop.f32.mrb[0].mxu0
    %v458 = vpop.f32.mrb[0].mxu0
    %v459 = vpop.f32.mrb[0].mxu0
    %460 = vdwg.mxu0
    %v461 = vmax.f32 %v456, 0.0
    %v462 = vpack.c.bf16 %v461, %v461
    %v463 = vld [vmem:[%s5] sm:$0xf]
    %v464 = vld [vmem:[%s5 + $0x4] sm:$0xf]
    %v465 = vld [vmem:[%s5 + $0x8] sm:$0xf]
    %v466 = vld [vmem:[%s5 + $0xc] sm:$0xf]
    %v467 = vld [vmem:[%s5 + $0x10] sm:$0xf]
    %v468 = vld [vmem:[%s5 + $0x14] sm:$0xf]
    %v469 = vld [vmem:[%s5 + $0x18] sm:$0xf]
    %v470 = vld [vmem:[%s5 + $0x1c] sm:$0xf]
    %v471 = vld [vmem:[%s5 + $0x20] sm:$0xf]
    %v472 = vld [vmem:[%s5 + $0x24] sm:$0xf]
    %v473 = vld [vmem:[%s5 + $0x28] sm:$0xf]
    %v474 = vld [vmem:[%s5 + $0x2c] sm:$0xf]
    %v475 = vld [vmem:[%s5 + $0x30] sm:$0xf]
    %v476 = vld [vmem:[%s5 + $0x34] sm:$0xf]
    %v477 = vld [vmem:[%s5 + $0x38] sm:$0xf]
    %v478 = vld [vmem:[%s5 + $0x3c] sm:$0xf]
    %v479 = vld [vmem:[%s6] sm:$0x1]
    %v481 = vlaneseq
    %v482 = vshrl.u32 %v481, 7
    %v483 = vsub.s32 0, %v482
    %v484 = vrot.slane %v479, %v483
    %v502 = vunpack.c.l.b16 %v463
    %v503 = vunpack.c.l.b16 %v464
    %v504 = vunpack.c.l.b16 %v465
    %v505 = vunpack.c.l.b16 %v466
    %v506 = vunpack.c.l.b16 %v467
    %v507 = vunpack.c.l.b16 %v468
    %v508 = vunpack.c.l.b16 %v469
    %v509 = vunpack.c.l.b16 %v470
    %v510 = vunpack.c.l.b16 %v471
    %v511 = vunpack.c.l.b16 %v472
    %v512 = vunpack.c.l.b16 %v473
    %v513 = vunpack.c.l.b16 %v474
    %v514 = vunpack.c.l.b16 %v475
    %v515 = vunpack.c.l.b16 %v476
    %v516 = vunpack.c.l.b16 %v477
    %v517 = vunpack.c.l.b16 %v478
    %v518 = vpack.c.b16 %v503, %v502
    %v519 = vpack.c.b16 %v505, %v504
    %v520 = vpack.c.b16 %v507, %v506
    %v521 = vpack.c.b16 %v509, %v508
    %v522 = vpack.c.b16 %v511, %v510
    %v523 = vpack.c.b16 %v513, %v512
    %v524 = vpack.c.b16 %v515, %v514
    %v525 = vpack.c.b16 %v517, %v516
    %534 = vmatprep.subr.bf16.mxu0 0
    %535 = vmatpush1.bf16.msra.mxu0 %v518
    %536 = vmatprep.subr.bf16.mxu0 0
    %537 = vmatpush1.bf16.msra.mxu0 %v519
    %538 = vmatprep.subr.bf16.mxu0 0
    %539 = vmatpush1.bf16.msra.mxu0 %v520
    %540 = vmatprep.subr.bf16.mxu0 0
    %541 = vmatpush1.bf16.msra.mxu0 %v521
    %542 = vmatprep.subr.bf16.mxu0 0
    %543 = vmatpush1.bf16.msra.mxu0 %v522
    %544 = vmatprep.subr.bf16.mxu0 0
    %545 = vmatpush1.bf16.msra.mxu0 %v523
    %546 = vmatprep.subr.bf16.mxu0 0
    %547 = vmatpush1.bf16.msra.mxu0 %v524
    %548 = vmatprep.subr.bf16.mxu0 0
    %549 = vmatpush1.bf16.msra.mxu0 %v525
    %550 = vmatprep.subr.bf16.mxu0 0
    %551 = vmatpush1.bf16.msra.mxu0 0
    %552 = vmatprep.subr.bf16.mxu0 0
    %553 = vmatpush1.bf16.msra.mxu0 0
    %554 = vmatprep.subr.bf16.mxu0 0
    %555 = vmatpush1.bf16.msra.mxu0 0
    %556 = vmatprep.subr.bf16.mxu0 0
    %557 = vmatpush1.bf16.msra.mxu0 0
    %558 = vmatprep.subr.bf16.mxu0 0
    %559 = vmatpush1.bf16.msra.mxu0 0
    %560 = vmatprep.subr.bf16.mxu0 0
    %561 = vmatpush1.bf16.msra.mxu0 0
    %562 = vmatprep.subr.bf16.mxu0 0
    %563 = vmatpush1.bf16.msra.mxu0 0
    %564 = vmatprep.subr.bf16.mxu0 0
    %565 = vmatpush1.bf16.msra.mxu0 0
    %566 = vmatprep.mubr.bf16.mxu0 0
    %567 = vmatmul.mubr.bf16.gmra.mrb[0].mxu0 %v462
    %v568 = vpop.f32.mrb[0].mxu0
    %v569 = vadd.f32 %v484, %v568
    %v570 = vpop.f32.mrb[0].mxu0
    %v571 = vpop.f32.mrb[0].mxu0
    %v572 = vpop.f32.mrb[0].mxu0
    %573 = vdwg.mxu0
    %574 = vst [vmem:[#allocation2] sm:$0x3] %v569
    // Predicated region
    $region30: #{net_forward.5} parent=1 // pred_check
      _
    $region31: #{net_forward.5} parent=1 // pred_check_branch
      %576 = sbr.rel (0) target = $region33
    $region32: #{net_forward.5} parent=1 // pred_region
      %s578 = ssub.s32 32, 32
      %579 = vsyncadd [#allocation3], %s578
      %s581 = sshll.u32 [#allocation2], 4
      %s582 = int_to_ptr.vmem [resolvable:$true] %s581
      %584 = dma.vmem_to_hbm [thread:$0]  %s582, 32, %s7, [#allocation3]
    $region33: #{net_forward.5} parent=1 // pred_fallthru
      _
    // Predicated region
    $region34: #{net_forward.5} parent=1 // pred_check
      _
    $region35: #{net_forward.5} parent=1 // pred_check_branch
      %586 = sbr.rel (0) target = $region37
    $region36: #{net_forward.5} parent=1 // pred_region
      %587 = dma.done [#allocation3], 32
    $region37: #{net_forward.5} parent=1 // pred_fallthru
      _
    %588 = vsyncpa [#allocation3], 1

</llo_original>
